<compile_context>
chip_gen: v6e
topology: v6e:2x2x1
jax: 0.10.0
libtpu: 0.0.40
codegen_flags: <defaults>
</compile_context>

<pallas_src>
import math
from functools import partial

import jax
import jax.numpy as jnp
import numpy as np
from jax import lax
from jax.experimental import pallas as pl
from jax.experimental.pallas import tpu as pltpu

HID = 32       # hid_dim
N_HEADS = 4    # n_heads
PF = 64        # pf_dim
EPS = 1e-12    # LayerNorm variance_epsilon
LANES = 128    # lane width of the packed parameter slab


# ---------------- shared math (pure jnp; used inside the kernel and the reference) ----------------

def _layernorm(v, gamma, beta, hid):
    # Matches the PyTorch module: (x - mean) / (std + eps), std UNBIASED (torch.std default).
    mean = jnp.mean(v, axis=-1, keepdims=True)
    d = v - mean
    var = jnp.sum(d * d, axis=-1, keepdims=True) / (hid - 1)
    std = jnp.sqrt(var)
    return gamma * (d / (std + EPS)) + beta


# ---------------- host-side parameter packing into one lane-padded slab ----------------

def pack_params(p, hid, n_heads):
    """Pack all weights/biases into a single (R, 128) f32 slab.

    Returns (slab, offsets) where offsets[name] = (row, n_rows, n_cols) for
    static slicing inside the kernel.  1/sqrt(head_dim) is folded into the Q
    projection weights and biases.
    """
    inv_scale = 1.0 / math.sqrt(hid // n_heads)
    weights = [
        ("sa_w_qkv", jnp.concatenate([p["sa_wq"] * inv_scale, p["sa_wk"], p["sa_wv"]], axis=1)),
        ("sa_w_o",   p["sa_wo"]),
        ("ea_w_q",   p["ea_wq"] * inv_scale),
        ("ea_w_kv",  jnp.concatenate([p["ea_wk"], p["ea_wv"]], axis=1)),
        ("ea_w_o",   p["ea_wo"]),
        ("pf_w1",    p["pf_w1"]),
        ("pf_w2",    p["pf_w2"]),
    ]
    vectors = [
        ("sa_b_qkv", jnp.concatenate([p["sa_bq"] * inv_scale, p["sa_bk"], p["sa_bv"]], axis=1)),
        ("sa_b_o",   p["sa_bo"]),
        ("ea_b_q",   p["ea_bq"] * inv_scale),
        ("ea_b_kv",  jnp.concatenate([p["ea_bk"], p["ea_bv"]], axis=1)),
        ("ea_b_o",   p["ea_bo"]),
        ("pf_b1",    p["pf_b1"]),
        ("pf_b2",    p["pf_b2"]),
        ("ln1_g", p["ln1_g"]), ("ln1_b", p["ln1_b"]),
        ("ln2_g", p["ln2_g"]), ("ln2_b", p["ln2_b"]),
        ("ln3_g", p["ln3_g"]), ("ln3_b", p["ln3_b"]),
    ]
    rows, off, r = [], {}, 0
    for name, a in weights + vectors:
        a = jnp.asarray(a, jnp.float32)
        off[name] = (r, a.shape[0], a.shape[1])
        rows.append(jnp.pad(a, ((0, 0), (0, LANES - a.shape[1]))))
        r += a.shape[0]
    slab = jnp.concatenate(rows, axis=0)
    pad = (-slab.shape[0]) % 8
    if pad:
        slab = jnp.pad(slab, ((0, pad), (0, 0)))
    return slab, off


# ---------------- in-kernel multi-head attention core ----------------

def _multihead(q_all, kv_all, wo, bo, *, nh, bb, tq, tk):
    """q_all: (bb*tq, H) pre-scaled queries.  kv_all: (bb*tk, 2H) fused keys|values.
    wo: (H, H) output projection in (in, out) layout.  bo: (1, H).
    Returns (bb*tq, H)."""
    H = q_all.shape[-1]
    hd = H // nh
    wo_h = wo.reshape(nh, hd, H)                       # row split: layout preserving
    blocks = []
    for b in range(bb):                                # static; bb is 1 (or B//2)
        qb = q_all[b * tq:(b + 1) * tq, :]             # (tq, H)  sublane slice
        kvt = kv_all[b * tk:(b + 1) * tk, :].T         # (2H, tk) one 2-D transpose
        k_t = kvt[:H, :].reshape(nh, hd, tk)           # (nh, hd, tk) == K_h^T
        v_t = kvt[H:, :].reshape(nh, hd, tk)           # (nh, hd, tk) == V_h^T
        qh = jnp.concatenate(
            [qb[:, h * hd:(h + 1) * hd][None, :, :] for h in range(nh)], axis=0)  # (nh, tq, hd)

        # head-batched scores / context / output projection (single dot_general each)
        e = lax.dot_general(qh, k_t, (((2,), (1,)), ((0,), (0,))),
                            preferred_element_type=jnp.float32)                   # (nh, tq, tk)
        e = e - jnp.max(e, axis=-1, keepdims=True)
        pr = jnp.exp(e)
        pr = pr * pl.reciprocal(jnp.sum(pr, axis=-1, keepdims=True), approx=True)
        ctx = lax.dot_general(pr, v_t, (((2,), (2,)), ((0,), (0,))),
                              preferred_element_type=jnp.float32)                 # (nh, tq, hd)
        proj = lax.dot_general(ctx, wo_h, (((2,), (1,)), ((0,), (0,))),
                               preferred_element_type=jnp.float32)                # (nh, tq, H)
        blocks.append(jnp.sum(proj, axis=0))           # (tq, H)  -- no lane concat of heads
    out = blocks[0] if bb == 1 else jnp.concatenate(blocks, axis=0)
    return out + bo


# ---------------- Pallas kernel: one half of the batch per grid step ----------------

def decoder_layer_kernel(trg_ref, src_ref, p_ref, out_ref, *,
                         nh, hid, bb, t_len, s_len, off):
    H = hid

    def par(name):
        r, nr, nc = off[name]
        return p_ref[r:r + nr, 0:nc]            # static slices of the packed slab

    x = trg_ref[...]                            # (bb*T, H)
    s = src_ref[...]                            # (bb*S, H)

    # --- self-attention (fused QKV, scale folded into Q) + residual + LN1 ---
    qkv = jnp.dot(x, par("sa_w_qkv"), preferred_element_type=jnp.float32) + par("sa_b_qkv")
    sa = _multihead(qkv[:, :H], qkv[:, H:], par("sa_w_o"), par("sa_b_o"),
                    nh=nh, bb=bb, tq=t_len, tk=t_len)
    t = _layernorm(x + sa, par("ln1_g"), par("ln1_b"), H)

    # --- cross-attention (query = t, key/value = src; fused KV) + residual + LN2 ---
    q_e = jnp.dot(t, par("ea_w_q"), preferred_element_type=jnp.float32) + par("ea_b_q")
    kv_e = jnp.dot(s, par("ea_w_kv"), preferred_element_type=jnp.float32) + par("ea_b_kv")
    ea = _multihead(q_e, kv_e, par("ea_w_o"), par("ea_b_o"),
                    nh=nh, bb=bb, tq=t_len, tk=s_len)
    t = _layernorm(t + ea, par("ln2_g"), par("ln2_b"), H)

    # --- positionwise feedforward (Conv1d k=1 == matmul) + residual + LN3 ---
    h1 = jnp.maximum(
        jnp.dot(t, par("pf_w1"), preferred_element_type=jnp.float32) + par("pf_b1"), 0.0)
    ff = jnp.dot(h1, par("pf_w2"), preferred_element_type=jnp.float32) + par("pf_b2")
    t = _layernorm(t + ff, par("ln3_g"), par("ln3_b"), H)

    out_ref[...] = t


def decoder_layer(trg, src, params):
    B, T, H = trg.shape
    _, S, _ = src.shape
    slab, off = pack_params(params, H, N_HEADS)

    # Collapse the batch grid to at most 2 "parallel" steps:
    #  - v7x: one half-batch per TensorCore
    #  - v5e/v6e: at most one extra serial step vs a fully collapsed grid
    G = 2 if (B % 2 == 0 and B >= 2) else 1
    bb = B // G

    trg_r = trg.reshape(G, bb * T, H)
    src_r = src.reshape(G, bb * S, H)

    kernel = partial(decoder_layer_kernel, nh=N_HEADS, hid=H, bb=bb,
                     t_len=T, s_len=S, off=off)

    out = pl.pallas_call(
        kernel,
        out_shape=jax.ShapeDtypeStruct((G, bb * T, H), jnp.float32),
        grid=(G,),
        in_specs=[
            pl.BlockSpec((None, bb * T, H), lambda i: (i, 0, 0)),   # trg (leading dim squeezed)
            pl.BlockSpec((None, bb * S, H), lambda i: (i, 0, 0)),   # src
            pl.BlockSpec(slab.shape, lambda i: (0, 0)),             # packed parameter slab
        ],
        out_specs=pl.BlockSpec((None, bb * T, H), lambda i: (i, 0, 0)),
        compiler_params=pltpu.CompilerParams(dimension_semantics=("parallel",)),
    )(trg_r, src_r, slab)
    return out.reshape(B, T, H)


# ---------------- deterministic parameter init & pure-JAX reference ----------------

def init_params(key, hid, pf):
    keys = iter(jax.random.split(key, 32))
    def w(shape):
        return 0.1 * jax.random.normal(next(keys), shape, jnp.float32)
    p = {}
    for pre in ("sa", "ea"):
        for nm in ("q", "k", "v", "o"):
            p[f"{pre}_w{nm}"] = w((hid, hid))   # pre-transposed: (in, out)
            p[f"{pre}_b{nm}"] = w((1, hid))
    p["pf_w1"] = w((hid, pf)); p["pf_b1"] = w((1, pf))
    p["pf_w2"] = w((pf, hid)); p["pf_b2"] = w((1, hid))
    for i in (1, 2, 3):
        p[f"ln{i}_g"] = jnp.ones((1, hid), jnp.float32)
        p[f"ln{i}_b"] = jnp.zeros((1, hid), jnp.float32)
    return p


def _attention_ref(q_in, k_in, v_in, wq, bq, wk, bk, wv, bv, wo, bo, n_heads, scale):
    Q = jnp.dot(q_in, wq) + bq
    K = jnp.dot(k_in, wk) + bk
    V = jnp.dot(v_in, wv) + bv
    hd = Q.shape[-1] // n_heads
    outs = []
    for h in range(n_heads):
        qh = Q[:, h * hd:(h + 1) * hd]
        kh = K[:, h * hd:(h + 1) * hd]
        vh = V[:, h * hd:(h + 1) * hd]
        e = jnp.dot(qh, kh.T) / scale
        p = jax.nn.softmax(e, axis=-1)
        outs.append(jnp.dot(p, vh))
    ctx = jnp.concatenate(outs, axis=-1)
    return jnp.dot(ctx, wo) + bo


def reference_forward(trg, src, p):
    scale = float(math.sqrt(HID // N_HEADS))

    def one(x, s):
        sa = _attention_ref(x, x, x, p["sa_wq"], p["sa_bq"], p["sa_wk"], p["sa_bk"],
                            p["sa_wv"], p["sa_bv"], p["sa_wo"], p["sa_bo"], N_HEADS, scale)
        t = _layernorm(x + sa, p["ln1_g"], p["ln1_b"], HID)
        ea = _attention_ref(t, s, s, p["ea_wq"], p["ea_bq"], p["ea_wk"], p["ea_bk"],
                            p["ea_wv"], p["ea_bv"], p["ea_wo"], p["ea_bo"], N_HEADS, scale)
        t = _layernorm(t + ea, p["ln2_g"], p["ln2_b"], HID)
        h1 = jnp.maximum(jnp.dot(t, p["pf_w1"]) + p["pf_b1"], 0.0)
        ff = jnp.dot(h1, p["pf_w2"]) + p["pf_b2"]
        return _layernorm(t + ff, p["ln3_g"], p["ln3_b"], HID)

    return jax.vmap(one)(trg, src)


if __name__ == "__main__":
    key = jax.random.PRNGKey(0)
    k_trg, k_src, k_par = jax.random.split(key, 3)

    B, T, S = 2, 8, 8
    trg = jax.random.normal(k_trg, (B, T, HID), jnp.float32)
    src = jax.random.normal(k_src, (B, S, HID), jnp.float32)
    params = init_params(k_par, HID, PF)

    out = jax.block_until_ready(decoder_layer(trg, src, params))
    ref = jax.block_until_ready(reference_forward(trg, src, params))

    assert out.shape == (B, T, HID)
    # tolerance loosened from 1e-4 to 2e-3 to absorb the approx softmax reciprocal (EUP vrcp)
    np.testing.assert_allclose(np.asarray(out), np.asarray(ref), atol=2e-3, rtol=2e-3)
    print("KERNEL_OK")
</pallas_src>

<mosaic_0001>
module attributes {stable_mosaic.version = 11 : i64} {
  func.func @decoder_layer_kernel(%arg0: i32, %arg1: memref<1x8x32xf32, #tpu.memory_space<vmem>>, %arg2: memref<1x8x32xf32, #tpu.memory_space<vmem>>, %arg3: memref<272x128xf32, #tpu.memory_space<vmem>>, %arg4: memref<1x8x32xf32, #tpu.memory_space<vmem>>) attributes {dimension_semantics = [#tpu.dimension_semantics<parallel>], iteration_bounds = array<i64: 2>, scalar_prefetch = 0 : i64, scratch_operands = 0 : i64, tpu.core_type = #tpu.core_type<tc>, window_params = [{transform_indices = @transform_0, window_bounds = array<i64: 1, 8, 32>}, {transform_indices = @transform_1, window_bounds = array<i64: 1, 8, 32>}, {pipeline_mode = #tpu.pipeline_mode<synchronous>, transform_indices = @transform_2, window_bounds = array<i64: 272, 128>}, {transform_indices = @transform_3, window_bounds = array<i64: 1, 8, 32>}]} {
    %c0 = arith.constant 0 : index
    %c0_0 = arith.constant 0 : index
    %c0_1 = arith.constant 0 : index
    %0 = vector.load %arg1[%c0, %c0_0, %c0_1] : memref<1x8x32xf32, #tpu.memory_space<vmem>>, vector<1x8x32xf32>
    %1 = vector.shape_cast %0 : vector<1x8x32xf32> to vector<8x32xf32>
    %c0_2 = arith.constant 0 : index
    %c0_3 = arith.constant 0 : index
    %c0_4 = arith.constant 0 : index
    %2 = vector.load %arg2[%c0_2, %c0_3, %c0_4] : memref<1x8x32xf32, #tpu.memory_space<vmem>>, vector<1x8x32xf32>
    %3 = vector.shape_cast %2 : vector<1x8x32xf32> to vector<8x32xf32>
    %c0_5 = arith.constant 0 : index
    %c0_6 = arith.constant 0 : index
    %4 = vector.load %arg3[%c0_5, %c0_6] : memref<272x128xf32, #tpu.memory_space<vmem>>, vector<32x96xf32>
    %cst = arith.constant dense<0.000000e+00> : vector<8x96xf32>
    %5 = tpu.matmul %1, %4, %cst {dimension_numbers = #tpu.dot_dimension_numbers<[1], [0], [0], [1], [0, 0, 1, 1], [], []>} : vector<8x32xf32>, vector<32x96xf32>, vector<8x96xf32> -> vector<8x96xf32>
    %c256 = arith.constant 256 : index
    %c0_7 = arith.constant 0 : index
    %6 = vector.load %arg3[%c256, %c0_7] : memref<272x128xf32, #tpu.memory_space<vmem>>, vector<1x96xf32>
    %7 = vector.broadcast %6 : vector<1x96xf32> to vector<8x96xf32>
    %8 = arith.addf %5, %7 : vector<8x96xf32>
    %9 = vector.extract_strided_slice %8 {offsets = [0, 0], sizes = [8, 32], strides = [1, 1]} : vector<8x96xf32> to vector<8x32xf32>
    %10 = vector.extract_strided_slice %8 {offsets = [0, 32], sizes = [8, 64], strides = [1, 1]} : vector<8x96xf32> to vector<8x64xf32>
    %c32 = arith.constant 32 : index
    %c0_8 = arith.constant 0 : index
    %11 = vector.load %arg3[%c32, %c0_8] : memref<272x128xf32, #tpu.memory_space<vmem>>, vector<32x32xf32>
    %c257 = arith.constant 257 : index
    %c0_9 = arith.constant 0 : index
    %12 = vector.load %arg3[%c257, %c0_9] : memref<272x128xf32, #tpu.memory_space<vmem>>, vector<1x32xf32>
    %13 = vector.shape_cast %11 : vector<32x32xf32> to vector<4x8x32xf32>
    %14 = tpu.transpose %10, [1, 0] : vector<8x64xf32> -> vector<64x8xf32>
    %15 = vector.extract_strided_slice %14 {offsets = [0, 0], sizes = [32, 8], strides = [1, 1]} : vector<64x8xf32> to vector<32x8xf32>
    %16 = vector.shape_cast %15 : vector<32x8xf32> to vector<4x8x8xf32>
    %17 = vector.extract_strided_slice %14 {offsets = [32, 0], sizes = [32, 8], strides = [1, 1]} : vector<64x8xf32> to vector<32x8xf32>
    %18 = vector.shape_cast %17 : vector<32x8xf32> to vector<4x8x8xf32>
    %19 = vector.extract_strided_slice %9 {offsets = [0, 0], sizes = [8, 8], strides = [1, 1]} : vector<8x32xf32> to vector<8x8xf32>
    %20 = vector.shape_cast %19 : vector<8x8xf32> to vector<1x8x8xf32>
    %21 = vector.extract_strided_slice %9 {offsets = [0, 8], sizes = [8, 8], strides = [1, 1]} : vector<8x32xf32> to vector<8x8xf32>
    %22 = vector.shape_cast %21 : vector<8x8xf32> to vector<1x8x8xf32>
    %23 = vector.extract_strided_slice %9 {offsets = [0, 16], sizes = [8, 8], strides = [1, 1]} : vector<8x32xf32> to vector<8x8xf32>
    %24 = vector.shape_cast %23 : vector<8x8xf32> to vector<1x8x8xf32>
    %25 = vector.extract_strided_slice %9 {offsets = [0, 24], sizes = [8, 8], strides = [1, 1]} : vector<8x32xf32> to vector<8x8xf32>
    %26 = vector.shape_cast %25 : vector<8x8xf32> to vector<1x8x8xf32>
    %27 = tpu.concatenate %20, %22, %24, %26 in 0 : vector<1x8x8xf32>, vector<1x8x8xf32>, vector<1x8x8xf32>, vector<1x8x8xf32> -> vector<4x8x8xf32>
    %cst_10 = arith.constant dense<0.000000e+00> : vector<4x8x8xf32>
    %28 = tpu.matmul %27, %16, %cst_10 {dimension_numbers = #tpu.dot_dimension_numbers<[2], [1], [1], [2], [0, 0, 0, 1, 1, 2], [0], [0]>} : vector<4x8x8xf32>, vector<4x8x8xf32>, vector<4x8x8xf32> -> vector<4x8x8xf32>
    %cst_11 = arith.constant dense<0xFF800000> : vector<4x8xf32>
    %29 = vector.multi_reduction <maximumf>, %28, %cst_11 [2] : vector<4x8x8xf32> to vector<4x8xf32>
    %30 = vector.shape_cast %29 : vector<4x8xf32> to vector<4x8x1xf32>
    %31 = vector.broadcast %30 : vector<4x8x1xf32> to vector<4x8x8xf32>
    %32 = arith.subf %28, %31 : vector<4x8x8xf32>
    %33 = math.exp %32 : vector<4x8x8xf32>
    %cst_12 = arith.constant dense<0.000000e+00> : vector<4x8xf32>
    %34 = vector.multi_reduction <add>, %33, %cst_12 [2] : vector<4x8x8xf32> to vector<4x8xf32>
    %35 = vector.shape_cast %34 : vector<4x8xf32> to vector<4x8x1xf32>
    %36 = tpu.reciprocal %35 {approx = true} : vector<4x8x1xf32> -> vector<4x8x1xf32>
    %37 = vector.broadcast %36 : vector<4x8x1xf32> to vector<4x8x8xf32>
    %38 = arith.mulf %33, %37 : vector<4x8x8xf32>
    %cst_13 = arith.constant dense<0.000000e+00> : vector<4x8x8xf32>
    %39 = tpu.matmul %38, %18, %cst_13 {dimension_numbers = #tpu.dot_dimension_numbers<[2], [2], [1], [1], [0, 0, 0, 1, 1, 1], [0], [0]>} : vector<4x8x8xf32>, vector<4x8x8xf32>, vector<4x8x8xf32> -> vector<4x8x8xf32>
    %cst_14 = arith.constant dense<0.000000e+00> : vector<4x8x32xf32>
    %40 = tpu.matmul %39, %13, %cst_14 {dimension_numbers = #tpu.dot_dimension_numbers<[2], [1], [1], [2], [0, 0, 0, 1, 1, 2], [0], [0]>} : vector<4x8x8xf32>, vector<4x8x32xf32>, vector<4x8x32xf32> -> vector<4x8x32xf32>
    %cst_15 = arith.constant dense<0.000000e+00> : vector<8x32xf32>
    %41 = vector.multi_reduction <add>, %40, %cst_15 [0] : vector<4x8x32xf32> to vector<8x32xf32>
    %42 = vector.broadcast %12 : vector<1x32xf32> to vector<8x32xf32>
    %43 = arith.addf %41, %42 : vector<8x32xf32>
    %44 = arith.addf %1, %43 : vector<8x32xf32>
    %c263 = arith.constant 263 : index
    %c0_16 = arith.constant 0 : index
    %45 = vector.load %arg3[%c263, %c0_16] : memref<272x128xf32, #tpu.memory_space<vmem>>, vector<1x32xf32>
    %c264 = arith.constant 264 : index
    %c0_17 = arith.constant 0 : index
    %46 = vector.load %arg3[%c264, %c0_17] : memref<272x128xf32, #tpu.memory_space<vmem>>, vector<1x32xf32>
    %cst_18 = arith.constant dense<0.000000e+00> : vector<8xf32>
    %47 = vector.multi_reduction <add>, %44, %cst_18 [1] : vector<8x32xf32> to vector<8xf32>
    %48 = vector.shape_cast %47 : vector<8xf32> to vector<8x1xf32>
    %cst_19 = arith.constant 3.200000e+01 : f32
    %49 = vector.broadcast %cst_19 : f32 to vector<8x1xf32>
    %50 = arith.divf %48, %49 : vector<8x1xf32>
    %51 = vector.broadcast %50 : vector<8x1xf32> to vector<8x32xf32>
    %52 = arith.subf %44, %51 : vector<8x32xf32>
    %53 = arith.mulf %52, %52 : vector<8x32xf32>
    %cst_20 = arith.constant dense<0.000000e+00> : vector<8xf32>
    %54 = vector.multi_reduction <add>, %53, %cst_20 [1] : vector<8x32xf32> to vector<8xf32>
    %55 = vector.shape_cast %54 : vector<8xf32> to vector<8x1xf32>
    %cst_21 = arith.constant 3.100000e+01 : f32
    %56 = vector.broadcast %cst_21 : f32 to vector<8x1xf32>
    %57 = arith.divf %55, %56 : vector<8x1xf32>
    %58 = math.sqrt %57 : vector<8x1xf32>
    %cst_22 = arith.constant 9.99999996E-13 : f32
    %59 = vector.broadcast %cst_22 : f32 to vector<8x1xf32>
    %60 = arith.addf %58, %59 : vector<8x1xf32>
    %61 = vector.broadcast %60 : vector<8x1xf32> to vector<8x32xf32>
    %62 = arith.divf %52, %61 : vector<8x32xf32>
    %63 = vector.broadcast %45 : vector<1x32xf32> to vector<8x32xf32>
    %64 = arith.mulf %63, %62 : vector<8x32xf32>
    %65 = vector.broadcast %46 : vector<1x32xf32> to vector<8x32xf32>
    %66 = arith.addf %64, %65 : vector<8x32xf32>
    %c64 = arith.constant 64 : index
    %c0_23 = arith.constant 0 : index
    %67 = vector.load %arg3[%c64, %c0_23] : memref<272x128xf32, #tpu.memory_space<vmem>>, vector<32x32xf32>
    %cst_24 = arith.constant dense<0.000000e+00> : vector<8x32xf32>
    %68 = tpu.matmul %66, %67, %cst_24 {dimension_numbers = #tpu.dot_dimension_numbers<[1], [0], [0], [1], [0, 0, 1, 1], [], []>} : vector<8x32xf32>, vector<32x32xf32>, vector<8x32xf32> -> vector<8x32xf32>
    %c258 = arith.constant 258 : index
    %c0_25 = arith.constant 0 : index
    %69 = vector.load %arg3[%c258, %c0_25] : memref<272x128xf32, #tpu.memory_space<vmem>>, vector<1x32xf32>
    %70 = vector.broadcast %69 : vector<1x32xf32> to vector<8x32xf32>
    %71 = arith.addf %68, %70 : vector<8x32xf32>
    %c96 = arith.constant 96 : index
    %c0_26 = arith.constant 0 : index
    %72 = vector.load %arg3[%c96, %c0_26] : memref<272x128xf32, #tpu.memory_space<vmem>>, vector<32x64xf32>
    %cst_27 = arith.constant dense<0.000000e+00> : vector<8x64xf32>
    %73 = tpu.matmul %3, %72, %cst_27 {dimension_numbers = #tpu.dot_dimension_numbers<[1], [0], [0], [1], [0, 0, 1, 1], [], []>} : vector<8x32xf32>, vector<32x64xf32>, vector<8x64xf32> -> vector<8x64xf32>
    %c259 = arith.constant 259 : index
    %c0_28 = arith.constant 0 : index
    %74 = vector.load %arg3[%c259, %c0_28] : memref<272x128xf32, #tpu.memory_space<vmem>>, vector<1x64xf32>
    %75 = vector.broadcast %74 : vector<1x64xf32> to vector<8x64xf32>
    %76 = arith.addf %73, %75 : vector<8x64xf32>
    %c128 = arith.constant 128 : index
    %c0_29 = arith.constant 0 : index
    %77 = vector.load %arg3[%c128, %c0_29] : memref<272x128xf32, #tpu.memory_space<vmem>>, vector<32x32xf32>
    %c260 = arith.constant 260 : index
    %c0_30 = arith.constant 0 : index
    %78 = vector.load %arg3[%c260, %c0_30] : memref<272x128xf32, #tpu.memory_space<vmem>>, vector<1x32xf32>
    %79 = vector.shape_cast %77 : vector<32x32xf32> to vector<4x8x32xf32>
    %80 = tpu.transpose %76, [1, 0] : vector<8x64xf32> -> vector<64x8xf32>
    %81 = vector.extract_strided_slice %80 {offsets = [0, 0], sizes = [32, 8], strides = [1, 1]} : vector<64x8xf32> to vector<32x8xf32>
    %82 = vector.shape_cast %81 : vector<32x8xf32> to vector<4x8x8xf32>
    %83 = vector.extract_strided_slice %80 {offsets = [32, 0], sizes = [32, 8], strides = [1, 1]} : vector<64x8xf32> to vector<32x8xf32>
    %84 = vector.shape_cast %83 : vector<32x8xf32> to vector<4x8x8xf32>
    %85 = vector.extract_strided_slice %71 {offsets = [0, 0], sizes = [8, 8], strides = [1, 1]} : vector<8x32xf32> to vector<8x8xf32>
    %86 = vector.shape_cast %85 : vector<8x8xf32> to vector<1x8x8xf32>
    %87 = vector.extract_strided_slice %71 {offsets = [0, 8], sizes = [8, 8], strides = [1, 1]} : vector<8x32xf32> to vector<8x8xf32>
    %88 = vector.shape_cast %87 : vector<8x8xf32> to vector<1x8x8xf32>
    %89 = vector.extract_strided_slice %71 {offsets = [0, 16], sizes = [8, 8], strides = [1, 1]} : vector<8x32xf32> to vector<8x8xf32>
    %90 = vector.shape_cast %89 : vector<8x8xf32> to vector<1x8x8xf32>
    %91 = vector.extract_strided_slice %71 {offsets = [0, 24], sizes = [8, 8], strides = [1, 1]} : vector<8x32xf32> to vector<8x8xf32>
    %92 = vector.shape_cast %91 : vector<8x8xf32> to vector<1x8x8xf32>
    %93 = tpu.concatenate %86, %88, %90, %92 in 0 : vector<1x8x8xf32>, vector<1x8x8xf32>, vector<1x8x8xf32>, vector<1x8x8xf32> -> vector<4x8x8xf32>
    %cst_31 = arith.constant dense<0.000000e+00> : vector<4x8x8xf32>
    %94 = tpu.matmul %93, %82, %cst_31 {dimension_numbers = #tpu.dot_dimension_numbers<[2], [1], [1], [2], [0, 0, 0, 1, 1, 2], [0], [0]>} : vector<4x8x8xf32>, vector<4x8x8xf32>, vector<4x8x8xf32> -> vector<4x8x8xf32>
    %cst_32 = arith.constant dense<0xFF800000> : vector<4x8xf32>
    %95 = vector.multi_reduction <maximumf>, %94, %cst_32 [2] : vector<4x8x8xf32> to vector<4x8xf32>
    %96 = vector.shape_cast %95 : vector<4x8xf32> to vector<4x8x1xf32>
    %97 = vector.broadcast %96 : vector<4x8x1xf32> to vector<4x8x8xf32>
    %98 = arith.subf %94, %97 : vector<4x8x8xf32>
    %99 = math.exp %98 : vector<4x8x8xf32>
    %cst_33 = arith.constant dense<0.000000e+00> : vector<4x8xf32>
    %100 = vector.multi_reduction <add>, %99, %cst_33 [2] : vector<4x8x8xf32> to vector<4x8xf32>
    %101 = vector.shape_cast %100 : vector<4x8xf32> to vector<4x8x1xf32>
    %102 = tpu.reciprocal %101 {approx = true} : vector<4x8x1xf32> -> vector<4x8x1xf32>
    %103 = vector.broadcast %102 : vector<4x8x1xf32> to vector<4x8x8xf32>
    %104 = arith.mulf %99, %103 : vector<4x8x8xf32>
    %cst_34 = arith.constant dense<0.000000e+00> : vector<4x8x8xf32>
    %105 = tpu.matmul %104, %84, %cst_34 {dimension_numbers = #tpu.dot_dimension_numbers<[2], [2], [1], [1], [0, 0, 0, 1, 1, 1], [0], [0]>} : vector<4x8x8xf32>, vector<4x8x8xf32>, vector<4x8x8xf32> -> vector<4x8x8xf32>
    %cst_35 = arith.constant dense<0.000000e+00> : vector<4x8x32xf32>
    %106 = tpu.matmul %105, %79, %cst_35 {dimension_numbers = #tpu.dot_dimension_numbers<[2], [1], [1], [2], [0, 0, 0, 1, 1, 2], [0], [0]>} : vector<4x8x8xf32>, vector<4x8x32xf32>, vector<4x8x32xf32> -> vector<4x8x32xf32>
    %cst_36 = arith.constant dense<0.000000e+00> : vector<8x32xf32>
    %107 = vector.multi_reduction <add>, %106, %cst_36 [0] : vector<4x8x32xf32> to vector<8x32xf32>
    %108 = vector.broadcast %78 : vector<1x32xf32> to vector<8x32xf32>
    %109 = arith.addf %107, %108 : vector<8x32xf32>
    %110 = arith.addf %66, %109 : vector<8x32xf32>
    %c265 = arith.constant 265 : index
    %c0_37 = arith.constant 0 : index
    %111 = vector.load %arg3[%c265, %c0_37] : memref<272x128xf32, #tpu.memory_space<vmem>>, vector<1x32xf32>
    %c266 = arith.constant 266 : index
    %c0_38 = arith.constant 0 : index
    %112 = vector.load %arg3[%c266, %c0_38] : memref<272x128xf32, #tpu.memory_space<vmem>>, vector<1x32xf32>
    %cst_39 = arith.constant dense<0.000000e+00> : vector<8xf32>
    %113 = vector.multi_reduction <add>, %110, %cst_39 [1] : vector<8x32xf32> to vector<8xf32>
    %114 = vector.shape_cast %113 : vector<8xf32> to vector<8x1xf32>
    %cst_40 = arith.constant 3.200000e+01 : f32
    %115 = vector.broadcast %cst_40 : f32 to vector<8x1xf32>
    %116 = arith.divf %114, %115 : vector<8x1xf32>
    %117 = vector.broadcast %116 : vector<8x1xf32> to vector<8x32xf32>
    %118 = arith.subf %110, %117 : vector<8x32xf32>
    %119 = arith.mulf %118, %118 : vector<8x32xf32>
    %cst_41 = arith.constant dense<0.000000e+00> : vector<8xf32>
    %120 = vector.multi_reduction <add>, %119, %cst_41 [1] : vector<8x32xf32> to vector<8xf32>
    %121 = vector.shape_cast %120 : vector<8xf32> to vector<8x1xf32>
    %cst_42 = arith.constant 3.100000e+01 : f32
    %122 = vector.broadcast %cst_42 : f32 to vector<8x1xf32>
    %123 = arith.divf %121, %122 : vector<8x1xf32>
    %124 = math.sqrt %123 : vector<8x1xf32>
    %cst_43 = arith.constant 9.99999996E-13 : f32
    %125 = vector.broadcast %cst_43 : f32 to vector<8x1xf32>
    %126 = arith.addf %124, %125 : vector<8x1xf32>
    %127 = vector.broadcast %126 : vector<8x1xf32> to vector<8x32xf32>
    %128 = arith.divf %118, %127 : vector<8x32xf32>
    %129 = vector.broadcast %111 : vector<1x32xf32> to vector<8x32xf32>
    %130 = arith.mulf %129, %128 : vector<8x32xf32>
    %131 = vector.broadcast %112 : vector<1x32xf32> to vector<8x32xf32>
    %132 = arith.addf %130, %131 : vector<8x32xf32>
    %c160 = arith.constant 160 : index
    %c0_44 = arith.constant 0 : index
    %133 = vector.load %arg3[%c160, %c0_44] : memref<272x128xf32, #tpu.memory_space<vmem>>, vector<32x64xf32>
    %cst_45 = arith.constant dense<0.000000e+00> : vector<8x64xf32>
    %134 = tpu.matmul %132, %133, %cst_45 {dimension_numbers = #tpu.dot_dimension_numbers<[1], [0], [0], [1], [0, 0, 1, 1], [], []>} : vector<8x32xf32>, vector<32x64xf32>, vector<8x64xf32> -> vector<8x64xf32>
    %c261 = arith.constant 261 : index
    %c0_46 = arith.constant 0 : index
    %135 = vector.load %arg3[%c261, %c0_46] : memref<272x128xf32, #tpu.memory_space<vmem>>, vector<1x64xf32>
    %136 = vector.broadcast %135 : vector<1x64xf32> to vector<8x64xf32>
    %137 = arith.addf %134, %136 : vector<8x64xf32>
    %cst_47 = arith.constant 0.000000e+00 : f32
    %138 = vector.broadcast %cst_47 : f32 to vector<8x64xf32>
    %139 = arith.maximumf %137, %138 : vector<8x64xf32>
    %c192 = arith.constant 192 : index
    %c0_48 = arith.constant 0 : index
    %140 = vector.load %arg3[%c192, %c0_48] : memref<272x128xf32, #tpu.memory_space<vmem>>, vector<64x32xf32>
    %cst_49 = arith.constant dense<0.000000e+00> : vector<8x32xf32>
    %141 = tpu.matmul %139, %140, %cst_49 {dimension_numbers = #tpu.dot_dimension_numbers<[1], [0], [0], [1], [0, 0, 1, 1], [], []>} : vector<8x64xf32>, vector<64x32xf32>, vector<8x32xf32> -> vector<8x32xf32>
    %c262 = arith.constant 262 : index
    %c0_50 = arith.constant 0 : index
    %142 = vector.load %arg3[%c262, %c0_50] : memref<272x128xf32, #tpu.memory_space<vmem>>, vector<1x32xf32>
    %143 = vector.broadcast %142 : vector<1x32xf32> to vector<8x32xf32>
    %144 = arith.addf %141, %143 : vector<8x32xf32>
    %145 = arith.addf %132, %144 : vector<8x32xf32>
    %c267 = arith.constant 267 : index
    %c0_51 = arith.constant 0 : index
    %146 = vector.load %arg3[%c267, %c0_51] : memref<272x128xf32, #tpu.memory_space<vmem>>, vector<1x32xf32>
    %c268 = arith.constant 268 : index
    %c0_52 = arith.constant 0 : index
    %147 = vector.load %arg3[%c268, %c0_52] : memref<272x128xf32, #tpu.memory_space<vmem>>, vector<1x32xf32>
    %cst_53 = arith.constant dense<0.000000e+00> : vector<8xf32>
    %148 = vector.multi_reduction <add>, %145, %cst_53 [1] : vector<8x32xf32> to vector<8xf32>
    %149 = vector.shape_cast %148 : vector<8xf32> to vector<8x1xf32>
    %cst_54 = arith.constant 3.200000e+01 : f32
    %150 = vector.broadcast %cst_54 : f32 to vector<8x1xf32>
    %151 = arith.divf %149, %150 : vector<8x1xf32>
    %152 = vector.broadcast %151 : vector<8x1xf32> to vector<8x32xf32>
    %153 = arith.subf %145, %152 : vector<8x32xf32>
    %154 = arith.mulf %153, %153 : vector<8x32xf32>
    %cst_55 = arith.constant dense<0.000000e+00> : vector<8xf32>
    %155 = vector.multi_reduction <add>, %154, %cst_55 [1] : vector<8x32xf32> to vector<8xf32>
    %156 = vector.shape_cast %155 : vector<8xf32> to vector<8x1xf32>
    %cst_56 = arith.constant 3.100000e+01 : f32
    %157 = vector.broadcast %cst_56 : f32 to vector<8x1xf32>
    %158 = arith.divf %156, %157 : vector<8x1xf32>
    %159 = math.sqrt %158 : vector<8x1xf32>
    %cst_57 = arith.constant 9.99999996E-13 : f32
    %160 = vector.broadcast %cst_57 : f32 to vector<8x1xf32>
    %161 = arith.addf %159, %160 : vector<8x1xf32>
    %162 = vector.broadcast %161 : vector<8x1xf32> to vector<8x32xf32>
    %163 = arith.divf %153, %162 : vector<8x32xf32>
    %164 = vector.broadcast %146 : vector<1x32xf32> to vector<8x32xf32>
    %165 = arith.mulf %164, %163 : vector<8x32xf32>
    %166 = vector.broadcast %147 : vector<1x32xf32> to vector<8x32xf32>
    %167 = arith.addf %165, %166 : vector<8x32xf32>
    %c0_58 = arith.constant 0 : index
    %c0_59 = arith.constant 0 : index
    %c0_60 = arith.constant 0 : index
    %168 = vector.load %arg4[%c0_58, %c0_59, %c0_60] : memref<1x8x32xf32, #tpu.memory_space<vmem>>, vector<1x8x32xf32>
    %169 = vector.shape_cast %168 : vector<1x8x32xf32> to vector<8x32xf32>
    %170 = vector.shape_cast %167 : vector<8x32xf32> to vector<1x8x32xf32>
    tpu.vector_store %arg4[%c0_58, %c0_59, %c0_60], %170 {strides = array<i32>} : memref<1x8x32xf32, #tpu.memory_space<vmem>>, vector<1x8x32xf32>,
    return
  }
  func.func @transform_0(%arg0: i32) -> (i32, i32, i32) {
    %c0_i32 = arith.constant 0 : i32
    %c0_i32_0 = arith.constant 0 : i32
    %c0_i32_1 = arith.constant 0 : i32
    return %arg0, %c0_i32, %c0_i32_0 : i32, i32, i32
  }
  func.func @transform_1(%arg0: i32) -> (i32, i32, i32) {
    %c0_i32 = arith.constant 0 : i32
    %c0_i32_0 = arith.constant 0 : i32
    %c0_i32_1 = arith.constant 0 : i32
    return %arg0, %c0_i32, %c0_i32_0 : i32, i32, i32
  }
  func.func @transform_2(%arg0: i32) -> (i32, i32) {
    %c0_i32 = arith.constant 0 : i32
    %c0_i32_0 = arith.constant 0 : i32
    %c0_i32_1 = arith.constant 0 : i32
    return %c0_i32, %c0_i32_0 : i32, i32
  }
  func.func @transform_3(%arg0: i32) -> (i32, i32, i32) {
    %c0_i32 = arith.constant 0 : i32
    %c0_i32_0 = arith.constant 0 : i32
    %c0_i32_1 = arith.constant 0 : i32
    return %arg0, %c0_i32, %c0_i32_0 : i32, i32, i32
  }
}

</mosaic_0001>

<llo_original>
// kernel: tpu_custom_call.1
$region0: #{tpu_custom_call.1}
  #allocation0 [shape = 'u32[]', space=smem, size = 0x4, offset = 0x4, fixed_abs, tag = 'smem constant byte address 0x4 - core index']
  #allocation1 [shape = 'u32[144,128]{1,0:T(1,128)}', space=vmem, size = 0x12000, scoped, tag = 'internal scratch']
  %s0 = inlined_call_operand.hbm [shape: f32[2,8,32], index: 0, kind: input, shape index: {}]
  %s1 = inlined_call_operand.hbm [shape: f32[2,8,32], index: 1, kind: input, shape index: {}]
  %s2 = inlined_call_operand.hbm [shape: f32[272,128], index: 2, kind: input, shape index: {}]
  %s3 = inlined_call_operand.hbm [shape: f32[2,8,32], index: 3, kind: output, shape index: {}]
  %s4 = sld [smem:[#allocation0]]
  $region57: #{tpu_custom_call.1} parent=0
    _
  %s6 = ssub.s32 1, %s4
  %s7 = scalar_select 0, %s6, %s4
  $region1: #{tpu_custom_call.1} parent=0
    #allocation2 [shape = 'u8[8192]{0}', space=vmem, size = 0x2000, scoped, tag = 'input window, operand 0']
    #allocation3 [shape = 's32[2]{0}', space=sflag, size = 0x8, scoped, tag = 'scoped memory for tpu_custom_call.1']
    #allocation4 [shape = 's32[2]{0}', space=sflag, size = 0x8, scoped, tag = 'scoped memory for tpu_custom_call.1']
    #allocation5 [shape = 'u8[8192]{0}', space=vmem, size = 0x2000, scoped, tag = 'input window, operand 1']
    #allocation6 [shape = 's32[2]{0}', space=sflag, size = 0x8, scoped, tag = 'scoped memory for tpu_custom_call.1']
    #allocation7 [shape = 'u8[139264]{0}', space=vmem, size = 0x22000, scoped, tag = 'input window, operand 2, single buffered']
    #allocation8 [shape = 'u8[8192]{0}', space=vmem, size = 0x2000, scoped, tag = 'output window, operand 0']
    %8 = vsyncpa [#allocation3], 0
    %s9 = scalar_lea.sflag [#allocation3], 1
    %10 = vsyncpa %s9, 0
    %11 = vsyncpa [#allocation6], 0
    %s12 = scalar_lea.sflag [#allocation6], 1
    %13 = vsyncpa %s12, 0
    %14 = vsyncpa [#allocation4], 0
    %s15 = scalar_lea.sflag [#allocation4], 1
    %16 = vsyncpa %s15, 0
    loop: start=0, step=1, limit=4
    $region2: #{tpu_custom_call.1} parent=1 // loop_pre_header
      _
    $region3: #{tpu_custom_call.1} parent=1 // loop_header
      %s18 = sphi 0, %s22
      %p19 = scmp.ge.s32.totalorder %s18, 4
      %s28 = sphi 0, %s30
      %s31 = sphi 0, %s28
      %s32 = sphi 0, %s31
      %s48 = sphi 0, %s32
      %s54 = sphi 0, %s56
      %s57 = sphi 0, %s54
      %s58 = sphi 0, %s57
      %s74 = sphi 0, %s58
      %s78 = sphi 0, %s78
      %s80 = sphi 0, %s78
      %s81 = sphi 0, %s80
      %s95 = sphi 0, %s81
      %s101 = sphi 0, %s103
      %s104 = sphi 0, %s101
      %s105 = sphi 0, %s104
      %s121 = sphi 0, %s105
    $region4: #{tpu_custom_call.1} parent=1 // loop_header_branch
      %21 = sbr.rel (%p19) target = $region8
    $region5: #{tpu_custom_call.1} parent=1 // loop_body
      %s23 = ssub.s32 %s18, 1
      %s24 = ssub.s32 %s18, 2
      %s25 = sadd.s32 %s18, 1
      %s26 = ssub.s32 %s18, %s25
      %p27 = scmp.eq.s32.totalorder %s26, 0
      %s29 = sadd.s32 %s28, 1
      %s30 = scalar_select %p27, %s28, %s29
      %p33 = pneg %p27
      %p34 = scmp.eq.s32.totalorder %s18, 1
      %p35 = por %p33, %p34
      %p36 = scmp.ne.s32.totalorder %s28, %s31
      %p37 = scmp.eq.s32.totalorder %s18, 0
      %p38 = por %p36, %p37
      %p39 = scmp.ne.s32.totalorder %s28, %s31
      %p40 = scmp.eq.s32.totalorder %s23, 1
      %p41 = por %p39, %p40
      %p42 = scmp.ne.s32.totalorder %s31, %s32
      %p43 = scmp.eq.s32.totalorder %s23, 0
      %p44 = por %p42, %p43
      %p45 = scmp.ne.s32.totalorder %s31, %s32
      %p46 = scmp.eq.s32.totalorder %s24, 1
      %p47 = por %p45, %p46
      %p49 = scmp.ne.s32.totalorder %s32, %s48
      %p50 = scmp.eq.s32.totalorder %s24, 0
      %p51 = por %p49, %p50
      %s52 = ssub.s32 %s18, %s25
      %p53 = scmp.eq.s32.totalorder %s52, 0
      %s55 = sadd.s32 %s54, 1
      %s56 = scalar_select %p53, %s54, %s55
      %p59 = pneg %p53
      %p60 = scmp.eq.s32.totalorder %s18, 1
      %p61 = por %p59, %p60
      %p62 = scmp.ne.s32.totalorder %s54, %s57
      %p63 = scmp.eq.s32.totalorder %s18, 0
      %p64 = por %p62, %p63
      %p65 = scmp.ne.s32.totalorder %s54, %s57
      %p66 = scmp.eq.s32.totalorder %s23, 1
      %p67 = por %p65, %p66
      %p68 = scmp.ne.s32.totalorder %s57, %s58
      %p69 = scmp.eq.s32.totalorder %s23, 0
      %p70 = por %p68, %p69
      %p71 = scmp.ne.s32.totalorder %s57, %s58
      %p72 = scmp.eq.s32.totalorder %s24, 1
      %p73 = por %p71, %p72
      %p75 = scmp.ne.s32.totalorder %s58, %s74
      %p76 = scmp.eq.s32.totalorder %s24, 0
      %p77 = por %p75, %p76
      %s79 = sadd.s32 %s78, 1
      %p82 = scmp.eq.s32.totalorder %s18, 1
      %p83 = scmp.ne.s32.totalorder %s78, %s80
      %p84 = scmp.eq.s32.totalorder %s18, 0
      %p85 = por %p83, %p84
      %p86 = scmp.ne.s32.totalorder %s78, %s80
      %p87 = scmp.eq.s32.totalorder %s23, 1
      %p88 = por %p86, %p87
      %p89 = scmp.ne.s32.totalorder %s80, %s81
      %p90 = scmp.eq.s32.totalorder %s23, 0
      %p91 = por %p89, %p90
      %p92 = scmp.ne.s32.totalorder %s80, %s81
      %p93 = scmp.eq.s32.totalorder %s24, 1
      %p94 = por %p92, %p93
      %p96 = scmp.ne.s32.totalorder %s81, %s95
      %p97 = scmp.eq.s32.totalorder %s24, 0
      %p98 = por %p96, %p97
      %s99 = ssub.s32 %s18, %s25
      %p100 = scmp.eq.s32.totalorder %s99, 0
      %s102 = sadd.s32 %s101, 1
      %s103 = scalar_select %p100, %s101, %s102
      %p106 = pneg %p100
      %p107 = scmp.eq.s32.totalorder %s18, 1
      %p108 = por %p106, %p107
      %p109 = scmp.ne.s32.totalorder %s101, %s104
      %p110 = scmp.eq.s32.totalorder %s18, 0
      %p111 = por %p109, %p110
      %p112 = scmp.ne.s32.totalorder %s101, %s104
      %p113 = scmp.eq.s32.totalorder %s23, 1
      %p114 = por %p112, %p113
      %p115 = scmp.ne.s32.totalorder %s104, %s105
      %p116 = scmp.eq.s32.totalorder %s23, 0
      %p117 = por %p115, %p116
      %p118 = scmp.ne.s32.totalorder %s104, %s105
      %p119 = scmp.eq.s32.totalorder %s24, 1
      %p120 = por %p118, %p119
      %p122 = scmp.ne.s32.totalorder %s105, %s121
      %p123 = scmp.eq.s32.totalorder %s24, 0
      %p124 = por %p122, %p123
      %p125 = scmp.le.s32.totalorder 1, %s18
      %p126 = scmp.lt.s32.totalorder %s18, 3
      %p127 = pnand %p125, %p126
      %p128 = pneg %p127
      // Predicated region
      $region9: #{tpu_custom_call.1} parent=5 // pred_check
        _
      $region10: #{tpu_custom_call.1} parent=5 // pred_check_branch
        %130 = sbr.rel (%p127) target = $region12
      $region11: #{tpu_custom_call.1} parent=5 // pred_region
        %s131 = ssub.s32 %s18, 1
        // Predicated region
        $region13: #{tpu_custom_call.1} parent=11 // pred_check
          %p132 = pneg %p91
        $region14: #{tpu_custom_call.1} parent=11 // pred_check_branch
          %134 = sbr.rel (%p132) target = $region16
        $region15: #{tpu_custom_call.1} parent=11 // pred_region
          %s136 = ssub.s32 4352, 4352
          %137 = vsyncadd [#allocation6], %s136
          %s138 = sshll.u32 [#allocation7], 4
          %s139 = int_to_ptr.vmem [resolvable:$true] %s138
          %144 = dma.hbm_to_vmem [thread:$0]  %s2, 4352, %s139, [#allocation6], 128, 128, 8
        $region16: #{tpu_custom_call.1} parent=11 // pred_fallthru
          _
      $region12: #{tpu_custom_call.1} parent=5 // pred_fallthru
        _
      %p145 = scmp.lt.s32.totalorder %s18, 2
      // Predicated region
      $region17: #{tpu_custom_call.1} parent=5 // pred_check
        %p146 = pneg %p145
      $region18: #{tpu_custom_call.1} parent=5 // pred_check_branch
        %148 = sbr.rel (%p146) target = $region20
      $region19: #{tpu_custom_call.1} parent=5 // pred_region
        // Predicated region
        $region21: #{tpu_custom_call.1} parent=19 // pred_check
          %p149 = pneg %p38
        $region22: #{tpu_custom_call.1} parent=19 // pred_check_branch
          %151 = sbr.rel (%p149) target = $region24
        $region23: #{tpu_custom_call.1} parent=19 // pred_region
          %s152 = sand.u32 %s28, 1
          %s153 = scalar_lea.sflag [#allocation3], %s152
          %s154 = sand.u32 %s28, 1
          %s155 = smul.addr %s154, 8
          %s156 = scalar_lea.vmem [#allocation2], %s155
          %s158 = ssub.s32 128, 128
          %159 = vsyncadd %s153, %s158
          %s160 = smul.addr %s18, 128
          %s161 = scalar_lea.hbm %s0, %s160
          %s163 = sshll.u32 %s156, 4
          %s164 = int_to_ptr.vmem [resolvable:$true] %s163
          %166 = dma.hbm_to_vmem [thread:$0]  %s161, 128, %s164, %s153
        $region24: #{tpu_custom_call.1} parent=19 // pred_fallthru
          _
        // Predicated region
        $region25: #{tpu_custom_call.1} parent=19 // pred_check
          %p167 = pneg %p64
        $region26: #{tpu_custom_call.1} parent=19 // pred_check_branch
          %169 = sbr.rel (%p167) target = $region28
        $region27: #{tpu_custom_call.1} parent=19 // pred_region
          %s170 = sand.u32 %s18, 1
          %s171 = scalar_lea.sflag [#allocation6], %s170
          %s172 = sand.u32 %s54, 1
          %s173 = smul.addr %s172, 8
          %s174 = scalar_lea.vmem [#allocation5], %s173
          %s176 = ssub.s32 128, 128
          %177 = vsyncadd %s171, %s176
          %s178 = smul.addr %s18, 128
          %s179 = scalar_lea.hbm %s1, %s178
          %s181 = sshll.u32 %s174, 4
          %s182 = int_to_ptr.vmem [resolvable:$true] %s181
          %184 = dma.hbm_to_vmem [thread:$0]  %s179, 128, %s182, %s171
        $region28: #{tpu_custom_call.1} parent=19 // pred_fallthru
          _
      $region20: #{tpu_custom_call.1} parent=5 // pred_fallthru
        _
      %p185 = scmp.le.s32.totalorder 1, %s18
      %p186 = scmp.lt.s32.totalorder %s18, 3
      %p187 = pnand %p185, %p186
      %p188 = pneg %p187
      // Predicated region
      $region29: #{tpu_custom_call.1} parent=5 // pred_check
        _
      $region30: #{tpu_custom_call.1} parent=5 // pred_check_branch
        %190 = sbr.rel (%p187) target = $region32
      $region31: #{tpu_custom_call.1} parent=5 // pred_region
        %s191 = ssub.s32 %s18, 1
        %s192 = sand.u32 %s31, 1
        %s193 = scalar_lea.sflag [#allocation3], %s192
        %s194 = sand.u32 %s31, 1
        %s195 = smul.addr %s194, 8
        %s196 = scalar_lea.vmem [#allocation2], %s195
        // Predicated region
        $region33: #{tpu_custom_call.1} parent=31 // pred_check
          %p197 = pneg %p44
        $region34: #{tpu_custom_call.1} parent=31 // pred_check_branch
          %199 = sbr.rel (%p197) target = $region36
        $region35: #{tpu_custom_call.1} parent=31 // pred_region
          %200 = dma.done %s193, 128
        $region36: #{tpu_custom_call.1} parent=31 // pred_fallthru
          _
        %s201 = sand.u32 %s23, 1
        %s202 = scalar_lea.sflag [#allocation6], %s201
        %s203 = sand.u32 %s57, 1
        %s204 = smul.addr %s203, 8
        %s205 = scalar_lea.vmem [#allocation5], %s204
        // Predicated region
        $region37: #{tpu_custom_call.1} parent=31 // pred_check
          %p206 = pneg %p70
        $region38: #{tpu_custom_call.1} parent=31 // pred_check_branch
          %208 = sbr.rel (%p206) target = $region40
        $region39: #{tpu_custom_call.1} parent=31 // pred_region
          %209 = dma.done %s202, 128
        $region40: #{tpu_custom_call.1} parent=31 // pred_fallthru
          _
        // Predicated region
        $region41: #{tpu_custom_call.1} parent=31 // pred_check
          %p210 = pneg %p91
        $region42: #{tpu_custom_call.1} parent=31 // pred_check_branch
          %212 = sbr.rel (%p210) target = $region44
        $region43: #{tpu_custom_call.1} parent=31 // pred_region
          %213 = dma.done [#allocation6], 4352
        $region44: #{tpu_custom_call.1} parent=31 // pred_fallthru
          _
        %s214 = sand.u32 %s31, 1
        %s215 = scalar_lea.sflag [#allocation3], %s214
        %s216 = sand.u32 %s31, 1
        %s217 = smul.addr %s216, 8
        %s218 = scalar_lea.vmem [#allocation2], %s217
        %p219 = pneg %p44
        %p220 = pneg %p41
        %s221 = sand.u32 %s23, 1
        %s222 = scalar_lea.sflag [#allocation6], %s221
        %s223 = sand.u32 %s57, 1
        %s224 = smul.addr %s223, 8
        %s225 = scalar_lea.vmem [#allocation5], %s224
        %p226 = pneg %p70
        %p227 = pneg %p67
        %p228 = pneg %p91
        %p229 = pneg %p88
        %p230 = pneg %p117
        %p231 = pneg %p114
        %s232 = sand.u32 %s104, 1
        %s233 = scalar_lea.sflag [#allocation4], %s232
        %s234 = sand.u32 %s104, 1
        %s235 = smul.addr %s234, 8
        %s236 = scalar_lea.vmem [#allocation8], %s235
        %v237 = vld [vmem:[%s196] sm:$0xff]
        %v238 = vld [vmem:[%s205] sm:$0xff]
        %v239 = vld [vmem:[#allocation7] sm:$0xff]
        %v240 = vld [vmem:[#allocation7 + $0x8] sm:$0xff]
        %v241 = vld [vmem:[#allocation7 + $0x10] sm:$0xff]
        %v242 = vld [vmem:[#allocation7 + $0x18] sm:$0xff]
        %v243 = vld [vmem:[#allocation7 + $0x100] sm:$0x1]
        %v244 = vlaneseq
        %v245 = vshrl.u32 %v244, 7
        %v246 = vsub.s32 0, %v245
        %v247 = vrot.slane %v243, %v246
        %vm248 = vcmask 261120
        %v250 = vsel %vm248, %v237, 0
        %252 = vmatprep.subr.mxu0 0.0
        %253 = vmatpush1.msra.mxu0 0.0
        %254 = vmatprep.subr.mxu0 0.0
        %255 = vmatpush1.msra.mxu0 0.0
        %256 = vmatprep.subr.mxu0 0.0
        %257 = vmatpush1.msra.mxu0 0.0
        %258 = vmatprep.subr.mxu0 0.0
        %259 = vmatpush1.msra.mxu0 0.0
        %260 = vmatprep.subr.mxu0 0.0
        %261 = vmatpush1.msra.mxu0 0.0
        %262 = vmatprep.subr.mxu0 0.0
        %263 = vmatpush1.msra.mxu0 0.0
        %264 = vmatprep.subr.mxu0 0.0
        %265 = vmatpush1.msra.mxu0 0.0
        %266 = vmatprep.subr.mxu0 0.0
        %267 = vmatpush1.msra.mxu0 0.0
        %268 = vmatprep.subr.mxu0 0.0
        %269 = vmatpush1.msra.mxu0 0.0
        %270 = vmatprep.subr.mxu0 0.0
        %271 = vmatpush1.msra.mxu0 0.0
        %272 = vmatprep.subr.mxu0 0.0
        %273 = vmatpush1.msra.mxu0 0.0
        %274 = vmatprep.subr.mxu0 0.0
        %275 = vmatpush1.msra.mxu0 0.0
        %276 = vmatprep.subr.mxu0 0.0
        %277 = vmatpush1.msra.mxu0 %v242
        %278 = vmatprep.subr.mxu0 0.0
        %279 = vmatpush1.msra.mxu0 %v241
        %280 = vmatprep.subr.mxu0 0.0
        %281 = vmatpush1.msra.mxu0 %v240
        %282 = vmatprep.subr.mxu0 0.0
        %283 = vmatpush1.msra.mxu0 %v239
        %284 = vmatprep.subr.mxu0 0.0
        %285 = vmatpush2.msra.mxu0 0.0
        %286 = vmatprep.subr.mxu0 0.0
        %287 = vmatpush2.msra.mxu0 0.0
        %288 = vmatprep.subr.mxu0 0.0
        %289 = vmatpush2.msra.mxu0 0.0
        %290 = vmatprep.subr.mxu0 0.0
        %291 = vmatpush2.msra.mxu0 0.0
        %292 = vmatprep.subr.mxu0 0.0
        %293 = vmatpush2.msra.mxu0 0.0
        %294 = vmatprep.subr.mxu0 0.0
        %295 = vmatpush2.msra.mxu0 0.0
        %296 = vmatprep.subr.mxu0 0.0
        %297 = vmatpush2.msra.mxu0 0.0
        %298 = vmatprep.subr.mxu0 0.0
        %299 = vmatpush2.msra.mxu0 0.0
        %300 = vmatprep.subr.mxu0 0.0
        %301 = vmatpush2.msra.mxu0 0.0
        %302 = vmatprep.subr.mxu0 0.0
        %303 = vmatpush2.msra.mxu0 0.0
        %304 = vmatprep.subr.mxu0 0.0
        %305 = vmatpush2.msra.mxu0 0.0
        %306 = vmatprep.subr.mxu0 0.0
        %307 = vmatpush2.msra.mxu0 0.0
        %308 = vmatprep.subr.mxu0 0.0
        %309 = vmatpush2.msra.mxu0 0.0
        %310 = vmatprep.subr.mxu0 0.0
        %311 = vmatpush2.msra.mxu0 0.0
        %312 = vmatprep.subr.mxu0 0.0
        %313 = vmatpush2.msra.mxu0 0.0
        %314 = vmatprep.subr.mxu0 0.0
        %315 = vmatpush2.msra.mxu0 0.0
        %316 = vmatprep.mubr.f32.mxu0 0.0
        %317 = vmatmul.mubr.f32.gmra.mxu0 %v250
        %v318 = vpop.f32.mrf.mxu0
        %v319 = vadd.f32 %v247, %v318
        %v320 = vpop.f32.mrf.mxu0
        %321 = vdwg.mxu0
        %v322 = vld [vmem:[#allocation7 + $0x20] sm:$0xff]
        %v323 = vld [vmem:[#allocation7 + $0x28] sm:$0xff]
        %v324 = vld [vmem:[#allocation7 + $0x30] sm:$0xff]
        %v325 = vld [vmem:[#allocation7 + $0x38] sm:$0xff]
        %v326 = vld [vmem:[#allocation7 + $0x101] sm:$0x1]
        %328 = vrot.lane.b32.xlu0 %v319, 96
        %v329 = vpop.permute.xlu0 %328
        %331 = vxpose.xlu0.b32.start [1/16] %v329, 128
        %332 = vxpose.xlu0.b32.cont [2/16] 0.0, 128
        %333 = vxpose.xlu0.b32.cont [3/16] 0.0, 128
        %334 = vxpose.xlu0.b32.cont [4/16] 0.0, 128
        %335 = vxpose.xlu0.b32.cont [5/16] 0.0, 128
        %336 = vxpose.xlu0.b32.cont [6/16] 0.0, 128
        %337 = vxpose.xlu0.b32.cont [7/16] 0.0, 128
        %338 = vxpose.xlu0.b32.cont [8/16] 0.0, 128
        %339 = vxpose.xlu0.b32.cont [9/16] 0.0, 128
        %340 = vxpose.xlu0.b32.cont [10/16] 0.0, 128
        %341 = vxpose.xlu0.b32.cont [11/16] 0.0, 128
        %342 = vxpose.xlu0.b32.cont [12/16] 0.0, 128
        %343 = vxpose.xlu0.b32.cont [13/16] 0.0, 128
        %344 = vxpose.xlu0.b32.cont [14/16] 0.0, 128
        %345 = vxpose.xlu0.b32.cont [15/16] 0.0, 128
        %346 = vxpose.xlu0.b32.end [16/16] 0.0, 128
        %v347 = vpop.trf.xlu0
        %v348 = vpop.trf.xlu0
        %v349 = vpop.trf.xlu0
        %v350 = vpop.trf.xlu0
        %v351 = vpop.trf.xlu0
        %v352 = vpop.trf.xlu0
        %v353 = vpop.trf.xlu0
        %v354 = vpop.trf.xlu0
        %v355 = vpop.trf.xlu0
        %v356 = vpop.trf.xlu0
        %v357 = vpop.trf.xlu0
        %v358 = vpop.trf.xlu0
        %v359 = vpop.trf.xlu0
        %v360 = vpop.trf.xlu0
        %v361 = vpop.trf.xlu0
        %v362 = vpop.trf.xlu0
        %363 = vrot.lane.b32.xlu0 %v319, 120
        %v364 = vpop.permute.xlu0 %363
        %365 = vrot.lane.b32.xlu0 %v319, 112
        %v366 = vpop.permute.xlu0 %365
        %367 = vrot.lane.b32.xlu0 %v319, 104
        %v368 = vpop.permute.xlu0 %367
        %vm369 = vcmask 64512
        %v370 = vsel %vm369, %v319, 0
        %372 = vmatprep.subr.mxu0 0.0
        %373 = vmatpush1.msra.mxu0 0.0
        %374 = vmatprep.subr.mxu0 0.0
        %375 = vmatpush1.msra.mxu0 0.0
        %376 = vmatprep.subr.mxu0 0.0
        %377 = vmatpush1.msra.mxu0 0.0
        %378 = vmatprep.subr.mxu0 0.0
        %379 = vmatpush1.msra.mxu0 0.0
        %380 = vmatprep.subr.mxu0 0.0
        %381 = vmatpush1.msra.mxu0 0.0
        %382 = vmatprep.subr.mxu0 0.0
        %383 = vmatpush1.msra.mxu0 0.0
        %384 = vmatprep.subr.mxu0 0.0
        %385 = vmatpush1.msra.mxu0 0.0
        %386 = vmatprep.subr.mxu0 0.0
        %387 = vmatpush1.msra.mxu0 0.0
        %388 = vmatprep.subr.mxu0 0.0
        %389 = vmatpush1.msra.mxu0 0.0
        %390 = vmatprep.subr.mxu0 0.0
        %391 = vmatpush1.msra.mxu0 0.0
        %392 = vmatprep.subr.mxu0 0.0
        %393 = vmatpush1.msra.mxu0 0.0
        %394 = vmatprep.subr.mxu0 0.0
        %395 = vmatpush1.msra.mxu0 0.0
        %396 = vmatprep.subr.mxu0 0.0
        %397 = vmatpush1.msra.mxu0 0.0
        %398 = vmatprep.subr.mxu0 0.0
        %399 = vmatpush1.msra.mxu0 0.0
        %400 = vmatprep.subr.mxu0 0.0
        %401 = vmatpush1.msra.mxu0 0.0
        %402 = vmatprep.subr.mxu0 0.0
        %403 = vmatpush1.msra.mxu0 %v347
        %404 = vmatprep.subr.mxu0 0.0
        %405 = vmatpush2.msra.mxu0 0.0
        %406 = vmatprep.subr.mxu0 0.0
        %407 = vmatpush2.msra.mxu0 0.0
        %408 = vmatprep.subr.mxu0 0.0
        %409 = vmatpush2.msra.mxu0 0.0
        %410 = vmatprep.subr.mxu0 0.0
        %411 = vmatpush2.msra.mxu0 0.0
        %412 = vmatprep.subr.mxu0 0.0
        %413 = vmatpush2.msra.mxu0 0.0
        %414 = vmatprep.subr.mxu0 0.0
        %415 = vmatpush2.msra.mxu0 0.0
        %416 = vmatprep.subr.mxu0 0.0
        %417 = vmatpush2.msra.mxu0 0.0
        %418 = vmatprep.subr.mxu0 0.0
        %419 = vmatpush2.msra.mxu0 0.0
        %420 = vmatprep.subr.mxu0 0.0
        %421 = vmatpush2.msra.mxu0 0.0
        %422 = vmatprep.subr.mxu0 0.0
        %423 = vmatpush2.msra.mxu0 0.0
        %424 = vmatprep.subr.mxu0 0.0
        %425 = vmatpush2.msra.mxu0 0.0
        %426 = vmatprep.subr.mxu0 0.0
        %427 = vmatpush2.msra.mxu0 0.0
        %428 = vmatprep.subr.mxu0 0.0
        %429 = vmatpush2.msra.mxu0 0.0
        %430 = vmatprep.subr.mxu0 0.0
        %431 = vmatpush2.msra.mxu0 0.0
        %432 = vmatprep.subr.mxu0 0.0
        %433 = vmatpush2.msra.mxu0 0.0
        %434 = vmatprep.subr.mxu0 0.0
        %435 = vmatpush2.msra.mxu0 0.0
        %436 = vmatprep.mubr.f32.mxu0 0.0
        %437 = vmatmul.mubr.f32.gmra.mxu0 %v370
        %v438 = vpop.f32.mrf.mxu0
        %v439 = vadd.f32 0.0, %v438
        %v440 = vpop.f32.mrf.mxu0
        %441 = vdwg.mxu0
        %v442 = vsel %vm369, %v364, 0
        %444 = vmatprep.subr.mxu0 0.0
        %445 = vmatpush1.msra.mxu0 0.0
        %446 = vmatprep.subr.mxu0 0.0
        %447 = vmatpush1.msra.mxu0 0.0
        %448 = vmatprep.subr.mxu0 0.0
        %449 = vmatpush1.msra.mxu0 0.0
        %450 = vmatprep.subr.mxu0 0.0
        %451 = vmatpush1.msra.mxu0 0.0
        %452 = vmatprep.subr.mxu0 0.0
        %453 = vmatpush1.msra.mxu0 0.0
        %454 = vmatprep.subr.mxu0 0.0
        %455 = vmatpush1.msra.mxu0 0.0
        %456 = vmatprep.subr.mxu0 0.0
        %457 = vmatpush1.msra.mxu0 0.0
        %458 = vmatprep.subr.mxu0 0.0
        %459 = vmatpush1.msra.mxu0 0.0
        %460 = vmatprep.subr.mxu0 0.0
        %461 = vmatpush1.msra.mxu0 0.0
        %462 = vmatprep.subr.mxu0 0.0
        %463 = vmatpush1.msra.mxu0 0.0
        %464 = vmatprep.subr.mxu0 0.0
        %465 = vmatpush1.msra.mxu0 0.0
        %466 = vmatprep.subr.mxu0 0.0
        %467 = vmatpush1.msra.mxu0 0.0
        %468 = vmatprep.subr.mxu0 0.0
        %469 = vmatpush1.msra.mxu0 0.0
        %470 = vmatprep.subr.mxu0 0.0
        %471 = vmatpush1.msra.mxu0 0.0
        %472 = vmatprep.subr.mxu0 0.0
        %473 = vmatpush1.msra.mxu0 0.0
        %474 = vmatprep.subr.mxu0 0.0
        %475 = vmatpush1.msra.mxu0 %v348
        %476 = vmatprep.subr.mxu0 0.0
        %477 = vmatpush2.msra.mxu0 0.0
        %478 = vmatprep.subr.mxu0 0.0
        %479 = vmatpush2.msra.mxu0 0.0
        %480 = vmatprep.subr.mxu0 0.0
        %481 = vmatpush2.msra.mxu0 0.0
        %482 = vmatprep.subr.mxu0 0.0
        %483 = vmatpush2.msra.mxu0 0.0
        %484 = vmatprep.subr.mxu0 0.0
        %485 = vmatpush2.msra.mxu0 0.0
        %486 = vmatprep.subr.mxu0 0.0
        %487 = vmatpush2.msra.mxu0 0.0
        %488 = vmatprep.subr.mxu0 0.0
        %489 = vmatpush2.msra.mxu0 0.0
        %490 = vmatprep.subr.mxu0 0.0
        %491 = vmatpush2.msra.mxu0 0.0
        %492 = vmatprep.subr.mxu0 0.0
        %493 = vmatpush2.msra.mxu0 0.0
        %494 = vmatprep.subr.mxu0 0.0
        %495 = vmatpush2.msra.mxu0 0.0
        %496 = vmatprep.subr.mxu0 0.0
        %497 = vmatpush2.msra.mxu0 0.0
        %498 = vmatprep.subr.mxu0 0.0
        %499 = vmatpush2.msra.mxu0 0.0
        %500 = vmatprep.subr.mxu0 0.0
        %501 = vmatpush2.msra.mxu0 0.0
        %502 = vmatprep.subr.mxu0 0.0
        %503 = vmatpush2.msra.mxu0 0.0
        %504 = vmatprep.subr.mxu0 0.0
        %505 = vmatpush2.msra.mxu0 0.0
        %506 = vmatprep.subr.mxu0 0.0
        %507 = vmatpush2.msra.mxu0 0.0
        %508 = vmatprep.mubr.f32.mxu0 0.0
        %509 = vmatmul.mubr.f32.gmra.mxu0 %v442
        %v510 = vpop.f32.mrf.mxu0
        %v511 = vadd.f32 0.0, %v510
        %v512 = vpop.f32.mrf.mxu0
        %513 = vdwg.mxu0
        %v514 = vsel %vm369, %v366, 0
        %516 = vmatprep.subr.mxu0 0.0
        %517 = vmatpush1.msra.mxu0 0.0
        %518 = vmatprep.subr.mxu0 0.0
        %519 = vmatpush1.msra.mxu0 0.0
        %520 = vmatprep.subr.mxu0 0.0
        %521 = vmatpush1.msra.mxu0 0.0
        %522 = vmatprep.subr.mxu0 0.0
        %523 = vmatpush1.msra.mxu0 0.0
        %524 = vmatprep.subr.mxu0 0.0
        %525 = vmatpush1.msra.mxu0 0.0
        %526 = vmatprep.subr.mxu0 0.0
        %527 = vmatpush1.msra.mxu0 0.0
        %528 = vmatprep.subr.mxu0 0.0
        %529 = vmatpush1.msra.mxu0 0.0
        %530 = vmatprep.subr.mxu0 0.0
        %531 = vmatpush1.msra.mxu0 0.0
        %532 = vmatprep.subr.mxu0 0.0
        %533 = vmatpush1.msra.mxu0 0.0
        %534 = vmatprep.subr.mxu0 0.0
        %535 = vmatpush1.msra.mxu0 0.0
        %536 = vmatprep.subr.mxu0 0.0
        %537 = vmatpush1.msra.mxu0 0.0
        %538 = vmatprep.subr.mxu0 0.0
        %539 = vmatpush1.msra.mxu0 0.0
        %540 = vmatprep.subr.mxu0 0.0
        %541 = vmatpush1.msra.mxu0 0.0
        %542 = vmatprep.subr.mxu0 0.0
        %543 = vmatpush1.msra.mxu0 0.0
        %544 = vmatprep.subr.mxu0 0.0
        %545 = vmatpush1.msra.mxu0 0.0
        %546 = vmatprep.subr.mxu0 0.0
        %547 = vmatpush1.msra.mxu0 %v349
        %548 = vmatprep.subr.mxu0 0.0
        %549 = vmatpush2.msra.mxu0 0.0
        %550 = vmatprep.subr.mxu0 0.0
        %551 = vmatpush2.msra.mxu0 0.0
        %552 = vmatprep.subr.mxu0 0.0
        %553 = vmatpush2.msra.mxu0 0.0
        %554 = vmatprep.subr.mxu0 0.0
        %555 = vmatpush2.msra.mxu0 0.0
        %556 = vmatprep.subr.mxu0 0.0
        %557 = vmatpush2.msra.mxu0 0.0
        %558 = vmatprep.subr.mxu0 0.0
        %559 = vmatpush2.msra.mxu0 0.0
        %560 = vmatprep.subr.mxu0 0.0
        %561 = vmatpush2.msra.mxu0 0.0
        %562 = vmatprep.subr.mxu0 0.0
        %563 = vmatpush2.msra.mxu0 0.0
        %564 = vmatprep.subr.mxu0 0.0
        %565 = vmatpush2.msra.mxu0 0.0
        %566 = vmatprep.subr.mxu0 0.0
        %567 = vmatpush2.msra.mxu0 0.0
        %568 = vmatprep.subr.mxu0 0.0
        %569 = vmatpush2.msra.mxu0 0.0
        %570 = vmatprep.subr.mxu0 0.0
        %571 = vmatpush2.msra.mxu0 0.0
        %572 = vmatprep.subr.mxu0 0.0
        %573 = vmatpush2.msra.mxu0 0.0
        %574 = vmatprep.subr.mxu0 0.0
        %575 = vmatpush2.msra.mxu0 0.0
        %576 = vmatprep.subr.mxu0 0.0
        %577 = vmatpush2.msra.mxu0 0.0
        %578 = vmatprep.subr.mxu0 0.0
        %579 = vmatpush2.msra.mxu0 0.0
        %580 = vmatprep.mubr.f32.mxu0 0.0
        %581 = vmatmul.mubr.f32.gmra.mxu0 %v514
        %v582 = vpop.f32.mrf.mxu0
        %v583 = vadd.f32 0.0, %v582
        %v584 = vpop.f32.mrf.mxu0
        %585 = vdwg.mxu0
        %v586 = vsel %vm369, %v368, 0
        %588 = vmatprep.subr.mxu0 0.0
        %589 = vmatpush1.msra.mxu0 0.0
        %590 = vmatprep.subr.mxu0 0.0
        %591 = vmatpush1.msra.mxu0 0.0
        %592 = vmatprep.subr.mxu0 0.0
        %593 = vmatpush1.msra.mxu0 0.0
        %594 = vmatprep.subr.mxu0 0.0
        %595 = vmatpush1.msra.mxu0 0.0
        %596 = vmatprep.subr.mxu0 0.0
        %597 = vmatpush1.msra.mxu0 0.0
        %598 = vmatprep.subr.mxu0 0.0
        %599 = vmatpush1.msra.mxu0 0.0
        %600 = vmatprep.subr.mxu0 0.0
        %601 = vmatpush1.msra.mxu0 0.0
        %602 = vmatprep.subr.mxu0 0.0
        %603 = vmatpush1.msra.mxu0 0.0
        %604 = vmatprep.subr.mxu0 0.0
        %605 = vmatpush1.msra.mxu0 0.0
        %606 = vmatprep.subr.mxu0 0.0
        %607 = vmatpush1.msra.mxu0 0.0
        %608 = vmatprep.subr.mxu0 0.0
        %609 = vmatpush1.msra.mxu0 0.0
        %610 = vmatprep.subr.mxu0 0.0
        %611 = vmatpush1.msra.mxu0 0.0
        %612 = vmatprep.subr.mxu0 0.0
        %613 = vmatpush1.msra.mxu0 0.0
        %614 = vmatprep.subr.mxu0 0.0
        %615 = vmatpush1.msra.mxu0 0.0
        %616 = vmatprep.subr.mxu0 0.0
        %617 = vmatpush1.msra.mxu0 0.0
        %618 = vmatprep.subr.mxu0 0.0
        %619 = vmatpush1.msra.mxu0 %v350
        %620 = vmatprep.subr.mxu0 0.0
        %621 = vmatpush2.msra.mxu0 0.0
        %622 = vmatprep.subr.mxu0 0.0
        %623 = vmatpush2.msra.mxu0 0.0
        %624 = vmatprep.subr.mxu0 0.0
        %625 = vmatpush2.msra.mxu0 0.0
        %626 = vmatprep.subr.mxu0 0.0
        %627 = vmatpush2.msra.mxu0 0.0
        %628 = vmatprep.subr.mxu0 0.0
        %629 = vmatpush2.msra.mxu0 0.0
        %630 = vmatprep.subr.mxu0 0.0
        %631 = vmatpush2.msra.mxu0 0.0
        %632 = vmatprep.subr.mxu0 0.0
        %633 = vmatpush2.msra.mxu0 0.0
        %634 = vmatprep.subr.mxu0 0.0
        %635 = vmatpush2.msra.mxu0 0.0
        %636 = vmatprep.subr.mxu0 0.0
        %637 = vmatpush2.msra.mxu0 0.0
        %638 = vmatprep.subr.mxu0 0.0
        %639 = vmatpush2.msra.mxu0 0.0
        %640 = vmatprep.subr.mxu0 0.0
        %641 = vmatpush2.msra.mxu0 0.0
        %642 = vmatprep.subr.mxu0 0.0
        %643 = vmatpush2.msra.mxu0 0.0
        %644 = vmatprep.subr.mxu0 0.0
        %645 = vmatpush2.msra.mxu0 0.0
        %646 = vmatprep.subr.mxu0 0.0
        %647 = vmatpush2.msra.mxu0 0.0
        %648 = vmatprep.subr.mxu0 0.0
        %649 = vmatpush2.msra.mxu0 0.0
        %650 = vmatprep.subr.mxu0 0.0
        %651 = vmatpush2.msra.mxu0 0.0
        %652 = vmatprep.mubr.f32.mxu0 0.0
        %653 = vmatmul.mubr.f32.gmra.mxu0 %v586
        %v654 = vpop.f32.mrf.mxu0
        %v655 = vadd.f32 0.0, %v654
        %v656 = vpop.f32.mrf.mxu0
        %657 = vdwg.mxu0
        %v658 = vsel %vm369, %v439, -inf
        %659 = vmax.xlane.f32.xlu0 %v658
        %v660 = vpop.xlane.xlu0 %659
        %v661 = vsel %vm369, %v511, -inf
        %662 = vmax.xlane.f32.xlu0 %v661
        %v663 = vpop.xlane.xlu0 %662
        %v664 = vsel %vm369, %v583, -inf
        %665 = vmax.xlane.f32.xlu0 %v664
        %v666 = vpop.xlane.xlu0 %665
        %v667 = vsel %vm369, %v655, -inf
        %668 = vmax.xlane.f32.xlu0 %v667
        %v669 = vpop.xlane.xlu0 %668
        %v670 = vsub.f32 %v439, %v660
        %v671 = vsub.f32 %v511, %v663
        %v672 = vsub.f32 %v583, %v666
        %v673 = vsub.f32 %v655, %v669
        %v674 = vmul.f32 %v670, 1.442695
        %v675 = vpow.pop %v674
        %v676 = vmul.f32 %v671, 1.442695
        %v677 = vpow.pop %v676
        %v678 = vmul.f32 %v672, 1.442695
        %v679 = vpow.pop %v678
        %v680 = vmul.f32 %v673, 1.442695
        %v681 = vpow.pop %v680
        %v682 = vsel %vm369, %v675, 0.0
        %683 = vadd.xlane.f32.xlu0 %v682
        %v684 = vpop.xlane.xlu0 %683
        %v685 = vsel %vm369, %v677, 0.0
        %686 = vadd.xlane.f32.xlu0 %v685
        %v687 = vpop.xlane.xlu0 %686
        %v688 = vsel %vm369, %v679, 0.0
        %689 = vadd.xlane.f32.xlu0 %v688
        %v690 = vpop.xlane.xlu0 %689
        %v691 = vsel %vm369, %v681, 0.0
        %692 = vadd.xlane.f32.xlu0 %v691
        %v693 = vpop.xlane.xlu0 %692
        %v694 = vrcp.pop %v684
        %v695 = vrcp.pop %v687
        %v696 = vrcp.pop %v690
        %v697 = vrcp.pop %v693
        %v698 = vmul.f32 %v675, %v694
        %v699 = vmul.f32 %v677, %v695
        %v700 = vmul.f32 %v679, %v696
        %v701 = vmul.f32 %v681, %v697
        %v703 = vsel %vm369, %v698, 0
        %v706 = vsel %vm369, %v351, 0
        %708 = vmatprep.subr.mxu0 0.0
        %709 = vmatpush1.xpose.msra.mxu0 0.0
        %710 = vmatprep.subr.mxu0 0.0
        %711 = vmatpush1.xpose.msra.mxu0 0.0
        %712 = vmatprep.subr.mxu0 0.0
        %713 = vmatpush1.xpose.msra.mxu0 0.0
        %714 = vmatprep.subr.mxu0 0.0
        %715 = vmatpush1.xpose.msra.mxu0 0.0
        %716 = vmatprep.subr.mxu0 0.0
        %717 = vmatpush1.xpose.msra.mxu0 0.0
        %718 = vmatprep.subr.mxu0 0.0
        %719 = vmatpush1.xpose.msra.mxu0 0.0
        %720 = vmatprep.subr.mxu0 0.0
        %721 = vmatpush1.xpose.msra.mxu0 0.0
        %722 = vmatprep.subr.mxu0 0.0
        %723 = vmatpush1.xpose.msra.mxu0 0.0
        %724 = vmatprep.subr.mxu0 0.0
        %725 = vmatpush1.xpose.msra.mxu0 0.0
        %726 = vmatprep.subr.mxu0 0.0
        %727 = vmatpush1.xpose.msra.mxu0 0.0
        %728 = vmatprep.subr.mxu0 0.0
        %729 = vmatpush1.xpose.msra.mxu0 0.0
        %730 = vmatprep.subr.mxu0 0.0
        %731 = vmatpush1.xpose.msra.mxu0 0.0
        %732 = vmatprep.subr.mxu0 0.0
        %733 = vmatpush1.xpose.msra.mxu0 0.0
        %734 = vmatprep.subr.mxu0 0.0
        %735 = vmatpush1.xpose.msra.mxu0 0.0
        %736 = vmatprep.subr.mxu0 0.0
        %737 = vmatpush1.xpose.msra.mxu0 0.0
        %738 = vmatprep.subr.mxu0 0.0
        %739 = vmatpush1.xpose.msra.mxu0 %v706
        %740 = vmatprep.subr.mxu0 0.0
        %741 = vmatpush2.xpose.msra.mxu0 0.0
        %742 = vmatprep.subr.mxu0 0.0
        %743 = vmatpush2.xpose.msra.mxu0 0.0
        %744 = vmatprep.subr.mxu0 0.0
        %745 = vmatpush2.xpose.msra.mxu0 0.0
        %746 = vmatprep.subr.mxu0 0.0
        %747 = vmatpush2.xpose.msra.mxu0 0.0
        %748 = vmatprep.subr.mxu0 0.0
        %749 = vmatpush2.xpose.msra.mxu0 0.0
        %750 = vmatprep.subr.mxu0 0.0
        %751 = vmatpush2.xpose.msra.mxu0 0.0
        %752 = vmatprep.subr.mxu0 0.0
        %753 = vmatpush2.xpose.msra.mxu0 0.0
        %754 = vmatprep.subr.mxu0 0.0
        %755 = vmatpush2.xpose.msra.mxu0 0.0
        %756 = vmatprep.subr.mxu0 0.0
        %757 = vmatpush2.xpose.msra.mxu0 0.0
        %758 = vmatprep.subr.mxu0 0.0
        %759 = vmatpush2.xpose.msra.mxu0 0.0
        %760 = vmatprep.subr.mxu0 0.0
        %761 = vmatpush2.xpose.msra.mxu0 0.0
        %762 = vmatprep.subr.mxu0 0.0
        %763 = vmatpush2.xpose.msra.mxu0 0.0
        %764 = vmatprep.subr.mxu0 0.0
        %765 = vmatpush2.xpose.msra.mxu0 0.0
        %766 = vmatprep.subr.mxu0 0.0
        %767 = vmatpush2.xpose.msra.mxu0 0.0
        %768 = vmatprep.subr.mxu0 0.0
        %769 = vmatpush2.xpose.msra.mxu0 0.0
        %770 = vmatprep.subr.mxu0 0.0
        %771 = vmatpush2.xpose.msra.mxu0 0.0
        %772 = vmatprep.mubr.f32.mxu0 0.0
        %773 = vmatmul.mubr.f32.gmra.mxu0 %v703
        %v774 = vpop.f32.mrf.mxu0
        %v775 = vadd.f32 0.0, %v774
        %v776 = vpop.f32.mrf.mxu0
        %777 = vdwg.mxu0
        %v779 = vsel %vm369, %v699, 0
        %v782 = vsel %vm369, %v352, 0
        %784 = vmatprep.subr.mxu0 0.0
        %785 = vmatpush1.xpose.msra.mxu0 0.0
        %786 = vmatprep.subr.mxu0 0.0
        %787 = vmatpush1.xpose.msra.mxu0 0.0
        %788 = vmatprep.subr.mxu0 0.0
        %789 = vmatpush1.xpose.msra.mxu0 0.0
        %790 = vmatprep.subr.mxu0 0.0
        %791 = vmatpush1.xpose.msra.mxu0 0.0
        %792 = vmatprep.subr.mxu0 0.0
        %793 = vmatpush1.xpose.msra.mxu0 0.0
        %794 = vmatprep.subr.mxu0 0.0
        %795 = vmatpush1.xpose.msra.mxu0 0.0
        %796 = vmatprep.subr.mxu0 0.0
        %797 = vmatpush1.xpose.msra.mxu0 0.0
        %798 = vmatprep.subr.mxu0 0.0
        %799 = vmatpush1.xpose.msra.mxu0 0.0
        %800 = vmatprep.subr.mxu0 0.0
        %801 = vmatpush1.xpose.msra.mxu0 0.0
        %802 = vmatprep.subr.mxu0 0.0
        %803 = vmatpush1.xpose.msra.mxu0 0.0
        %804 = vmatprep.subr.mxu0 0.0
        %805 = vmatpush1.xpose.msra.mxu0 0.0
        %806 = vmatprep.subr.mxu0 0.0
        %807 = vmatpush1.xpose.msra.mxu0 0.0
        %808 = vmatprep.subr.mxu0 0.0
        %809 = vmatpush1.xpose.msra.mxu0 0.0
        %810 = vmatprep.subr.mxu0 0.0
        %811 = vmatpush1.xpose.msra.mxu0 0.0
        %812 = vmatprep.subr.mxu0 0.0
        %813 = vmatpush1.xpose.msra.mxu0 0.0
        %814 = vmatprep.subr.mxu0 0.0
        %815 = vmatpush1.xpose.msra.mxu0 %v782
        %816 = vmatprep.subr.mxu0 0.0
        %817 = vmatpush2.xpose.msra.mxu0 0.0
        %818 = vmatprep.subr.mxu0 0.0
        %819 = vmatpush2.xpose.msra.mxu0 0.0
        %820 = vmatprep.subr.mxu0 0.0
        %821 = vmatpush2.xpose.msra.mxu0 0.0
        %822 = vmatprep.subr.mxu0 0.0
        %823 = vmatpush2.xpose.msra.mxu0 0.0
        %824 = vmatprep.subr.mxu0 0.0
        %825 = vmatpush2.xpose.msra.mxu0 0.0
        %826 = vmatprep.subr.mxu0 0.0
        %827 = vmatpush2.xpose.msra.mxu0 0.0
        %828 = vmatprep.subr.mxu0 0.0
        %829 = vmatpush2.xpose.msra.mxu0 0.0
        %830 = vmatprep.subr.mxu0 0.0
        %831 = vmatpush2.xpose.msra.mxu0 0.0
        %832 = vmatprep.subr.mxu0 0.0
        %833 = vmatpush2.xpose.msra.mxu0 0.0
        %834 = vmatprep.subr.mxu0 0.0
        %835 = vmatpush2.xpose.msra.mxu0 0.0
        %836 = vmatprep.subr.mxu0 0.0
        %837 = vmatpush2.xpose.msra.mxu0 0.0
        %838 = vmatprep.subr.mxu0 0.0
        %839 = vmatpush2.xpose.msra.mxu0 0.0
        %840 = vmatprep.subr.mxu0 0.0
        %841 = vmatpush2.xpose.msra.mxu0 0.0
        %842 = vmatprep.subr.mxu0 0.0
        %843 = vmatpush2.xpose.msra.mxu0 0.0
        %844 = vmatprep.subr.mxu0 0.0
        %845 = vmatpush2.xpose.msra.mxu0 0.0
        %846 = vmatprep.subr.mxu0 0.0
        %847 = vmatpush2.xpose.msra.mxu0 0.0
        %848 = vmatprep.mubr.f32.mxu0 0.0
        %849 = vmatmul.mubr.f32.gmra.mxu0 %v779
        %v850 = vpop.f32.mrf.mxu0
        %v851 = vadd.f32 0.0, %v850
        %v852 = vpop.f32.mrf.mxu0
        %853 = vdwg.mxu0
        %v855 = vsel %vm369, %v700, 0
        %v858 = vsel %vm369, %v353, 0
        %860 = vmatprep.subr.mxu0 0.0
        %861 = vmatpush1.xpose.msra.mxu0 0.0
        %862 = vmatprep.subr.mxu0 0.0
        %863 = vmatpush1.xpose.msra.mxu0 0.0
        %864 = vmatprep.subr.mxu0 0.0
        %865 = vmatpush1.xpose.msra.mxu0 0.0
        %866 = vmatprep.subr.mxu0 0.0
        %867 = vmatpush1.xpose.msra.mxu0 0.0
        %868 = vmatprep.subr.mxu0 0.0
        %869 = vmatpush1.xpose.msra.mxu0 0.0
        %870 = vmatprep.subr.mxu0 0.0
        %871 = vmatpush1.xpose.msra.mxu0 0.0
        %872 = vmatprep.subr.mxu0 0.0
        %873 = vmatpush1.xpose.msra.mxu0 0.0
        %874 = vmatprep.subr.mxu0 0.0
        %875 = vmatpush1.xpose.msra.mxu0 0.0
        %876 = vmatprep.subr.mxu0 0.0
        %877 = vmatpush1.xpose.msra.mxu0 0.0
        %878 = vmatprep.subr.mxu0 0.0
        %879 = vmatpush1.xpose.msra.mxu0 0.0
        %880 = vmatprep.subr.mxu0 0.0
        %881 = vmatpush1.xpose.msra.mxu0 0.0
        %882 = vmatprep.subr.mxu0 0.0
        %883 = vmatpush1.xpose.msra.mxu0 0.0
        %884 = vmatprep.subr.mxu0 0.0
        %885 = vmatpush1.xpose.msra.mxu0 0.0
        %886 = vmatprep.subr.mxu0 0.0
        %887 = vmatpush1.xpose.msra.mxu0 0.0
        %888 = vmatprep.subr.mxu0 0.0
        %889 = vmatpush1.xpose.msra.mxu0 0.0
        %890 = vmatprep.subr.mxu0 0.0
        %891 = vmatpush1.xpose.msra.mxu0 %v858
        %892 = vmatprep.subr.mxu0 0.0
        %893 = vmatpush2.xpose.msra.mxu0 0.0
        %894 = vmatprep.subr.mxu0 0.0
        %895 = vmatpush2.xpose.msra.mxu0 0.0
        %896 = vmatprep.subr.mxu0 0.0
        %897 = vmatpush2.xpose.msra.mxu0 0.0
        %898 = vmatprep.subr.mxu0 0.0
        %899 = vmatpush2.xpose.msra.mxu0 0.0
        %900 = vmatprep.subr.mxu0 0.0
        %901 = vmatpush2.xpose.msra.mxu0 0.0
        %902 = vmatprep.subr.mxu0 0.0
        %903 = vmatpush2.xpose.msra.mxu0 0.0
        %904 = vmatprep.subr.mxu0 0.0
        %905 = vmatpush2.xpose.msra.mxu0 0.0
        %906 = vmatprep.subr.mxu0 0.0
        %907 = vmatpush2.xpose.msra.mxu0 0.0
        %908 = vmatprep.subr.mxu0 0.0
        %909 = vmatpush2.xpose.msra.mxu0 0.0
        %910 = vmatprep.subr.mxu0 0.0
        %911 = vmatpush2.xpose.msra.mxu0 0.0
        %912 = vmatprep.subr.mxu0 0.0
        %913 = vmatpush2.xpose.msra.mxu0 0.0
        %914 = vmatprep.subr.mxu0 0.0
        %915 = vmatpush2.xpose.msra.mxu0 0.0
        %916 = vmatprep.subr.mxu0 0.0
        %917 = vmatpush2.xpose.msra.mxu0 0.0
        %918 = vmatprep.subr.mxu0 0.0
        %919 = vmatpush2.xpose.msra.mxu0 0.0
        %920 = vmatprep.subr.mxu0 0.0
        %921 = vmatpush2.xpose.msra.mxu0 0.0
        %922 = vmatprep.subr.mxu0 0.0
        %923 = vmatpush2.xpose.msra.mxu0 0.0
        %924 = vmatprep.mubr.f32.mxu0 0.0
        %925 = vmatmul.mubr.f32.gmra.mxu0 %v855
        %v926 = vpop.f32.mrf.mxu0
        %v927 = vadd.f32 0.0, %v926
        %v928 = vpop.f32.mrf.mxu0
        %929 = vdwg.mxu0
        %v931 = vsel %vm369, %v701, 0
        %v934 = vsel %vm369, %v354, 0
        %936 = vmatprep.subr.mxu0 0.0
        %937 = vmatpush1.xpose.msra.mxu0 0.0
        %938 = vmatprep.subr.mxu0 0.0
        %939 = vmatpush1.xpose.msra.mxu0 0.0
        %940 = vmatprep.subr.mxu0 0.0
        %941 = vmatpush1.xpose.msra.mxu0 0.0
        %942 = vmatprep.subr.mxu0 0.0
        %943 = vmatpush1.xpose.msra.mxu0 0.0
        %944 = vmatprep.subr.mxu0 0.0
        %945 = vmatpush1.xpose.msra.mxu0 0.0
        %946 = vmatprep.subr.mxu0 0.0
        %947 = vmatpush1.xpose.msra.mxu0 0.0
        %948 = vmatprep.subr.mxu0 0.0
        %949 = vmatpush1.xpose.msra.mxu0 0.0
        %950 = vmatprep.subr.mxu0 0.0
        %951 = vmatpush1.xpose.msra.mxu0 0.0
        %952 = vmatprep.subr.mxu0 0.0
        %953 = vmatpush1.xpose.msra.mxu0 0.0
        %954 = vmatprep.subr.mxu0 0.0
        %955 = vmatpush1.xpose.msra.mxu0 0.0
        %956 = vmatprep.subr.mxu0 0.0
        %957 = vmatpush1.xpose.msra.mxu0 0.0
        %958 = vmatprep.subr.mxu0 0.0
        %959 = vmatpush1.xpose.msra.mxu0 0.0
        %960 = vmatprep.subr.mxu0 0.0
        %961 = vmatpush1.xpose.msra.mxu0 0.0
        %962 = vmatprep.subr.mxu0 0.0
        %963 = vmatpush1.xpose.msra.mxu0 0.0
        %964 = vmatprep.subr.mxu0 0.0
        %965 = vmatpush1.xpose.msra.mxu0 0.0
        %966 = vmatprep.subr.mxu0 0.0
        %967 = vmatpush1.xpose.msra.mxu0 %v934
        %968 = vmatprep.subr.mxu0 0.0
        %969 = vmatpush2.xpose.msra.mxu0 0.0
        %970 = vmatprep.subr.mxu0 0.0
        %971 = vmatpush2.xpose.msra.mxu0 0.0
        %972 = vmatprep.subr.mxu0 0.0
        %973 = vmatpush2.xpose.msra.mxu0 0.0
        %974 = vmatprep.subr.mxu0 0.0
        %975 = vmatpush2.xpose.msra.mxu0 0.0
        %976 = vmatprep.subr.mxu0 0.0
        %977 = vmatpush2.xpose.msra.mxu0 0.0
        %978 = vmatprep.subr.mxu0 0.0
        %979 = vmatpush2.xpose.msra.mxu0 0.0
        %980 = vmatprep.subr.mxu0 0.0
        %981 = vmatpush2.xpose.msra.mxu0 0.0
        %982 = vmatprep.subr.mxu0 0.0
        %983 = vmatpush2.xpose.msra.mxu0 0.0
        %984 = vmatprep.subr.mxu0 0.0
        %985 = vmatpush2.xpose.msra.mxu0 0.0
        %986 = vmatprep.subr.mxu0 0.0
        %987 = vmatpush2.xpose.msra.mxu0 0.0
        %988 = vmatprep.subr.mxu0 0.0
        %989 = vmatpush2.xpose.msra.mxu0 0.0
        %990 = vmatprep.subr.mxu0 0.0
        %991 = vmatpush2.xpose.msra.mxu0 0.0
        %992 = vmatprep.subr.mxu0 0.0
        %993 = vmatpush2.xpose.msra.mxu0 0.0
        %994 = vmatprep.subr.mxu0 0.0
        %995 = vmatpush2.xpose.msra.mxu0 0.0
        %996 = vmatprep.subr.mxu0 0.0
        %997 = vmatpush2.xpose.msra.mxu0 0.0
        %998 = vmatprep.subr.mxu0 0.0
        %999 = vmatpush2.xpose.msra.mxu0 0.0
        %1000 = vmatprep.mubr.f32.mxu0 0.0
        %1001 = vmatmul.mubr.f32.gmra.mxu0 %v931
        %v1002 = vpop.f32.mrf.mxu0
        %v1003 = vadd.f32 0.0, %v1002
        %v1004 = vpop.f32.mrf.mxu0
        %1005 = vdwg.mxu0
        %v1007 = vsel %vm369, %v775, 0
        %1009 = vmatprep.subr.mxu0 0.0
        %1010 = vmatpush1.msra.mxu0 0.0
        %1011 = vmatprep.subr.mxu0 0.0
        %1012 = vmatpush1.msra.mxu0 0.0
        %1013 = vmatprep.subr.mxu0 0.0
        %1014 = vmatpush1.msra.mxu0 0.0
        %1015 = vmatprep.subr.mxu0 0.0
        %1016 = vmatpush1.msra.mxu0 0.0
        %1017 = vmatprep.subr.mxu0 0.0
        %1018 = vmatpush1.msra.mxu0 0.0
        %1019 = vmatprep.subr.mxu0 0.0
        %1020 = vmatpush1.msra.mxu0 0.0
        %1021 = vmatprep.subr.mxu0 0.0
        %1022 = vmatpush1.msra.mxu0 0.0
        %1023 = vmatprep.subr.mxu0 0.0
        %1024 = vmatpush1.msra.mxu0 0.0
        %1025 = vmatprep.subr.mxu0 0.0
        %1026 = vmatpush1.msra.mxu0 0.0
        %1027 = vmatprep.subr.mxu0 0.0
        %1028 = vmatpush1.msra.mxu0 0.0
        %1029 = vmatprep.subr.mxu0 0.0
        %1030 = vmatpush1.msra.mxu0 0.0
        %1031 = vmatprep.subr.mxu0 0.0
        %1032 = vmatpush1.msra.mxu0 0.0
        %1033 = vmatprep.subr.mxu0 0.0
        %1034 = vmatpush1.msra.mxu0 0.0
        %1035 = vmatprep.subr.mxu0 0.0
        %1036 = vmatpush1.msra.mxu0 0.0
        %1037 = vmatprep.subr.mxu0 0.0
        %1038 = vmatpush1.msra.mxu0 0.0
        %1039 = vmatprep.subr.mxu0 0.0
        %1040 = vmatpush1.msra.mxu0 %v322
        %1041 = vmatprep.subr.mxu0 0.0
        %1042 = vmatpush2.msra.mxu0 0.0
        %1043 = vmatprep.subr.mxu0 0.0
        %1044 = vmatpush2.msra.mxu0 0.0
        %1045 = vmatprep.subr.mxu0 0.0
        %1046 = vmatpush2.msra.mxu0 0.0
        %1047 = vmatprep.subr.mxu0 0.0
        %1048 = vmatpush2.msra.mxu0 0.0
        %1049 = vmatprep.subr.mxu0 0.0
        %1050 = vmatpush2.msra.mxu0 0.0
        %1051 = vmatprep.subr.mxu0 0.0
        %1052 = vmatpush2.msra.mxu0 0.0
        %1053 = vmatprep.subr.mxu0 0.0
        %1054 = vmatpush2.msra.mxu0 0.0
        %1055 = vmatprep.subr.mxu0 0.0
        %1056 = vmatpush2.msra.mxu0 0.0
        %1057 = vmatprep.subr.mxu0 0.0
        %1058 = vmatpush2.msra.mxu0 0.0
        %1059 = vmatprep.subr.mxu0 0.0
        %1060 = vmatpush2.msra.mxu0 0.0
        %1061 = vmatprep.subr.mxu0 0.0
        %1062 = vmatpush2.msra.mxu0 0.0
        %1063 = vmatprep.subr.mxu0 0.0
        %1064 = vmatpush2.msra.mxu0 0.0
        %1065 = vmatprep.subr.mxu0 0.0
        %1066 = vmatpush2.msra.mxu0 0.0
        %1067 = vmatprep.subr.mxu0 0.0
        %1068 = vmatpush2.msra.mxu0 0.0
        %1069 = vmatprep.subr.mxu0 0.0
        %1070 = vmatpush2.msra.mxu0 0.0
        %1071 = vmatprep.subr.mxu0 0.0
        %1072 = vmatpush2.msra.mxu0 0.0
        %1073 = vmatprep.mubr.f32.mxu0 0.0
        %1074 = vmatmul.mubr.f32.gmra.mxu0 %v1007
        %v1075 = vpop.f32.mrf.mxu0
        %v1076 = vadd.f32 0.0, %v1075
        %v1077 = vpop.f32.mrf.mxu0
        %1078 = vdwg.mxu0
        %v1080 = vsel %vm369, %v851, 0
        %1082 = vmatprep.subr.mxu0 0.0
        %1083 = vmatpush1.msra.mxu0 0.0
        %1084 = vmatprep.subr.mxu0 0.0
        %1085 = vmatpush1.msra.mxu0 0.0
        %1086 = vmatprep.subr.mxu0 0.0
        %1087 = vmatpush1.msra.mxu0 0.0
        %1088 = vmatprep.subr.mxu0 0.0
        %1089 = vmatpush1.msra.mxu0 0.0
        %1090 = vmatprep.subr.mxu0 0.0
        %1091 = vmatpush1.msra.mxu0 0.0
        %1092 = vmatprep.subr.mxu0 0.0
        %1093 = vmatpush1.msra.mxu0 0.0
        %1094 = vmatprep.subr.mxu0 0.0
        %1095 = vmatpush1.msra.mxu0 0.0
        %1096 = vmatprep.subr.mxu0 0.0
        %1097 = vmatpush1.msra.mxu0 0.0
        %1098 = vmatprep.subr.mxu0 0.0
        %1099 = vmatpush1.msra.mxu0 0.0
        %1100 = vmatprep.subr.mxu0 0.0
        %1101 = vmatpush1.msra.mxu0 0.0
        %1102 = vmatprep.subr.mxu0 0.0
        %1103 = vmatpush1.msra.mxu0 0.0
        %1104 = vmatprep.subr.mxu0 0.0
        %1105 = vmatpush1.msra.mxu0 0.0
        %1106 = vmatprep.subr.mxu0 0.0
        %1107 = vmatpush1.msra.mxu0 0.0
        %1108 = vmatprep.subr.mxu0 0.0
        %1109 = vmatpush1.msra.mxu0 0.0
        %1110 = vmatprep.subr.mxu0 0.0
        %1111 = vmatpush1.msra.mxu0 0.0
        %1112 = vmatprep.subr.mxu0 0.0
        %1113 = vmatpush1.msra.mxu0 %v323
        %1114 = vmatprep.subr.mxu0 0.0
        %1115 = vmatpush2.msra.mxu0 0.0
        %1116 = vmatprep.subr.mxu0 0.0
        %1117 = vmatpush2.msra.mxu0 0.0
        %1118 = vmatprep.subr.mxu0 0.0
        %1119 = vmatpush2.msra.mxu0 0.0
        %1120 = vmatprep.subr.mxu0 0.0
        %1121 = vmatpush2.msra.mxu0 0.0
        %1122 = vmatprep.subr.mxu0 0.0
        %1123 = vmatpush2.msra.mxu0 0.0
        %1124 = vmatprep.subr.mxu0 0.0
        %1125 = vmatpush2.msra.mxu0 0.0
        %1126 = vmatprep.subr.mxu0 0.0
        %1127 = vmatpush2.msra.mxu0 0.0
        %1128 = vmatprep.subr.mxu0 0.0
        %1129 = vmatpush2.msra.mxu0 0.0
        %1130 = vmatprep.subr.mxu0 0.0
        %1131 = vmatpush2.msra.mxu0 0.0
        %1132 = vmatprep.subr.mxu0 0.0
        %1133 = vmatpush2.msra.mxu0 0.0
        %1134 = vmatprep.subr.mxu0 0.0
        %1135 = vmatpush2.msra.mxu0 0.0
        %1136 = vmatprep.subr.mxu0 0.0
        %1137 = vmatpush2.msra.mxu0 0.0
        %1138 = vmatprep.subr.mxu0 0.0
        %1139 = vmatpush2.msra.mxu0 0.0
        %1140 = vmatprep.subr.mxu0 0.0
        %1141 = vmatpush2.msra.mxu0 0.0
        %1142 = vmatprep.subr.mxu0 0.0
        %1143 = vmatpush2.msra.mxu0 0.0
        %1144 = vmatprep.subr.mxu0 0.0
        %1145 = vmatpush2.msra.mxu0 0.0
        %1146 = vmatprep.mubr.f32.mxu0 0.0
        %1147 = vmatmul.mubr.f32.gmra.mxu0 %v1080
        %v1148 = vpop.f32.mrf.mxu0
        %v1149 = vadd.f32 0.0, %v1148
        %v1150 = vpop.f32.mrf.mxu0
        %1151 = vdwg.mxu0
        %v1153 = vsel %vm369, %v927, 0
        %1155 = vmatprep.subr.mxu0 0.0
        %1156 = vmatpush1.msra.mxu0 0.0
        %1157 = vmatprep.subr.mxu0 0.0
        %1158 = vmatpush1.msra.mxu0 0.0
        %1159 = vmatprep.subr.mxu0 0.0
        %1160 = vmatpush1.msra.mxu0 0.0
        %1161 = vmatprep.subr.mxu0 0.0
        %1162 = vmatpush1.msra.mxu0 0.0
        %1163 = vmatprep.subr.mxu0 0.0
        %1164 = vmatpush1.msra.mxu0 0.0
        %1165 = vmatprep.subr.mxu0 0.0
        %1166 = vmatpush1.msra.mxu0 0.0
        %1167 = vmatprep.subr.mxu0 0.0
        %1168 = vmatpush1.msra.mxu0 0.0
        %1169 = vmatprep.subr.mxu0 0.0
        %1170 = vmatpush1.msra.mxu0 0.0
        %1171 = vmatprep.subr.mxu0 0.0
        %1172 = vmatpush1.msra.mxu0 0.0
        %1173 = vmatprep.subr.mxu0 0.0
        %1174 = vmatpush1.msra.mxu0 0.0
        %1175 = vmatprep.subr.mxu0 0.0
        %1176 = vmatpush1.msra.mxu0 0.0
        %1177 = vmatprep.subr.mxu0 0.0
        %1178 = vmatpush1.msra.mxu0 0.0
        %1179 = vmatprep.subr.mxu0 0.0
        %1180 = vmatpush1.msra.mxu0 0.0
        %1181 = vmatprep.subr.mxu0 0.0
        %1182 = vmatpush1.msra.mxu0 0.0
        %1183 = vmatprep.subr.mxu0 0.0
        %1184 = vmatpush1.msra.mxu0 0.0
        %1185 = vmatprep.subr.mxu0 0.0
        %1186 = vmatpush1.msra.mxu0 %v324
        %1187 = vmatprep.subr.mxu0 0.0
        %1188 = vmatpush2.msra.mxu0 0.0
        %1189 = vmatprep.subr.mxu0 0.0
        %1190 = vmatpush2.msra.mxu0 0.0
        %1191 = vmatprep.subr.mxu0 0.0
        %1192 = vmatpush2.msra.mxu0 0.0
        %1193 = vmatprep.subr.mxu0 0.0
        %1194 = vmatpush2.msra.mxu0 0.0
        %1195 = vmatprep.subr.mxu0 0.0
        %1196 = vmatpush2.msra.mxu0 0.0
        %1197 = vmatprep.subr.mxu0 0.0
        %1198 = vmatpush2.msra.mxu0 0.0
        %1199 = vmatprep.subr.mxu0 0.0
        %1200 = vmatpush2.msra.mxu0 0.0
        %1201 = vmatprep.subr.mxu0 0.0
        %1202 = vmatpush2.msra.mxu0 0.0
        %1203 = vmatprep.subr.mxu0 0.0
        %1204 = vmatpush2.msra.mxu0 0.0
        %1205 = vmatprep.subr.mxu0 0.0
        %1206 = vmatpush2.msra.mxu0 0.0
        %1207 = vmatprep.subr.mxu0 0.0
        %1208 = vmatpush2.msra.mxu0 0.0
        %1209 = vmatprep.subr.mxu0 0.0
        %1210 = vmatpush2.msra.mxu0 0.0
        %1211 = vmatprep.subr.mxu0 0.0
        %1212 = vmatpush2.msra.mxu0 0.0
        %1213 = vmatprep.subr.mxu0 0.0
        %1214 = vmatpush2.msra.mxu0 0.0
        %1215 = vmatprep.subr.mxu0 0.0
        %1216 = vmatpush2.msra.mxu0 0.0
        %1217 = vmatprep.subr.mxu0 0.0
        %1218 = vmatpush2.msra.mxu0 0.0
        %1219 = vmatprep.mubr.f32.mxu0 0.0
        %1220 = vmatmul.mubr.f32.gmra.mxu0 %v1153
        %v1221 = vpop.f32.mrf.mxu0
        %v1222 = vadd.f32 0.0, %v1221
        %v1223 = vpop.f32.mrf.mxu0
        %1224 = vdwg.mxu0
        %v1226 = vsel %vm369, %v1003, 0
        %1228 = vmatprep.subr.mxu0 0.0
        %1229 = vmatpush1.msra.mxu0 0.0
        %1230 = vmatprep.subr.mxu0 0.0
        %1231 = vmatpush1.msra.mxu0 0.0
        %1232 = vmatprep.subr.mxu0 0.0
        %1233 = vmatpush1.msra.mxu0 0.0
        %1234 = vmatprep.subr.mxu0 0.0
        %1235 = vmatpush1.msra.mxu0 0.0
        %1236 = vmatprep.subr.mxu0 0.0
        %1237 = vmatpush1.msra.mxu0 0.0
        %1238 = vmatprep.subr.mxu0 0.0
        %1239 = vmatpush1.msra.mxu0 0.0
        %1240 = vmatprep.subr.mxu0 0.0
        %1241 = vmatpush1.msra.mxu0 0.0
        %1242 = vmatprep.subr.mxu0 0.0
        %1243 = vmatpush1.msra.mxu0 0.0
        %1244 = vmatprep.subr.mxu0 0.0
        %1245 = vmatpush1.msra.mxu0 0.0
        %1246 = vmatprep.subr.mxu0 0.0
        %1247 = vmatpush1.msra.mxu0 0.0
        %1248 = vmatprep.subr.mxu0 0.0
        %1249 = vmatpush1.msra.mxu0 0.0
        %1250 = vmatprep.subr.mxu0 0.0
        %1251 = vmatpush1.msra.mxu0 0.0
        %1252 = vmatprep.subr.mxu0 0.0
        %1253 = vmatpush1.msra.mxu0 0.0
        %1254 = vmatprep.subr.mxu0 0.0
        %1255 = vmatpush1.msra.mxu0 0.0
        %1256 = vmatprep.subr.mxu0 0.0
        %1257 = vmatpush1.msra.mxu0 0.0
        %1258 = vmatprep.subr.mxu0 0.0
        %1259 = vmatpush1.msra.mxu0 %v325
        %1260 = vmatprep.subr.mxu0 0.0
        %1261 = vmatpush2.msra.mxu0 0.0
        %1262 = vmatprep.subr.mxu0 0.0
        %1263 = vmatpush2.msra.mxu0 0.0
        %1264 = vmatprep.subr.mxu0 0.0
        %1265 = vmatpush2.msra.mxu0 0.0
        %1266 = vmatprep.subr.mxu0 0.0
        %1267 = vmatpush2.msra.mxu0 0.0
        %1268 = vmatprep.subr.mxu0 0.0
        %1269 = vmatpush2.msra.mxu0 0.0
        %1270 = vmatprep.subr.mxu0 0.0
        %1271 = vmatpush2.msra.mxu0 0.0
        %1272 = vmatprep.subr.mxu0 0.0
        %1273 = vmatpush2.msra.mxu0 0.0
        %1274 = vmatprep.subr.mxu0 0.0
        %1275 = vmatpush2.msra.mxu0 0.0
        %1276 = vmatprep.subr.mxu0 0.0
        %1277 = vmatpush2.msra.mxu0 0.0
        %1278 = vmatprep.subr.mxu0 0.0
        %1279 = vmatpush2.msra.mxu0 0.0
        %1280 = vmatprep.subr.mxu0 0.0
        %1281 = vmatpush2.msra.mxu0 0.0
        %1282 = vmatprep.subr.mxu0 0.0
        %1283 = vmatpush2.msra.mxu0 0.0
        %1284 = vmatprep.subr.mxu0 0.0
        %1285 = vmatpush2.msra.mxu0 0.0
        %1286 = vmatprep.subr.mxu0 0.0
        %1287 = vmatpush2.msra.mxu0 0.0
        %1288 = vmatprep.subr.mxu0 0.0
        %1289 = vmatpush2.msra.mxu0 0.0
        %1290 = vmatprep.subr.mxu0 0.0
        %1291 = vmatpush2.msra.mxu0 0.0
        %1292 = vmatprep.mubr.f32.mxu0 0.0
        %1293 = vmatmul.mubr.f32.gmra.mxu0 %v1226
        %v1294 = vpop.f32.mrf.mxu0
        %v1295 = vadd.f32 0.0, %v1294
        %v1296 = vpop.f32.mrf.mxu0
        %1297 = vdwg.mxu0
        %v1298 = vsel %vm248, %v1076, 0.0
        %v1299 = vsel %vm248, %v1149, 0.0
        %v1300 = vadd.f32 %v1298, %v1299
        %v1301 = vsel %vm248, %v1222, 0.0
        %v1302 = vadd.f32 %v1300, %v1301
        %v1303 = vsel %vm248, %v1295, 0.0
        %v1304 = vadd.f32 %v1302, %v1303
        %v1305 = vlaneseq
        %v1306 = vshrl.u32 %v1305, 7
        %v1307 = vsub.s32 0, %v1306
        %v1308 = vrot.slane %v326, %v1307
        %v1309 = vadd.f32 %v1304, %v1308
        %v1310 = vadd.f32 %v237, %v1309
        %v1311 = vld [vmem:[#allocation7 + $0x107] sm:$0x1]
        %v1312 = vld [vmem:[#allocation7 + $0x108] sm:$0x1]
        %v1313 = vsel %vm248, %v1310, 0.0
        %1314 = vadd.xlane.f32.xlu0 %v1313
        %v1315 = vpop.xlane.xlu0 %1314
        %v1316 = vrcp.pop 32.0
        %v1317 = vmul.f32 %v1315, %v1316
        %v1318 = vsub.f32 %v1310, %v1317
        %v1319 = vmul.f32 %v1318, %v1318
        %v1320 = vsel %vm248, %v1319, 0.0
        %1321 = vadd.xlane.f32.xlu0 %v1320
        %v1322 = vpop.xlane.xlu0 %1321
        %v1323 = vrcp.pop 31.0
        %v1324 = vmul.f32 %v1322, %v1323
        %v1325 = vrsqrt.pop %v1324
        %v1326 = vmul.f32 %v1324, %v1325
        %vm1327 = vcmp.eq.f32.partialorder %v1324, inf
        %v1328 = vsel %vm1327, %v1324, %v1326
        %vm1329 = vcmp.eq.f32.partialorder %v1324, 0.0
        %v1330 = vand.u32 %v1324, 2147483648
        %v1331 = vsel %vm1329, %v1330, %v1328
        %v1332 = vadd.f32 %v1331, 1e-12
        %v1333 = vrcp.pop %v1332
        %v1334 = vmul.f32 %v1318, %v1333
        %v1335 = vlaneseq
        %v1336 = vshrl.u32 %v1335, 7
        %v1337 = vsub.s32 0, %v1336
        %v1338 = vrot.slane %v1311, %v1337
        %v1339 = vmul.f32 %v1338, %v1334
        %v1340 = vlaneseq
        %v1341 = vshrl.u32 %v1340, 7
        %v1342 = vsub.s32 0, %v1341
        %v1343 = vrot.slane %v1312, %v1342
        %v1344 = vadd.f32 %v1339, %v1343
        %v1345 = vld [vmem:[#allocation7 + $0x40] sm:$0xff]
        %v1346 = vld [vmem:[#allocation7 + $0x48] sm:$0xff]
        %v1347 = vld [vmem:[#allocation7 + $0x50] sm:$0xff]
        %v1348 = vld [vmem:[#allocation7 + $0x58] sm:$0xff]
        %v1349 = vld [vmem:[#allocation7 + $0x102] sm:$0x1]
        %v1350 = vlaneseq
        %v1351 = vshrl.u32 %v1350, 7
        %v1352 = vsub.s32 0, %v1351
        %v1353 = vrot.slane %v1349, %v1352
        %v1355 = vsel %vm248, %v1344, 0
        %1357 = vmatprep.subr.mxu0 0.0
        %1358 = vmatpush1.msra.mxu0 0.0
        %1359 = vmatprep.subr.mxu0 0.0
        %1360 = vmatpush1.msra.mxu0 0.0
        %1361 = vmatprep.subr.mxu0 0.0
        %1362 = vmatpush1.msra.mxu0 0.0
        %1363 = vmatprep.subr.mxu0 0.0
        %1364 = vmatpush1.msra.mxu0 0.0
        %1365 = vmatprep.subr.mxu0 0.0
        %1366 = vmatpush1.msra.mxu0 0.0
        %1367 = vmatprep.subr.mxu0 0.0
        %1368 = vmatpush1.msra.mxu0 0.0
        %1369 = vmatprep.subr.mxu0 0.0
        %1370 = vmatpush1.msra.mxu0 0.0
        %1371 = vmatprep.subr.mxu0 0.0
        %1372 = vmatpush1.msra.mxu0 0.0
        %1373 = vmatprep.subr.mxu0 0.0
        %1374 = vmatpush1.msra.mxu0 0.0
        %1375 = vmatprep.subr.mxu0 0.0
        %1376 = vmatpush1.msra.mxu0 0.0
        %1377 = vmatprep.subr.mxu0 0.0
        %1378 = vmatpush1.msra.mxu0 0.0
        %1379 = vmatprep.subr.mxu0 0.0
        %1380 = vmatpush1.msra.mxu0 0.0
        %1381 = vmatprep.subr.mxu0 0.0
        %1382 = vmatpush1.msra.mxu0 %v1348
        %1383 = vmatprep.subr.mxu0 0.0
        %1384 = vmatpush1.msra.mxu0 %v1347
        %1385 = vmatprep.subr.mxu0 0.0
        %1386 = vmatpush1.msra.mxu0 %v1346
        %1387 = vmatprep.subr.mxu0 0.0
        %1388 = vmatpush1.msra.mxu0 %v1345
        %1389 = vmatprep.subr.mxu0 0.0
        %1390 = vmatpush2.msra.mxu0 0.0
        %1391 = vmatprep.subr.mxu0 0.0
        %1392 = vmatpush2.msra.mxu0 0.0
        %1393 = vmatprep.subr.mxu0 0.0
        %1394 = vmatpush2.msra.mxu0 0.0
        %1395 = vmatprep.subr.mxu0 0.0
        %1396 = vmatpush2.msra.mxu0 0.0
        %1397 = vmatprep.subr.mxu0 0.0
        %1398 = vmatpush2.msra.mxu0 0.0
        %1399 = vmatprep.subr.mxu0 0.0
        %1400 = vmatpush2.msra.mxu0 0.0
        %1401 = vmatprep.subr.mxu0 0.0
        %1402 = vmatpush2.msra.mxu0 0.0
        %1403 = vmatprep.subr.mxu0 0.0
        %1404 = vmatpush2.msra.mxu0 0.0
        %1405 = vmatprep.subr.mxu0 0.0
        %1406 = vmatpush2.msra.mxu0 0.0
        %1407 = vmatprep.subr.mxu0 0.0
        %1408 = vmatpush2.msra.mxu0 0.0
        %1409 = vmatprep.subr.mxu0 0.0
        %1410 = vmatpush2.msra.mxu0 0.0
        %1411 = vmatprep.subr.mxu0 0.0
        %1412 = vmatpush2.msra.mxu0 0.0
        %1413 = vmatprep.subr.mxu0 0.0
        %1414 = vmatpush2.msra.mxu0 0.0
        %1415 = vmatprep.subr.mxu0 0.0
        %1416 = vmatpush2.msra.mxu0 0.0
        %1417 = vmatprep.subr.mxu0 0.0
        %1418 = vmatpush2.msra.mxu0 0.0
        %1419 = vmatprep.subr.mxu0 0.0
        %1420 = vmatpush2.msra.mxu0 0.0
        %1421 = vmatprep.mubr.f32.mxu0 0.0
        %1422 = vmatmul.mubr.f32.gmra.mxu0 %v1355
        %v1423 = vpop.f32.mrf.mxu0
        %v1424 = vadd.f32 %v1353, %v1423
        %v1425 = vpop.f32.mrf.mxu0
        %1426 = vdwg.mxu0
        %v1427 = vld [vmem:[#allocation7 + $0x60] sm:$0xff]
        %v1428 = vld [vmem:[#allocation7 + $0x68] sm:$0xff]
        %v1429 = vld [vmem:[#allocation7 + $0x70] sm:$0xff]
        %v1430 = vld [vmem:[#allocation7 + $0x78] sm:$0xff]
        %v1431 = vld [vmem:[#allocation7 + $0x103] sm:$0x1]
        %v1432 = vlaneseq
        %v1433 = vshrl.u32 %v1432, 7
        %v1434 = vsub.s32 0, %v1433
        %v1435 = vrot.slane %v1431, %v1434
        %v1437 = vsel %vm248, %v238, 0
        %1439 = vmatprep.subr.mxu0 0.0
        %1440 = vmatpush1.msra.mxu0 0.0
        %1441 = vmatprep.subr.mxu0 0.0
        %1442 = vmatpush1.msra.mxu0 0.0
        %1443 = vmatprep.subr.mxu0 0.0
        %1444 = vmatpush1.msra.mxu0 0.0
        %1445 = vmatprep.subr.mxu0 0.0
        %1446 = vmatpush1.msra.mxu0 0.0
        %1447 = vmatprep.subr.mxu0 0.0
        %1448 = vmatpush1.msra.mxu0 0.0
        %1449 = vmatprep.subr.mxu0 0.0
        %1450 = vmatpush1.msra.mxu0 0.0
        %1451 = vmatprep.subr.mxu0 0.0
        %1452 = vmatpush1.msra.mxu0 0.0
        %1453 = vmatprep.subr.mxu0 0.0
        %1454 = vmatpush1.msra.mxu0 0.0
        %1455 = vmatprep.subr.mxu0 0.0
        %1456 = vmatpush1.msra.mxu0 0.0
        %1457 = vmatprep.subr.mxu0 0.0
        %1458 = vmatpush1.msra.mxu0 0.0
        %1459 = vmatprep.subr.mxu0 0.0
        %1460 = vmatpush1.msra.mxu0 0.0
        %1461 = vmatprep.subr.mxu0 0.0
        %1462 = vmatpush1.msra.mxu0 0.0
        %1463 = vmatprep.subr.mxu0 0.0
        %1464 = vmatpush1.msra.mxu0 %v1430
        %1465 = vmatprep.subr.mxu0 0.0
        %1466 = vmatpush1.msra.mxu0 %v1429
        %1467 = vmatprep.subr.mxu0 0.0
        %1468 = vmatpush1.msra.mxu0 %v1428
        %1469 = vmatprep.subr.mxu0 0.0
        %1470 = vmatpush1.msra.mxu0 %v1427
        %1471 = vmatprep.subr.mxu0 0.0
        %1472 = vmatpush2.msra.mxu0 0.0
        %1473 = vmatprep.subr.mxu0 0.0
        %1474 = vmatpush2.msra.mxu0 0.0
        %1475 = vmatprep.subr.mxu0 0.0
        %1476 = vmatpush2.msra.mxu0 0.0
        %1477 = vmatprep.subr.mxu0 0.0
        %1478 = vmatpush2.msra.mxu0 0.0
        %1479 = vmatprep.subr.mxu0 0.0
        %1480 = vmatpush2.msra.mxu0 0.0
        %1481 = vmatprep.subr.mxu0 0.0
        %1482 = vmatpush2.msra.mxu0 0.0
        %1483 = vmatprep.subr.mxu0 0.0
        %1484 = vmatpush2.msra.mxu0 0.0
        %1485 = vmatprep.subr.mxu0 0.0
        %1486 = vmatpush2.msra.mxu0 0.0
        %1487 = vmatprep.subr.mxu0 0.0
        %1488 = vmatpush2.msra.mxu0 0.0
        %1489 = vmatprep.subr.mxu0 0.0
        %1490 = vmatpush2.msra.mxu0 0.0
        %1491 = vmatprep.subr.mxu0 0.0
        %1492 = vmatpush2.msra.mxu0 0.0
        %1493 = vmatprep.subr.mxu0 0.0
        %1494 = vmatpush2.msra.mxu0 0.0
        %1495 = vmatprep.subr.mxu0 0.0
        %1496 = vmatpush2.msra.mxu0 0.0
        %1497 = vmatprep.subr.mxu0 0.0
        %1498 = vmatpush2.msra.mxu0 0.0
        %1499 = vmatprep.subr.mxu0 0.0
        %1500 = vmatpush2.msra.mxu0 0.0
        %1501 = vmatprep.subr.mxu0 0.0
        %1502 = vmatpush2.msra.mxu0 0.0
        %1503 = vmatprep.mubr.f32.mxu0 0.0
        %1504 = vmatmul.mubr.f32.gmra.mxu0 %v1437
        %v1505 = vpop.f32.mrf.mxu0
        %v1506 = vadd.f32 %v1435, %v1505
        %v1507 = vpop.f32.mrf.mxu0
        %1508 = vdwg.mxu0
        %v1509 = vld [vmem:[#allocation7 + $0x80] sm:$0xff]
        %v1510 = vld [vmem:[#allocation7 + $0x88] sm:$0xff]
        %v1511 = vld [vmem:[#allocation7 + $0x90] sm:$0xff]
        %v1512 = vld [vmem:[#allocation7 + $0x98] sm:$0xff]
        %v1513 = vld [vmem:[#allocation7 + $0x104] sm:$0x1]
        %1514 = vxpose.xlu0.b32.start [1/16] %v1506, 128
        %1515 = vxpose.xlu0.b32.cont [2/16] 0.0, 128
        %1516 = vxpose.xlu0.b32.cont [3/16] 0.0, 128
        %1517 = vxpose.xlu0.b32.cont [4/16] 0.0, 128
        %1518 = vxpose.xlu0.b32.cont [5/16] 0.0, 128
        %1519 = vxpose.xlu0.b32.cont [6/16] 0.0, 128
        %1520 = vxpose.xlu0.b32.cont [7/16] 0.0, 128
        %1521 = vxpose.xlu0.b32.cont [8/16] 0.0, 128
        %1522 = vxpose.xlu0.b32.cont [9/16] 0.0, 128
        %1523 = vxpose.xlu0.b32.cont [10/16] 0.0, 128
        %1524 = vxpose.xlu0.b32.cont [11/16] 0.0, 128
        %1525 = vxpose.xlu0.b32.cont [12/16] 0.0, 128
        %1526 = vxpose.xlu0.b32.cont [13/16] 0.0, 128
        %1527 = vxpose.xlu0.b32.cont [14/16] 0.0, 128
        %1528 = vxpose.xlu0.b32.cont [15/16] 0.0, 128
        %1529 = vxpose.xlu0.b32.end [16/16] 0.0, 128
        %v1530 = vpop.trf.xlu0
        %v1531 = vpop.trf.xlu0
        %v1532 = vpop.trf.xlu0
        %v1533 = vpop.trf.xlu0
        %v1534 = vpop.trf.xlu0
        %v1535 = vpop.trf.xlu0
        %v1536 = vpop.trf.xlu0
        %v1537 = vpop.trf.xlu0
        %v1538 = vpop.trf.xlu0
        %v1539 = vpop.trf.xlu0
        %v1540 = vpop.trf.xlu0
        %v1541 = vpop.trf.xlu0
        %v1542 = vpop.trf.xlu0
        %v1543 = vpop.trf.xlu0
        %v1544 = vpop.trf.xlu0
        %v1545 = vpop.trf.xlu0
        %1547 = vrot.lane.b32.xlu0 %v1424, 120
        %v1548 = vpop.permute.xlu0 %1547
        %1549 = vrot.lane.b32.xlu0 %v1424, 112
        %v1550 = vpop.permute.xlu0 %1549
        %1551 = vrot.lane.b32.xlu0 %v1424, 104
        %v1552 = vpop.permute.xlu0 %1551
        %v1553 = vsel %vm369, %v1424, 0
        %1555 = vmatprep.subr.mxu0 0.0
        %1556 = vmatpush1.msra.mxu0 0.0
        %1557 = vmatprep.subr.mxu0 0.0
        %1558 = vmatpush1.msra.mxu0 0.0
        %1559 = vmatprep.subr.mxu0 0.0
        %1560 = vmatpush1.msra.mxu0 0.0
        %1561 = vmatprep.subr.mxu0 0.0
        %1562 = vmatpush1.msra.mxu0 0.0
        %1563 = vmatprep.subr.mxu0 0.0
        %1564 = vmatpush1.msra.mxu0 0.0
        %1565 = vmatprep.subr.mxu0 0.0
        %1566 = vmatpush1.msra.mxu0 0.0
        %1567 = vmatprep.subr.mxu0 0.0
        %1568 = vmatpush1.msra.mxu0 0.0
        %1569 = vmatprep.subr.mxu0 0.0
        %1570 = vmatpush1.msra.mxu0 0.0
        %1571 = vmatprep.subr.mxu0 0.0
        %1572 = vmatpush1.msra.mxu0 0.0
        %1573 = vmatprep.subr.mxu0 0.0
        %1574 = vmatpush1.msra.mxu0 0.0
        %1575 = vmatprep.subr.mxu0 0.0
        %1576 = vmatpush1.msra.mxu0 0.0
        %1577 = vmatprep.subr.mxu0 0.0
        %1578 = vmatpush1.msra.mxu0 0.0
        %1579 = vmatprep.subr.mxu0 0.0
        %1580 = vmatpush1.msra.mxu0 0.0
        %1581 = vmatprep.subr.mxu0 0.0
        %1582 = vmatpush1.msra.mxu0 0.0
        %1583 = vmatprep.subr.mxu0 0.0
        %1584 = vmatpush1.msra.mxu0 0.0
        %1585 = vmatprep.subr.mxu0 0.0
        %1586 = vmatpush1.msra.mxu0 %v1530
        %1587 = vmatprep.subr.mxu0 0.0
        %1588 = vmatpush2.msra.mxu0 0.0
        %1589 = vmatprep.subr.mxu0 0.0
        %1590 = vmatpush2.msra.mxu0 0.0
        %1591 = vmatprep.subr.mxu0 0.0
        %1592 = vmatpush2.msra.mxu0 0.0
        %1593 = vmatprep.subr.mxu0 0.0
        %1594 = vmatpush2.msra.mxu0 0.0
        %1595 = vmatprep.subr.mxu0 0.0
        %1596 = vmatpush2.msra.mxu0 0.0
        %1597 = vmatprep.subr.mxu0 0.0
        %1598 = vmatpush2.msra.mxu0 0.0
        %1599 = vmatprep.subr.mxu0 0.0
        %1600 = vmatpush2.msra.mxu0 0.0
        %1601 = vmatprep.subr.mxu0 0.0
        %1602 = vmatpush2.msra.mxu0 0.0
        %1603 = vmatprep.subr.mxu0 0.0
        %1604 = vmatpush2.msra.mxu0 0.0
        %1605 = vmatprep.subr.mxu0 0.0
        %1606 = vmatpush2.msra.mxu0 0.0
        %1607 = vmatprep.subr.mxu0 0.0
        %1608 = vmatpush2.msra.mxu0 0.0
        %1609 = vmatprep.subr.mxu0 0.0
        %1610 = vmatpush2.msra.mxu0 0.0
        %1611 = vmatprep.subr.mxu0 0.0
        %1612 = vmatpush2.msra.mxu0 0.0
        %1613 = vmatprep.subr.mxu0 0.0
        %1614 = vmatpush2.msra.mxu0 0.0
        %1615 = vmatprep.subr.mxu0 0.0
        %1616 = vmatpush2.msra.mxu0 0.0
        %1617 = vmatprep.subr.mxu0 0.0
        %1618 = vmatpush2.msra.mxu0 0.0
        %1619 = vmatprep.mubr.f32.mxu0 0.0
        %1620 = vmatmul.mubr.f32.gmra.mxu0 %v1553
        %v1621 = vpop.f32.mrf.mxu0
        %v1622 = vadd.f32 0.0, %v1621
        %v1623 = vpop.f32.mrf.mxu0
        %1624 = vdwg.mxu0
        %v1625 = vsel %vm369, %v1548, 0
        %1627 = vmatprep.subr.mxu0 0.0
        %1628 = vmatpush1.msra.mxu0 0.0
        %1629 = vmatprep.subr.mxu0 0.0
        %1630 = vmatpush1.msra.mxu0 0.0
        %1631 = vmatprep.subr.mxu0 0.0
        %1632 = vmatpush1.msra.mxu0 0.0
        %1633 = vmatprep.subr.mxu0 0.0
        %1634 = vmatpush1.msra.mxu0 0.0
        %1635 = vmatprep.subr.mxu0 0.0
        %1636 = vmatpush1.msra.mxu0 0.0
        %1637 = vmatprep.subr.mxu0 0.0
        %1638 = vmatpush1.msra.mxu0 0.0
        %1639 = vmatprep.subr.mxu0 0.0
        %1640 = vmatpush1.msra.mxu0 0.0
        %1641 = vmatprep.subr.mxu0 0.0
        %1642 = vmatpush1.msra.mxu0 0.0
        %1643 = vmatprep.subr.mxu0 0.0
        %1644 = vmatpush1.msra.mxu0 0.0
        %1645 = vmatprep.subr.mxu0 0.0
        %1646 = vmatpush1.msra.mxu0 0.0
        %1647 = vmatprep.subr.mxu0 0.0
        %1648 = vmatpush1.msra.mxu0 0.0
        %1649 = vmatprep.subr.mxu0 0.0
        %1650 = vmatpush1.msra.mxu0 0.0
        %1651 = vmatprep.subr.mxu0 0.0
        %1652 = vmatpush1.msra.mxu0 0.0
        %1653 = vmatprep.subr.mxu0 0.0
        %1654 = vmatpush1.msra.mxu0 0.0
        %1655 = vmatprep.subr.mxu0 0.0
        %1656 = vmatpush1.msra.mxu0 0.0
        %1657 = vmatprep.subr.mxu0 0.0
        %1658 = vmatpush1.msra.mxu0 %v1531
        %1659 = vmatprep.subr.mxu0 0.0
        %1660 = vmatpush2.msra.mxu0 0.0
        %1661 = vmatprep.subr.mxu0 0.0
        %1662 = vmatpush2.msra.mxu0 0.0
        %1663 = vmatprep.subr.mxu0 0.0
        %1664 = vmatpush2.msra.mxu0 0.0
        %1665 = vmatprep.subr.mxu0 0.0
        %1666 = vmatpush2.msra.mxu0 0.0
        %1667 = vmatprep.subr.mxu0 0.0
        %1668 = vmatpush2.msra.mxu0 0.0
        %1669 = vmatprep.subr.mxu0 0.0
        %1670 = vmatpush2.msra.mxu0 0.0
        %1671 = vmatprep.subr.mxu0 0.0
        %1672 = vmatpush2.msra.mxu0 0.0
        %1673 = vmatprep.subr.mxu0 0.0
        %1674 = vmatpush2.msra.mxu0 0.0
        %1675 = vmatprep.subr.mxu0 0.0
        %1676 = vmatpush2.msra.mxu0 0.0
        %1677 = vmatprep.subr.mxu0 0.0
        %1678 = vmatpush2.msra.mxu0 0.0
        %1679 = vmatprep.subr.mxu0 0.0
        %1680 = vmatpush2.msra.mxu0 0.0
        %1681 = vmatprep.subr.mxu0 0.0
        %1682 = vmatpush2.msra.mxu0 0.0
        %1683 = vmatprep.subr.mxu0 0.0
        %1684 = vmatpush2.msra.mxu0 0.0
        %1685 = vmatprep.subr.mxu0 0.0
        %1686 = vmatpush2.msra.mxu0 0.0
        %1687 = vmatprep.subr.mxu0 0.0
        %1688 = vmatpush2.msra.mxu0 0.0
        %1689 = vmatprep.subr.mxu0 0.0
        %1690 = vmatpush2.msra.mxu0 0.0
        %1691 = vmatprep.mubr.f32.mxu0 0.0
        %1692 = vmatmul.mubr.f32.gmra.mxu0 %v1625
        %v1693 = vpop.f32.mrf.mxu0
        %v1694 = vadd.f32 0.0, %v1693
        %v1695 = vpop.f32.mrf.mxu0
        %1696 = vdwg.mxu0
        %v1697 = vsel %vm369, %v1550, 0
        %1699 = vmatprep.subr.mxu0 0.0
        %1700 = vmatpush1.msra.mxu0 0.0
        %1701 = vmatprep.subr.mxu0 0.0
        %1702 = vmatpush1.msra.mxu0 0.0
        %1703 = vmatprep.subr.mxu0 0.0
        %1704 = vmatpush1.msra.mxu0 0.0
        %1705 = vmatprep.subr.mxu0 0.0
        %1706 = vmatpush1.msra.mxu0 0.0
        %1707 = vmatprep.subr.mxu0 0.0
        %1708 = vmatpush1.msra.mxu0 0.0
        %1709 = vmatprep.subr.mxu0 0.0
        %1710 = vmatpush1.msra.mxu0 0.0
        %1711 = vmatprep.subr.mxu0 0.0
        %1712 = vmatpush1.msra.mxu0 0.0
        %1713 = vmatprep.subr.mxu0 0.0
        %1714 = vmatpush1.msra.mxu0 0.0
        %1715 = vmatprep.subr.mxu0 0.0
        %1716 = vmatpush1.msra.mxu0 0.0
        %1717 = vmatprep.subr.mxu0 0.0
        %1718 = vmatpush1.msra.mxu0 0.0
        %1719 = vmatprep.subr.mxu0 0.0
        %1720 = vmatpush1.msra.mxu0 0.0
        %1721 = vmatprep.subr.mxu0 0.0
        %1722 = vmatpush1.msra.mxu0 0.0
        %1723 = vmatprep.subr.mxu0 0.0
        %1724 = vmatpush1.msra.mxu0 0.0
        %1725 = vmatprep.subr.mxu0 0.0
        %1726 = vmatpush1.msra.mxu0 0.0
        %1727 = vmatprep.subr.mxu0 0.0
        %1728 = vmatpush1.msra.mxu0 0.0
        %1729 = vmatprep.subr.mxu0 0.0
        %1730 = vmatpush1.msra.mxu0 %v1532
        %1731 = vmatprep.subr.mxu0 0.0
        %1732 = vmatpush2.msra.mxu0 0.0
        %1733 = vmatprep.subr.mxu0 0.0
        %1734 = vmatpush2.msra.mxu0 0.0
        %1735 = vmatprep.subr.mxu0 0.0
        %1736 = vmatpush2.msra.mxu0 0.0
        %1737 = vmatprep.subr.mxu0 0.0
        %1738 = vmatpush2.msra.mxu0 0.0
        %1739 = vmatprep.subr.mxu0 0.0
        %1740 = vmatpush2.msra.mxu0 0.0
        %1741 = vmatprep.subr.mxu0 0.0
        %1742 = vmatpush2.msra.mxu0 0.0
        %1743 = vmatprep.subr.mxu0 0.0
        %1744 = vmatpush2.msra.mxu0 0.0
        %1745 = vmatprep.subr.mxu0 0.0
        %1746 = vmatpush2.msra.mxu0 0.0
        %1747 = vmatprep.subr.mxu0 0.0
        %1748 = vmatpush2.msra.mxu0 0.0
        %1749 = vmatprep.subr.mxu0 0.0
        %1750 = vmatpush2.msra.mxu0 0.0
        %1751 = vmatprep.subr.mxu0 0.0
        %1752 = vmatpush2.msra.mxu0 0.0
        %1753 = vmatprep.subr.mxu0 0.0
        %1754 = vmatpush2.msra.mxu0 0.0
        %1755 = vmatprep.subr.mxu0 0.0
        %1756 = vmatpush2.msra.mxu0 0.0
        %1757 = vmatprep.subr.mxu0 0.0
        %1758 = vmatpush2.msra.mxu0 0.0
        %1759 = vmatprep.subr.mxu0 0.0
        %1760 = vmatpush2.msra.mxu0 0.0
        %1761 = vmatprep.subr.mxu0 0.0
        %1762 = vmatpush2.msra.mxu0 0.0
        %1763 = vmatprep.mubr.f32.mxu0 0.0
        %1764 = vmatmul.mubr.f32.gmra.mxu0 %v1697
        %v1765 = vpop.f32.mrf.mxu0
        %v1766 = vadd.f32 0.0, %v1765
        %v1767 = vpop.f32.mrf.mxu0
        %1768 = vdwg.mxu0
        %v1769 = vsel %vm369, %v1552, 0
        %1771 = vmatprep.subr.mxu0 0.0
        %1772 = vmatpush1.msra.mxu0 0.0
        %1773 = vmatprep.subr.mxu0 0.0
        %1774 = vmatpush1.msra.mxu0 0.0
        %1775 = vmatprep.subr.mxu0 0.0
        %1776 = vmatpush1.msra.mxu0 0.0
        %1777 = vmatprep.subr.mxu0 0.0
        %1778 = vmatpush1.msra.mxu0 0.0
        %1779 = vmatprep.subr.mxu0 0.0
        %1780 = vmatpush1.msra.mxu0 0.0
        %1781 = vmatprep.subr.mxu0 0.0
        %1782 = vmatpush1.msra.mxu0 0.0
        %1783 = vmatprep.subr.mxu0 0.0
        %1784 = vmatpush1.msra.mxu0 0.0
        %1785 = vmatprep.subr.mxu0 0.0
        %1786 = vmatpush1.msra.mxu0 0.0
        %1787 = vmatprep.subr.mxu0 0.0
        %1788 = vmatpush1.msra.mxu0 0.0
        %1789 = vmatprep.subr.mxu0 0.0
        %1790 = vmatpush1.msra.mxu0 0.0
        %1791 = vmatprep.subr.mxu0 0.0
        %1792 = vmatpush1.msra.mxu0 0.0
        %1793 = vmatprep.subr.mxu0 0.0
        %1794 = vmatpush1.msra.mxu0 0.0
        %1795 = vmatprep.subr.mxu0 0.0
        %1796 = vmatpush1.msra.mxu0 0.0
        %1797 = vmatprep.subr.mxu0 0.0
        %1798 = vmatpush1.msra.mxu0 0.0
        %1799 = vmatprep.subr.mxu0 0.0
        %1800 = vmatpush1.msra.mxu0 0.0
        %1801 = vmatprep.subr.mxu0 0.0
        %1802 = vmatpush1.msra.mxu0 %v1533
        %1803 = vmatprep.subr.mxu0 0.0
        %1804 = vmatpush2.msra.mxu0 0.0
        %1805 = vmatprep.subr.mxu0 0.0
        %1806 = vmatpush2.msra.mxu0 0.0
        %1807 = vmatprep.subr.mxu0 0.0
        %1808 = vmatpush2.msra.mxu0 0.0
        %1809 = vmatprep.subr.mxu0 0.0
        %1810 = vmatpush2.msra.mxu0 0.0
        %1811 = vmatprep.subr.mxu0 0.0
        %1812 = vmatpush2.msra.mxu0 0.0
        %1813 = vmatprep.subr.mxu0 0.0
        %1814 = vmatpush2.msra.mxu0 0.0
        %1815 = vmatprep.subr.mxu0 0.0
        %1816 = vmatpush2.msra.mxu0 0.0
        %1817 = vmatprep.subr.mxu0 0.0
        %1818 = vmatpush2.msra.mxu0 0.0
        %1819 = vmatprep.subr.mxu0 0.0
        %1820 = vmatpush2.msra.mxu0 0.0
        %1821 = vmatprep.subr.mxu0 0.0
        %1822 = vmatpush2.msra.mxu0 0.0
        %1823 = vmatprep.subr.mxu0 0.0
        %1824 = vmatpush2.msra.mxu0 0.0
        %1825 = vmatprep.subr.mxu0 0.0
        %1826 = vmatpush2.msra.mxu0 0.0
        %1827 = vmatprep.subr.mxu0 0.0
        %1828 = vmatpush2.msra.mxu0 0.0
        %1829 = vmatprep.subr.mxu0 0.0
        %1830 = vmatpush2.msra.mxu0 0.0
        %1831 = vmatprep.subr.mxu0 0.0
        %1832 = vmatpush2.msra.mxu0 0.0
        %1833 = vmatprep.subr.mxu0 0.0
        %1834 = vmatpush2.msra.mxu0 0.0
        %1835 = vmatprep.mubr.f32.mxu0 0.0
        %1836 = vmatmul.mubr.f32.gmra.mxu0 %v1769
        %v1837 = vpop.f32.mrf.mxu0
        %v1838 = vadd.f32 0.0, %v1837
        %v1839 = vpop.f32.mrf.mxu0
        %1840 = vdwg.mxu0
        %v1841 = vsel %vm369, %v1622, -inf
        %1842 = vmax.xlane.f32.xlu0 %v1841
        %v1843 = vpop.xlane.xlu0 %1842
        %v1844 = vsel %vm369, %v1694, -inf
        %1845 = vmax.xlane.f32.xlu0 %v1844
        %v1846 = vpop.xlane.xlu0 %1845
        %v1847 = vsel %vm369, %v1766, -inf
        %1848 = vmax.xlane.f32.xlu0 %v1847
        %v1849 = vpop.xlane.xlu0 %1848
        %v1850 = vsel %vm369, %v1838, -inf
        %1851 = vmax.xlane.f32.xlu0 %v1850
        %v1852 = vpop.xlane.xlu0 %1851
        %v1853 = vsub.f32 %v1622, %v1843
        %v1854 = vsub.f32 %v1694, %v1846
        %v1855 = vsub.f32 %v1766, %v1849
        %v1856 = vsub.f32 %v1838, %v1852
        %v1857 = vmul.f32 %v1853, 1.442695
        %v1858 = vpow.pop %v1857
        %v1859 = vmul.f32 %v1854, 1.442695
        %v1860 = vpow.pop %v1859
        %v1861 = vmul.f32 %v1855, 1.442695
        %v1862 = vpow.pop %v1861
        %v1863 = vmul.f32 %v1856, 1.442695
        %v1864 = vpow.pop %v1863
        %v1865 = vsel %vm369, %v1858, 0.0
        %1866 = vadd.xlane.f32.xlu0 %v1865
        %v1867 = vpop.xlane.xlu0 %1866
        %v1868 = vsel %vm369, %v1860, 0.0
        %1869 = vadd.xlane.f32.xlu0 %v1868
        %v1870 = vpop.xlane.xlu0 %1869
        %v1871 = vsel %vm369, %v1862, 0.0
        %1872 = vadd.xlane.f32.xlu0 %v1871
        %v1873 = vpop.xlane.xlu0 %1872
        %v1874 = vsel %vm369, %v1864, 0.0
        %1875 = vadd.xlane.f32.xlu0 %v1874
        %v1876 = vpop.xlane.xlu0 %1875
        %v1877 = vrcp.pop %v1867
        %v1878 = vrcp.pop %v1870
        %v1879 = vrcp.pop %v1873
        %v1880 = vrcp.pop %v1876
        %v1881 = vmul.f32 %v1858, %v1877
        %v1882 = vmul.f32 %v1860, %v1878
        %v1883 = vmul.f32 %v1862, %v1879
        %v1884 = vmul.f32 %v1864, %v1880
        %v1886 = vsel %vm369, %v1881, 0
        %v1889 = vsel %vm369, %v1534, 0
        %1891 = vmatprep.subr.mxu0 0.0
        %1892 = vmatpush1.xpose.msra.mxu0 0.0
        %1893 = vmatprep.subr.mxu0 0.0
        %1894 = vmatpush1.xpose.msra.mxu0 0.0
        %1895 = vmatprep.subr.mxu0 0.0
        %1896 = vmatpush1.xpose.msra.mxu0 0.0
        %1897 = vmatprep.subr.mxu0 0.0
        %1898 = vmatpush1.xpose.msra.mxu0 0.0
        %1899 = vmatprep.subr.mxu0 0.0
        %1900 = vmatpush1.xpose.msra.mxu0 0.0
        %1901 = vmatprep.subr.mxu0 0.0
        %1902 = vmatpush1.xpose.msra.mxu0 0.0
        %1903 = vmatprep.subr.mxu0 0.0
        %1904 = vmatpush1.xpose.msra.mxu0 0.0
        %1905 = vmatprep.subr.mxu0 0.0
        %1906 = vmatpush1.xpose.msra.mxu0 0.0
        %1907 = vmatprep.subr.mxu0 0.0
        %1908 = vmatpush1.xpose.msra.mxu0 0.0
        %1909 = vmatprep.subr.mxu0 0.0
        %1910 = vmatpush1.xpose.msra.mxu0 0.0
        %1911 = vmatprep.subr.mxu0 0.0
        %1912 = vmatpush1.xpose.msra.mxu0 0.0
        %1913 = vmatprep.subr.mxu0 0.0
        %1914 = vmatpush1.xpose.msra.mxu0 0.0
        %1915 = vmatprep.subr.mxu0 0.0
        %1916 = vmatpush1.xpose.msra.mxu0 0.0
        %1917 = vmatprep.subr.mxu0 0.0
        %1918 = vmatpush1.xpose.msra.mxu0 0.0
        %1919 = vmatprep.subr.mxu0 0.0
        %1920 = vmatpush1.xpose.msra.mxu0 0.0
        %1921 = vmatprep.subr.mxu0 0.0
        %1922 = vmatpush1.xpose.msra.mxu0 %v1889
        %1923 = vmatprep.subr.mxu0 0.0
        %1924 = vmatpush2.xpose.msra.mxu0 0.0
        %1925 = vmatprep.subr.mxu0 0.0
        %1926 = vmatpush2.xpose.msra.mxu0 0.0
        %1927 = vmatprep.subr.mxu0 0.0
        %1928 = vmatpush2.xpose.msra.mxu0 0.0
        %1929 = vmatprep.subr.mxu0 0.0
        %1930 = vmatpush2.xpose.msra.mxu0 0.0
        %1931 = vmatprep.subr.mxu0 0.0
        %1932 = vmatpush2.xpose.msra.mxu0 0.0
        %1933 = vmatprep.subr.mxu0 0.0
        %1934 = vmatpush2.xpose.msra.mxu0 0.0
        %1935 = vmatprep.subr.mxu0 0.0
        %1936 = vmatpush2.xpose.msra.mxu0 0.0
        %1937 = vmatprep.subr.mxu0 0.0
        %1938 = vmatpush2.xpose.msra.mxu0 0.0
        %1939 = vmatprep.subr.mxu0 0.0
        %1940 = vmatpush2.xpose.msra.mxu0 0.0
        %1941 = vmatprep.subr.mxu0 0.0
        %1942 = vmatpush2.xpose.msra.mxu0 0.0
        %1943 = vmatprep.subr.mxu0 0.0
        %1944 = vmatpush2.xpose.msra.mxu0 0.0
        %1945 = vmatprep.subr.mxu0 0.0
        %1946 = vmatpush2.xpose.msra.mxu0 0.0
        %1947 = vmatprep.subr.mxu0 0.0
        %1948 = vmatpush2.xpose.msra.mxu0 0.0
        %1949 = vmatprep.subr.mxu0 0.0
        %1950 = vmatpush2.xpose.msra.mxu0 0.0
        %1951 = vmatprep.subr.mxu0 0.0
        %1952 = vmatpush2.xpose.msra.mxu0 0.0
        %1953 = vmatprep.subr.mxu0 0.0
        %1954 = vmatpush2.xpose.msra.mxu0 0.0
        %1955 = vmatprep.mubr.f32.mxu0 0.0
        %1956 = vmatmul.mubr.f32.gmra.mxu0 %v1886
        %v1957 = vpop.f32.mrf.mxu0
        %v1958 = vadd.f32 0.0, %v1957
        %v1959 = vpop.f32.mrf.mxu0
        %1960 = vdwg.mxu0
        %v1962 = vsel %vm369, %v1882, 0
        %v1965 = vsel %vm369, %v1535, 0
        %1967 = vmatprep.subr.mxu0 0.0
        %1968 = vmatpush1.xpose.msra.mxu0 0.0
        %1969 = vmatprep.subr.mxu0 0.0
        %1970 = vmatpush1.xpose.msra.mxu0 0.0
        %1971 = vmatprep.subr.mxu0 0.0
        %1972 = vmatpush1.xpose.msra.mxu0 0.0
        %1973 = vmatprep.subr.mxu0 0.0
        %1974 = vmatpush1.xpose.msra.mxu0 0.0
        %1975 = vmatprep.subr.mxu0 0.0
        %1976 = vmatpush1.xpose.msra.mxu0 0.0
        %1977 = vmatprep.subr.mxu0 0.0
        %1978 = vmatpush1.xpose.msra.mxu0 0.0
        %1979 = vmatprep.subr.mxu0 0.0
        %1980 = vmatpush1.xpose.msra.mxu0 0.0
        %1981 = vmatprep.subr.mxu0 0.0
        %1982 = vmatpush1.xpose.msra.mxu0 0.0
        %1983 = vmatprep.subr.mxu0 0.0
        %1984 = vmatpush1.xpose.msra.mxu0 0.0
        %1985 = vmatprep.subr.mxu0 0.0
        %1986 = vmatpush1.xpose.msra.mxu0 0.0
        %1987 = vmatprep.subr.mxu0 0.0
        %1988 = vmatpush1.xpose.msra.mxu0 0.0
        %1989 = vmatprep.subr.mxu0 0.0
        %1990 = vmatpush1.xpose.msra.mxu0 0.0
        %1991 = vmatprep.subr.mxu0 0.0
        %1992 = vmatpush1.xpose.msra.mxu0 0.0
        %1993 = vmatprep.subr.mxu0 0.0
        %1994 = vmatpush1.xpose.msra.mxu0 0.0
        %1995 = vmatprep.subr.mxu0 0.0
        %1996 = vmatpush1.xpose.msra.mxu0 0.0
        %1997 = vmatprep.subr.mxu0 0.0
        %1998 = vmatpush1.xpose.msra.mxu0 %v1965
        %1999 = vmatprep.subr.mxu0 0.0
        %2000 = vmatpush2.xpose.msra.mxu0 0.0
        %2001 = vmatprep.subr.mxu0 0.0
        %2002 = vmatpush2.xpose.msra.mxu0 0.0
        %2003 = vmatprep.subr.mxu0 0.0
        %2004 = vmatpush2.xpose.msra.mxu0 0.0
        %2005 = vmatprep.subr.mxu0 0.0
        %2006 = vmatpush2.xpose.msra.mxu0 0.0
        %2007 = vmatprep.subr.mxu0 0.0
        %2008 = vmatpush2.xpose.msra.mxu0 0.0
        %2009 = vmatprep.subr.mxu0 0.0
        %2010 = vmatpush2.xpose.msra.mxu0 0.0
        %2011 = vmatprep.subr.mxu0 0.0
        %2012 = vmatpush2.xpose.msra.mxu0 0.0
        %2013 = vmatprep.subr.mxu0 0.0
        %2014 = vmatpush2.xpose.msra.mxu0 0.0
        %2015 = vmatprep.subr.mxu0 0.0
        %2016 = vmatpush2.xpose.msra.mxu0 0.0
        %2017 = vmatprep.subr.mxu0 0.0
        %2018 = vmatpush2.xpose.msra.mxu0 0.0
        %2019 = vmatprep.subr.mxu0 0.0
        %2020 = vmatpush2.xpose.msra.mxu0 0.0
        %2021 = vmatprep.subr.mxu0 0.0
        %2022 = vmatpush2.xpose.msra.mxu0 0.0
        %2023 = vmatprep.subr.mxu0 0.0
        %2024 = vmatpush2.xpose.msra.mxu0 0.0
        %2025 = vmatprep.subr.mxu0 0.0
        %2026 = vmatpush2.xpose.msra.mxu0 0.0
        %2027 = vmatprep.subr.mxu0 0.0
        %2028 = vmatpush2.xpose.msra.mxu0 0.0
        %2029 = vmatprep.subr.mxu0 0.0
        %2030 = vmatpush2.xpose.msra.mxu0 0.0
        %2031 = vmatprep.mubr.f32.mxu0 0.0
        %2032 = vmatmul.mubr.f32.gmra.mxu0 %v1962
        %v2033 = vpop.f32.mrf.mxu0
        %v2034 = vadd.f32 0.0, %v2033
        %v2035 = vpop.f32.mrf.mxu0
        %2036 = vdwg.mxu0
        %v2038 = vsel %vm369, %v1883, 0
        %v2041 = vsel %vm369, %v1536, 0
        %2043 = vmatprep.subr.mxu0 0.0
        %2044 = vmatpush1.xpose.msra.mxu0 0.0
        %2045 = vmatprep.subr.mxu0 0.0
        %2046 = vmatpush1.xpose.msra.mxu0 0.0
        %2047 = vmatprep.subr.mxu0 0.0
        %2048 = vmatpush1.xpose.msra.mxu0 0.0
        %2049 = vmatprep.subr.mxu0 0.0
        %2050 = vmatpush1.xpose.msra.mxu0 0.0
        %2051 = vmatprep.subr.mxu0 0.0
        %2052 = vmatpush1.xpose.msra.mxu0 0.0
        %2053 = vmatprep.subr.mxu0 0.0
        %2054 = vmatpush1.xpose.msra.mxu0 0.0
        %2055 = vmatprep.subr.mxu0 0.0
        %2056 = vmatpush1.xpose.msra.mxu0 0.0
        %2057 = vmatprep.subr.mxu0 0.0
        %2058 = vmatpush1.xpose.msra.mxu0 0.0
        %2059 = vmatprep.subr.mxu0 0.0
        %2060 = vmatpush1.xpose.msra.mxu0 0.0
        %2061 = vmatprep.subr.mxu0 0.0
        %2062 = vmatpush1.xpose.msra.mxu0 0.0
        %2063 = vmatprep.subr.mxu0 0.0
        %2064 = vmatpush1.xpose.msra.mxu0 0.0
        %2065 = vmatprep.subr.mxu0 0.0
        %2066 = vmatpush1.xpose.msra.mxu0 0.0
        %2067 = vmatprep.subr.mxu0 0.0
        %2068 = vmatpush1.xpose.msra.mxu0 0.0
        %2069 = vmatprep.subr.mxu0 0.0
        %2070 = vmatpush1.xpose.msra.mxu0 0.0
        %2071 = vmatprep.subr.mxu0 0.0
        %2072 = vmatpush1.xpose.msra.mxu0 0.0
        %2073 = vmatprep.subr.mxu0 0.0
        %2074 = vmatpush1.xpose.msra.mxu0 %v2041
        %2075 = vmatprep.subr.mxu0 0.0
        %2076 = vmatpush2.xpose.msra.mxu0 0.0
        %2077 = vmatprep.subr.mxu0 0.0
        %2078 = vmatpush2.xpose.msra.mxu0 0.0
        %2079 = vmatprep.subr.mxu0 0.0
        %2080 = vmatpush2.xpose.msra.mxu0 0.0
        %2081 = vmatprep.subr.mxu0 0.0
        %2082 = vmatpush2.xpose.msra.mxu0 0.0
        %2083 = vmatprep.subr.mxu0 0.0
        %2084 = vmatpush2.xpose.msra.mxu0 0.0
        %2085 = vmatprep.subr.mxu0 0.0
        %2086 = vmatpush2.xpose.msra.mxu0 0.0
        %2087 = vmatprep.subr.mxu0 0.0
        %2088 = vmatpush2.xpose.msra.mxu0 0.0
        %2089 = vmatprep.subr.mxu0 0.0
        %2090 = vmatpush2.xpose.msra.mxu0 0.0
        %2091 = vmatprep.subr.mxu0 0.0
        %2092 = vmatpush2.xpose.msra.mxu0 0.0
        %2093 = vmatprep.subr.mxu0 0.0
        %2094 = vmatpush2.xpose.msra.mxu0 0.0
        %2095 = vmatprep.subr.mxu0 0.0
        %2096 = vmatpush2.xpose.msra.mxu0 0.0
        %2097 = vmatprep.subr.mxu0 0.0
        %2098 = vmatpush2.xpose.msra.mxu0 0.0
        %2099 = vmatprep.subr.mxu0 0.0
        %2100 = vmatpush2.xpose.msra.mxu0 0.0
        %2101 = vmatprep.subr.mxu0 0.0
        %2102 = vmatpush2.xpose.msra.mxu0 0.0
        %2103 = vmatprep.subr.mxu0 0.0
        %2104 = vmatpush2.xpose.msra.mxu0 0.0
        %2105 = vmatprep.subr.mxu0 0.0
        %2106 = vmatpush2.xpose.msra.mxu0 0.0
        %2107 = vmatprep.mubr.f32.mxu0 0.0
        %2108 = vmatmul.mubr.f32.gmra.mxu0 %v2038
        %v2109 = vpop.f32.mrf.mxu0
        %v2110 = vadd.f32 0.0, %v2109
        %v2111 = vpop.f32.mrf.mxu0
        %2112 = vdwg.mxu0
        %v2114 = vsel %vm369, %v1884, 0
        %v2117 = vsel %vm369, %v1537, 0
        %2119 = vmatprep.subr.mxu0 0.0
        %2120 = vmatpush1.xpose.msra.mxu0 0.0
        %2121 = vmatprep.subr.mxu0 0.0
        %2122 = vmatpush1.xpose.msra.mxu0 0.0
        %2123 = vmatprep.subr.mxu0 0.0
        %2124 = vmatpush1.xpose.msra.mxu0 0.0
        %2125 = vmatprep.subr.mxu0 0.0
        %2126 = vmatpush1.xpose.msra.mxu0 0.0
        %2127 = vmatprep.subr.mxu0 0.0
        %2128 = vmatpush1.xpose.msra.mxu0 0.0
        %2129 = vmatprep.subr.mxu0 0.0
        %2130 = vmatpush1.xpose.msra.mxu0 0.0
        %2131 = vmatprep.subr.mxu0 0.0
        %2132 = vmatpush1.xpose.msra.mxu0 0.0
        %2133 = vmatprep.subr.mxu0 0.0
        %2134 = vmatpush1.xpose.msra.mxu0 0.0
        %2135 = vmatprep.subr.mxu0 0.0
        %2136 = vmatpush1.xpose.msra.mxu0 0.0
        %2137 = vmatprep.subr.mxu0 0.0
        %2138 = vmatpush1.xpose.msra.mxu0 0.0
        %2139 = vmatprep.subr.mxu0 0.0
        %2140 = vmatpush1.xpose.msra.mxu0 0.0
        %2141 = vmatprep.subr.mxu0 0.0
        %2142 = vmatpush1.xpose.msra.mxu0 0.0
        %2143 = vmatprep.subr.mxu0 0.0
        %2144 = vmatpush1.xpose.msra.mxu0 0.0
        %2145 = vmatprep.subr.mxu0 0.0
        %2146 = vmatpush1.xpose.msra.mxu0 0.0
        %2147 = vmatprep.subr.mxu0 0.0
        %2148 = vmatpush1.xpose.msra.mxu0 0.0
        %2149 = vmatprep.subr.mxu0 0.0
        %2150 = vmatpush1.xpose.msra.mxu0 %v2117
        %2151 = vmatprep.subr.mxu0 0.0
        %2152 = vmatpush2.xpose.msra.mxu0 0.0
        %2153 = vmatprep.subr.mxu0 0.0
        %2154 = vmatpush2.xpose.msra.mxu0 0.0
        %2155 = vmatprep.subr.mxu0 0.0
        %2156 = vmatpush2.xpose.msra.mxu0 0.0
        %2157 = vmatprep.subr.mxu0 0.0
        %2158 = vmatpush2.xpose.msra.mxu0 0.0
        %2159 = vmatprep.subr.mxu0 0.0
        %2160 = vmatpush2.xpose.msra.mxu0 0.0
        %2161 = vmatprep.subr.mxu0 0.0
        %2162 = vmatpush2.xpose.msra.mxu0 0.0
        %2163 = vmatprep.subr.mxu0 0.0
        %2164 = vmatpush2.xpose.msra.mxu0 0.0
        %2165 = vmatprep.subr.mxu0 0.0
        %2166 = vmatpush2.xpose.msra.mxu0 0.0
        %2167 = vmatprep.subr.mxu0 0.0
        %2168 = vmatpush2.xpose.msra.mxu0 0.0
        %2169 = vmatprep.subr.mxu0 0.0
        %2170 = vmatpush2.xpose.msra.mxu0 0.0
        %2171 = vmatprep.subr.mxu0 0.0
        %2172 = vmatpush2.xpose.msra.mxu0 0.0
        %2173 = vmatprep.subr.mxu0 0.0
        %2174 = vmatpush2.xpose.msra.mxu0 0.0
        %2175 = vmatprep.subr.mxu0 0.0
        %2176 = vmatpush2.xpose.msra.mxu0 0.0
        %2177 = vmatprep.subr.mxu0 0.0
        %2178 = vmatpush2.xpose.msra.mxu0 0.0
        %2179 = vmatprep.subr.mxu0 0.0
        %2180 = vmatpush2.xpose.msra.mxu0 0.0
        %2181 = vmatprep.subr.mxu0 0.0
        %2182 = vmatpush2.xpose.msra.mxu0 0.0
        %2183 = vmatprep.mubr.f32.mxu0 0.0
        %2184 = vmatmul.mubr.f32.gmra.mxu0 %v2114
        %v2185 = vpop.f32.mrf.mxu0
        %v2186 = vadd.f32 0.0, %v2185
        %v2187 = vpop.f32.mrf.mxu0
        %2188 = vdwg.mxu0
        %v2190 = vsel %vm369, %v1958, 0
        %2192 = vmatprep.subr.mxu0 0.0
        %2193 = vmatpush1.msra.mxu0 0.0
        %2194 = vmatprep.subr.mxu0 0.0
        %2195 = vmatpush1.msra.mxu0 0.0
        %2196 = vmatprep.subr.mxu0 0.0
        %2197 = vmatpush1.msra.mxu0 0.0
        %2198 = vmatprep.subr.mxu0 0.0
        %2199 = vmatpush1.msra.mxu0 0.0
        %2200 = vmatprep.subr.mxu0 0.0
        %2201 = vmatpush1.msra.mxu0 0.0
        %2202 = vmatprep.subr.mxu0 0.0
        %2203 = vmatpush1.msra.mxu0 0.0
        %2204 = vmatprep.subr.mxu0 0.0
        %2205 = vmatpush1.msra.mxu0 0.0
        %2206 = vmatprep.subr.mxu0 0.0
        %2207 = vmatpush1.msra.mxu0 0.0
        %2208 = vmatprep.subr.mxu0 0.0
        %2209 = vmatpush1.msra.mxu0 0.0
        %2210 = vmatprep.subr.mxu0 0.0
        %2211 = vmatpush1.msra.mxu0 0.0
        %2212 = vmatprep.subr.mxu0 0.0
        %2213 = vmatpush1.msra.mxu0 0.0
        %2214 = vmatprep.subr.mxu0 0.0
        %2215 = vmatpush1.msra.mxu0 0.0
        %2216 = vmatprep.subr.mxu0 0.0
        %2217 = vmatpush1.msra.mxu0 0.0
        %2218 = vmatprep.subr.mxu0 0.0
        %2219 = vmatpush1.msra.mxu0 0.0
        %2220 = vmatprep.subr.mxu0 0.0
        %2221 = vmatpush1.msra.mxu0 0.0
        %2222 = vmatprep.subr.mxu0 0.0
        %2223 = vmatpush1.msra.mxu0 %v1509
        %2224 = vmatprep.subr.mxu0 0.0
        %2225 = vmatpush2.msra.mxu0 0.0
        %2226 = vmatprep.subr.mxu0 0.0
        %2227 = vmatpush2.msra.mxu0 0.0
        %2228 = vmatprep.subr.mxu0 0.0
        %2229 = vmatpush2.msra.mxu0 0.0
        %2230 = vmatprep.subr.mxu0 0.0
        %2231 = vmatpush2.msra.mxu0 0.0
        %2232 = vmatprep.subr.mxu0 0.0
        %2233 = vmatpush2.msra.mxu0 0.0
        %2234 = vmatprep.subr.mxu0 0.0
        %2235 = vmatpush2.msra.mxu0 0.0
        %2236 = vmatprep.subr.mxu0 0.0
        %2237 = vmatpush2.msra.mxu0 0.0
        %2238 = vmatprep.subr.mxu0 0.0
        %2239 = vmatpush2.msra.mxu0 0.0
        %2240 = vmatprep.subr.mxu0 0.0
        %2241 = vmatpush2.msra.mxu0 0.0
        %2242 = vmatprep.subr.mxu0 0.0
        %2243 = vmatpush2.msra.mxu0 0.0
        %2244 = vmatprep.subr.mxu0 0.0
        %2245 = vmatpush2.msra.mxu0 0.0
        %2246 = vmatprep.subr.mxu0 0.0
        %2247 = vmatpush2.msra.mxu0 0.0
        %2248 = vmatprep.subr.mxu0 0.0
        %2249 = vmatpush2.msra.mxu0 0.0
        %2250 = vmatprep.subr.mxu0 0.0
        %2251 = vmatpush2.msra.mxu0 0.0
        %2252 = vmatprep.subr.mxu0 0.0
        %2253 = vmatpush2.msra.mxu0 0.0
        %2254 = vmatprep.subr.mxu0 0.0
        %2255 = vmatpush2.msra.mxu0 0.0
        %2256 = vmatprep.mubr.f32.mxu0 0.0
        %2257 = vmatmul.mubr.f32.gmra.mxu0 %v2190
        %v2258 = vpop.f32.mrf.mxu0
        %v2259 = vadd.f32 0.0, %v2258
        %v2260 = vpop.f32.mrf.mxu0
        %2261 = vdwg.mxu0
        %v2263 = vsel %vm369, %v2034, 0
        %2265 = vmatprep.subr.mxu0 0.0
        %2266 = vmatpush1.msra.mxu0 0.0
        %2267 = vmatprep.subr.mxu0 0.0
        %2268 = vmatpush1.msra.mxu0 0.0
        %2269 = vmatprep.subr.mxu0 0.0
        %2270 = vmatpush1.msra.mxu0 0.0
        %2271 = vmatprep.subr.mxu0 0.0
        %2272 = vmatpush1.msra.mxu0 0.0
        %2273 = vmatprep.subr.mxu0 0.0
        %2274 = vmatpush1.msra.mxu0 0.0
        %2275 = vmatprep.subr.mxu0 0.0
        %2276 = vmatpush1.msra.mxu0 0.0
        %2277 = vmatprep.subr.mxu0 0.0
        %2278 = vmatpush1.msra.mxu0 0.0
        %2279 = vmatprep.subr.mxu0 0.0
        %2280 = vmatpush1.msra.mxu0 0.0
        %2281 = vmatprep.subr.mxu0 0.0
        %2282 = vmatpush1.msra.mxu0 0.0
        %2283 = vmatprep.subr.mxu0 0.0
        %2284 = vmatpush1.msra.mxu0 0.0
        %2285 = vmatprep.subr.mxu0 0.0
        %2286 = vmatpush1.msra.mxu0 0.0
        %2287 = vmatprep.subr.mxu0 0.0
        %2288 = vmatpush1.msra.mxu0 0.0
        %2289 = vmatprep.subr.mxu0 0.0
        %2290 = vmatpush1.msra.mxu0 0.0
        %2291 = vmatprep.subr.mxu0 0.0
        %2292 = vmatpush1.msra.mxu0 0.0
        %2293 = vmatprep.subr.mxu0 0.0
        %2294 = vmatpush1.msra.mxu0 0.0
        %2295 = vmatprep.subr.mxu0 0.0
        %2296 = vmatpush1.msra.mxu0 %v1510
        %2297 = vmatprep.subr.mxu0 0.0
        %2298 = vmatpush2.msra.mxu0 0.0
        %2299 = vmatprep.subr.mxu0 0.0
        %2300 = vmatpush2.msra.mxu0 0.0
        %2301 = vmatprep.subr.mxu0 0.0
        %2302 = vmatpush2.msra.mxu0 0.0
        %2303 = vmatprep.subr.mxu0 0.0
        %2304 = vmatpush2.msra.mxu0 0.0
        %2305 = vmatprep.subr.mxu0 0.0
        %2306 = vmatpush2.msra.mxu0 0.0
        %2307 = vmatprep.subr.mxu0 0.0
        %2308 = vmatpush2.msra.mxu0 0.0
        %2309 = vmatprep.subr.mxu0 0.0
        %2310 = vmatpush2.msra.mxu0 0.0
        %2311 = vmatprep.subr.mxu0 0.0
        %2312 = vmatpush2.msra.mxu0 0.0
        %2313 = vmatprep.subr.mxu0 0.0
        %2314 = vmatpush2.msra.mxu0 0.0
        %2315 = vmatprep.subr.mxu0 0.0
        %2316 = vmatpush2.msra.mxu0 0.0
        %2317 = vmatprep.subr.mxu0 0.0
        %2318 = vmatpush2.msra.mxu0 0.0
        %2319 = vmatprep.subr.mxu0 0.0
        %2320 = vmatpush2.msra.mxu0 0.0
        %2321 = vmatprep.subr.mxu0 0.0
        %2322 = vmatpush2.msra.mxu0 0.0
        %2323 = vmatprep.subr.mxu0 0.0
        %2324 = vmatpush2.msra.mxu0 0.0
        %2325 = vmatprep.subr.mxu0 0.0
        %2326 = vmatpush2.msra.mxu0 0.0
        %2327 = vmatprep.subr.mxu0 0.0
        %2328 = vmatpush2.msra.mxu0 0.0
        %2329 = vmatprep.mubr.f32.mxu0 0.0
        %2330 = vmatmul.mubr.f32.gmra.mxu0 %v2263
        %v2331 = vpop.f32.mrf.mxu0
        %v2332 = vadd.f32 0.0, %v2331
        %v2333 = vpop.f32.mrf.mxu0
        %2334 = vdwg.mxu0
        %v2336 = vsel %vm369, %v2110, 0
        %2338 = vmatprep.subr.mxu0 0.0
        %2339 = vmatpush1.msra.mxu0 0.0
        %2340 = vmatprep.subr.mxu0 0.0
        %2341 = vmatpush1.msra.mxu0 0.0
        %2342 = vmatprep.subr.mxu0 0.0
        %2343 = vmatpush1.msra.mxu0 0.0
        %2344 = vmatprep.subr.mxu0 0.0
        %2345 = vmatpush1.msra.mxu0 0.0
        %2346 = vmatprep.subr.mxu0 0.0
        %2347 = vmatpush1.msra.mxu0 0.0
        %2348 = vmatprep.subr.mxu0 0.0
        %2349 = vmatpush1.msra.mxu0 0.0
        %2350 = vmatprep.subr.mxu0 0.0
        %2351 = vmatpush1.msra.mxu0 0.0
        %2352 = vmatprep.subr.mxu0 0.0
        %2353 = vmatpush1.msra.mxu0 0.0
        %2354 = vmatprep.subr.mxu0 0.0
        %2355 = vmatpush1.msra.mxu0 0.0
        %2356 = vmatprep.subr.mxu0 0.0
        %2357 = vmatpush1.msra.mxu0 0.0
        %2358 = vmatprep.subr.mxu0 0.0
        %2359 = vmatpush1.msra.mxu0 0.0
        %2360 = vmatprep.subr.mxu0 0.0
        %2361 = vmatpush1.msra.mxu0 0.0
        %2362 = vmatprep.subr.mxu0 0.0
        %2363 = vmatpush1.msra.mxu0 0.0
        %2364 = vmatprep.subr.mxu0 0.0
        %2365 = vmatpush1.msra.mxu0 0.0
        %2366 = vmatprep.subr.mxu0 0.0
        %2367 = vmatpush1.msra.mxu0 0.0
        %2368 = vmatprep.subr.mxu0 0.0
        %2369 = vmatpush1.msra.mxu0 %v1511
        %2370 = vmatprep.subr.mxu0 0.0
        %2371 = vmatpush2.msra.mxu0 0.0
        %2372 = vmatprep.subr.mxu0 0.0
        %2373 = vmatpush2.msra.mxu0 0.0
        %2374 = vmatprep.subr.mxu0 0.0
        %2375 = vmatpush2.msra.mxu0 0.0
        %2376 = vmatprep.subr.mxu0 0.0
        %2377 = vmatpush2.msra.mxu0 0.0
        %2378 = vmatprep.subr.mxu0 0.0
        %2379 = vmatpush2.msra.mxu0 0.0
        %2380 = vmatprep.subr.mxu0 0.0
        %2381 = vmatpush2.msra.mxu0 0.0
        %2382 = vmatprep.subr.mxu0 0.0
        %2383 = vmatpush2.msra.mxu0 0.0
        %2384 = vmatprep.subr.mxu0 0.0
        %2385 = vmatpush2.msra.mxu0 0.0
        %2386 = vmatprep.subr.mxu0 0.0
        %2387 = vmatpush2.msra.mxu0 0.0
        %2388 = vmatprep.subr.mxu0 0.0
        %2389 = vmatpush2.msra.mxu0 0.0
        %2390 = vmatprep.subr.mxu0 0.0
        %2391 = vmatpush2.msra.mxu0 0.0
        %2392 = vmatprep.subr.mxu0 0.0
        %2393 = vmatpush2.msra.mxu0 0.0
        %2394 = vmatprep.subr.mxu0 0.0
        %2395 = vmatpush2.msra.mxu0 0.0
        %2396 = vmatprep.subr.mxu0 0.0
        %2397 = vmatpush2.msra.mxu0 0.0
        %2398 = vmatprep.subr.mxu0 0.0
        %2399 = vmatpush2.msra.mxu0 0.0
        %2400 = vmatprep.subr.mxu0 0.0
        %2401 = vmatpush2.msra.mxu0 0.0
        %2402 = vmatprep.mubr.f32.mxu0 0.0
        %2403 = vmatmul.mubr.f32.gmra.mxu0 %v2336
        %v2404 = vpop.f32.mrf.mxu0
        %v2405 = vadd.f32 0.0, %v2404
        %v2406 = vpop.f32.mrf.mxu0
        %2407 = vdwg.mxu0
        %v2409 = vsel %vm369, %v2186, 0
        %2411 = vmatprep.subr.mxu0 0.0
        %2412 = vmatpush1.msra.mxu0 0.0
        %2413 = vmatprep.subr.mxu0 0.0
        %2414 = vmatpush1.msra.mxu0 0.0
        %2415 = vmatprep.subr.mxu0 0.0
        %2416 = vmatpush1.msra.mxu0 0.0
        %2417 = vmatprep.subr.mxu0 0.0
        %2418 = vmatpush1.msra.mxu0 0.0
        %2419 = vmatprep.subr.mxu0 0.0
        %2420 = vmatpush1.msra.mxu0 0.0
        %2421 = vmatprep.subr.mxu0 0.0
        %2422 = vmatpush1.msra.mxu0 0.0
        %2423 = vmatprep.subr.mxu0 0.0
        %2424 = vmatpush1.msra.mxu0 0.0
        %2425 = vmatprep.subr.mxu0 0.0
        %2426 = vmatpush1.msra.mxu0 0.0
        %2427 = vmatprep.subr.mxu0 0.0
        %2428 = vmatpush1.msra.mxu0 0.0
        %2429 = vmatprep.subr.mxu0 0.0
        %2430 = vmatpush1.msra.mxu0 0.0
        %2431 = vmatprep.subr.mxu0 0.0
        %2432 = vmatpush1.msra.mxu0 0.0
        %2433 = vmatprep.subr.mxu0 0.0
        %2434 = vmatpush1.msra.mxu0 0.0
        %2435 = vmatprep.subr.mxu0 0.0
        %2436 = vmatpush1.msra.mxu0 0.0
        %2437 = vmatprep.subr.mxu0 0.0
        %2438 = vmatpush1.msra.mxu0 0.0
        %2439 = vmatprep.subr.mxu0 0.0
        %2440 = vmatpush1.msra.mxu0 0.0
        %2441 = vmatprep.subr.mxu0 0.0
        %2442 = vmatpush1.msra.mxu0 %v1512
        %2443 = vmatprep.subr.mxu0 0.0
        %2444 = vmatpush2.msra.mxu0 0.0
        %2445 = vmatprep.subr.mxu0 0.0
        %2446 = vmatpush2.msra.mxu0 0.0
        %2447 = vmatprep.subr.mxu0 0.0
        %2448 = vmatpush2.msra.mxu0 0.0
        %2449 = vmatprep.subr.mxu0 0.0
        %2450 = vmatpush2.msra.mxu0 0.0
        %2451 = vmatprep.subr.mxu0 0.0
        %2452 = vmatpush2.msra.mxu0 0.0
        %2453 = vmatprep.subr.mxu0 0.0
        %2454 = vmatpush2.msra.mxu0 0.0
        %2455 = vmatprep.subr.mxu0 0.0
        %2456 = vmatpush2.msra.mxu0 0.0
        %2457 = vmatprep.subr.mxu0 0.0
        %2458 = vmatpush2.msra.mxu0 0.0
        %2459 = vmatprep.subr.mxu0 0.0
        %2460 = vmatpush2.msra.mxu0 0.0
        %2461 = vmatprep.subr.mxu0 0.0
        %2462 = vmatpush2.msra.mxu0 0.0
        %2463 = vmatprep.subr.mxu0 0.0
        %2464 = vmatpush2.msra.mxu0 0.0
        %2465 = vmatprep.subr.mxu0 0.0
        %2466 = vmatpush2.msra.mxu0 0.0
        %2467 = vmatprep.subr.mxu0 0.0
        %2468 = vmatpush2.msra.mxu0 0.0
        %2469 = vmatprep.subr.mxu0 0.0
        %2470 = vmatpush2.msra.mxu0 0.0
        %2471 = vmatprep.subr.mxu0 0.0
        %2472 = vmatpush2.msra.mxu0 0.0
        %2473 = vmatprep.subr.mxu0 0.0
        %2474 = vmatpush2.msra.mxu0 0.0
        %2475 = vmatprep.mubr.f32.mxu0 0.0
        %2476 = vmatmul.mubr.f32.gmra.mxu0 %v2409
        %v2477 = vpop.f32.mrf.mxu0
        %v2478 = vadd.f32 0.0, %v2477
        %v2479 = vpop.f32.mrf.mxu0
        %2480 = vdwg.mxu0
        %v2481 = vsel %vm248, %v2259, 0.0
        %v2482 = vsel %vm248, %v2332, 0.0
        %v2483 = vadd.f32 %v2481, %v2482
        %v2484 = vsel %vm248, %v2405, 0.0
        %v2485 = vadd.f32 %v2483, %v2484
        %v2486 = vsel %vm248, %v2478, 0.0
        %v2487 = vadd.f32 %v2485, %v2486
        %v2488 = vlaneseq
        %v2489 = vshrl.u32 %v2488, 7
        %v2490 = vsub.s32 0, %v2489
        %v2491 = vrot.slane %v1513, %v2490
        %v2492 = vadd.f32 %v2487, %v2491
        %v2493 = vadd.f32 %v1344, %v2492
        %v2494 = vld [vmem:[#allocation7 + $0x109] sm:$0x1]
        %v2495 = vld [vmem:[#allocation7 + $0x10a] sm:$0x1]
        %v2496 = vsel %vm248, %v2493, 0.0
        %2497 = vadd.xlane.f32.xlu0 %v2496
        %v2498 = vpop.xlane.xlu0 %2497
        %v2499 = vmul.f32 %v2498, %v1316
        %v2500 = vsub.f32 %v2493, %v2499
        %v2501 = vmul.f32 %v2500, %v2500
        %v2502 = vsel %vm248, %v2501, 0.0
        %2503 = vadd.xlane.f32.xlu0 %v2502
        %v2504 = vpop.xlane.xlu0 %2503
        %v2505 = vmul.f32 %v2504, %v1323
        %v2506 = vrsqrt.pop %v2505
        %v2507 = vmul.f32 %v2505, %v2506
        %vm2508 = vcmp.eq.f32.partialorder %v2505, inf
        %v2509 = vsel %vm2508, %v2505, %v2507
        %vm2510 = vcmp.eq.f32.partialorder %v2505, 0.0
        %v2511 = vand.u32 %v2505, 2147483648
        %v2512 = vsel %vm2510, %v2511, %v2509
        %v2513 = vadd.f32 %v2512, 1e-12
        %v2514 = vrcp.pop %v2513
        %v2515 = vmul.f32 %v2500, %v2514
        %v2516 = vlaneseq
        %v2517 = vshrl.u32 %v2516, 7
        %v2518 = vsub.s32 0, %v2517
        %v2519 = vrot.slane %v2494, %v2518
        %v2520 = vmul.f32 %v2519, %v2515
        %v2521 = vlaneseq
        %v2522 = vshrl.u32 %v2521, 7
        %v2523 = vsub.s32 0, %v2522
        %v2524 = vrot.slane %v2495, %v2523
        %v2525 = vadd.f32 %v2520, %v2524
        %v2526 = vld [vmem:[#allocation7 + $0xa0] sm:$0xff]
        %v2527 = vld [vmem:[#allocation7 + $0xa8] sm:$0xff]
        %v2528 = vld [vmem:[#allocation7 + $0xb0] sm:$0xff]
        %v2529 = vld [vmem:[#allocation7 + $0xb8] sm:$0xff]
        %v2530 = vld [vmem:[#allocation7 + $0x105] sm:$0x1]
        %v2531 = vlaneseq
        %v2532 = vshrl.u32 %v2531, 7
        %v2533 = vsub.s32 0, %v2532
        %v2534 = vrot.slane %v2530, %v2533
        %v2536 = vsel %vm248, %v2525, 0
        %2538 = vmatprep.subr.mxu0 0.0
        %2539 = vmatpush1.msra.mxu0 0.0
        %2540 = vmatprep.subr.mxu0 0.0
        %2541 = vmatpush1.msra.mxu0 0.0
        %2542 = vmatprep.subr.mxu0 0.0
        %2543 = vmatpush1.msra.mxu0 0.0
        %2544 = vmatprep.subr.mxu0 0.0
        %2545 = vmatpush1.msra.mxu0 0.0
        %2546 = vmatprep.subr.mxu0 0.0
        %2547 = vmatpush1.msra.mxu0 0.0
        %2548 = vmatprep.subr.mxu0 0.0
        %2549 = vmatpush1.msra.mxu0 0.0
        %2550 = vmatprep.subr.mxu0 0.0
        %2551 = vmatpush1.msra.mxu0 0.0
        %2552 = vmatprep.subr.mxu0 0.0
        %2553 = vmatpush1.msra.mxu0 0.0
        %2554 = vmatprep.subr.mxu0 0.0
        %2555 = vmatpush1.msra.mxu0 0.0
        %2556 = vmatprep.subr.mxu0 0.0
        %2557 = vmatpush1.msra.mxu0 0.0
        %2558 = vmatprep.subr.mxu0 0.0
        %2559 = vmatpush1.msra.mxu0 0.0
        %2560 = vmatprep.subr.mxu0 0.0
        %2561 = vmatpush1.msra.mxu0 0.0
        %2562 = vmatprep.subr.mxu0 0.0
        %2563 = vmatpush1.msra.mxu0 %v2529
        %2564 = vmatprep.subr.mxu0 0.0
        %2565 = vmatpush1.msra.mxu0 %v2528
        %2566 = vmatprep.subr.mxu0 0.0
        %2567 = vmatpush1.msra.mxu0 %v2527
        %2568 = vmatprep.subr.mxu0 0.0
        %2569 = vmatpush1.msra.mxu0 %v2526
        %2570 = vmatprep.subr.mxu0 0.0
        %2571 = vmatpush2.msra.mxu0 0.0
        %2572 = vmatprep.subr.mxu0 0.0
        %2573 = vmatpush2.msra.mxu0 0.0
        %2574 = vmatprep.subr.mxu0 0.0
        %2575 = vmatpush2.msra.mxu0 0.0
        %2576 = vmatprep.subr.mxu0 0.0
        %2577 = vmatpush2.msra.mxu0 0.0
        %2578 = vmatprep.subr.mxu0 0.0
        %2579 = vmatpush2.msra.mxu0 0.0
        %2580 = vmatprep.subr.mxu0 0.0
        %2581 = vmatpush2.msra.mxu0 0.0
        %2582 = vmatprep.subr.mxu0 0.0
        %2583 = vmatpush2.msra.mxu0 0.0
        %2584 = vmatprep.subr.mxu0 0.0
        %2585 = vmatpush2.msra.mxu0 0.0
        %2586 = vmatprep.subr.mxu0 0.0
        %2587 = vmatpush2.msra.mxu0 0.0
        %2588 = vmatprep.subr.mxu0 0.0
        %2589 = vmatpush2.msra.mxu0 0.0
        %2590 = vmatprep.subr.mxu0 0.0
        %2591 = vmatpush2.msra.mxu0 0.0
        %2592 = vmatprep.subr.mxu0 0.0
        %2593 = vmatpush2.msra.mxu0 0.0
        %2594 = vmatprep.subr.mxu0 0.0
        %2595 = vmatpush2.msra.mxu0 0.0
        %2596 = vmatprep.subr.mxu0 0.0
        %2597 = vmatpush2.msra.mxu0 0.0
        %2598 = vmatprep.subr.mxu0 0.0
        %2599 = vmatpush2.msra.mxu0 0.0
        %2600 = vmatprep.subr.mxu0 0.0
        %2601 = vmatpush2.msra.mxu0 0.0
        %2602 = vmatprep.mubr.f32.mxu0 0.0
        %2603 = vmatmul.mubr.f32.gmra.mxu0 %v2536
        %v2604 = vpop.f32.mrf.mxu0
        %v2605 = vadd.f32 %v2534, %v2604
        %v2606 = vpop.f32.mrf.mxu0
        %2607 = vdwg.mxu0
        %v2608 = vmax.f32 %v2605, 0.0
        %v2609 = vld [vmem:[#allocation7 + $0xc0] sm:$0xff]
        %v2610 = vld [vmem:[#allocation7 + $0xc8] sm:$0xff]
        %v2611 = vld [vmem:[#allocation7 + $0xd0] sm:$0xff]
        %v2612 = vld [vmem:[#allocation7 + $0xd8] sm:$0xff]
        %v2613 = vld [vmem:[#allocation7 + $0xe0] sm:$0xff]
        %v2614 = vld [vmem:[#allocation7 + $0xe8] sm:$0xff]
        %v2615 = vld [vmem:[#allocation7 + $0xf0] sm:$0xff]
        %v2616 = vld [vmem:[#allocation7 + $0xf8] sm:$0xff]
        %v2617 = vld [vmem:[#allocation7 + $0x106] sm:$0x1]
        %v2618 = vlaneseq
        %v2619 = vshrl.u32 %v2618, 7
        %v2620 = vsub.s32 0, %v2619
        %v2621 = vrot.slane %v2617, %v2620
        %vm2622 = vcmask 523264
        %v2624 = vsel %vm2622, %v2608, 0
        %2626 = vmatprep.subr.mxu0 0.0
        %2627 = vmatpush1.msra.mxu0 0.0
        %2628 = vmatprep.subr.mxu0 0.0
        %2629 = vmatpush1.msra.mxu0 0.0
        %2630 = vmatprep.subr.mxu0 0.0
        %2631 = vmatpush1.msra.mxu0 0.0
        %2632 = vmatprep.subr.mxu0 0.0
        %2633 = vmatpush1.msra.mxu0 0.0
        %2634 = vmatprep.subr.mxu0 0.0
        %2635 = vmatpush1.msra.mxu0 0.0
        %2636 = vmatprep.subr.mxu0 0.0
        %2637 = vmatpush1.msra.mxu0 0.0
        %2638 = vmatprep.subr.mxu0 0.0
        %2639 = vmatpush1.msra.mxu0 0.0
        %2640 = vmatprep.subr.mxu0 0.0
        %2641 = vmatpush1.msra.mxu0 0.0
        %2642 = vmatprep.subr.mxu0 0.0
        %2643 = vmatpush1.msra.mxu0 %v2616
        %2644 = vmatprep.subr.mxu0 0.0
        %2645 = vmatpush1.msra.mxu0 %v2615
        %2646 = vmatprep.subr.mxu0 0.0
        %2647 = vmatpush1.msra.mxu0 %v2614
        %2648 = vmatprep.subr.mxu0 0.0
        %2649 = vmatpush1.msra.mxu0 %v2613
        %2650 = vmatprep.subr.mxu0 0.0
        %2651 = vmatpush1.msra.mxu0 %v2612
        %2652 = vmatprep.subr.mxu0 0.0
        %2653 = vmatpush1.msra.mxu0 %v2611
        %2654 = vmatprep.subr.mxu0 0.0
        %2655 = vmatpush1.msra.mxu0 %v2610
        %2656 = vmatprep.subr.mxu0 0.0
        %2657 = vmatpush1.msra.mxu0 %v2609
        %2658 = vmatprep.subr.mxu0 0.0
        %2659 = vmatpush2.msra.mxu0 0.0
        %2660 = vmatprep.subr.mxu0 0.0
        %2661 = vmatpush2.msra.mxu0 0.0
        %2662 = vmatprep.subr.mxu0 0.0
        %2663 = vmatpush2.msra.mxu0 0.0
        %2664 = vmatprep.subr.mxu0 0.0
        %2665 = vmatpush2.msra.mxu0 0.0
        %2666 = vmatprep.subr.mxu0 0.0
        %2667 = vmatpush2.msra.mxu0 0.0
        %2668 = vmatprep.subr.mxu0 0.0
        %2669 = vmatpush2.msra.mxu0 0.0
        %2670 = vmatprep.subr.mxu0 0.0
        %2671 = vmatpush2.msra.mxu0 0.0
        %2672 = vmatprep.subr.mxu0 0.0
        %2673 = vmatpush2.msra.mxu0 0.0
        %2674 = vmatprep.subr.mxu0 0.0
        %2675 = vmatpush2.msra.mxu0 0.0
        %2676 = vmatprep.subr.mxu0 0.0
        %2677 = vmatpush2.msra.mxu0 0.0
        %2678 = vmatprep.subr.mxu0 0.0
        %2679 = vmatpush2.msra.mxu0 0.0
        %2680 = vmatprep.subr.mxu0 0.0
        %2681 = vmatpush2.msra.mxu0 0.0
        %2682 = vmatprep.subr.mxu0 0.0
        %2683 = vmatpush2.msra.mxu0 0.0
        %2684 = vmatprep.subr.mxu0 0.0
        %2685 = vmatpush2.msra.mxu0 0.0
        %2686 = vmatprep.subr.mxu0 0.0
        %2687 = vmatpush2.msra.mxu0 0.0
        %2688 = vmatprep.subr.mxu0 0.0
        %2689 = vmatpush2.msra.mxu0 0.0
        %2690 = vmatprep.mubr.f32.mxu0 0.0
        %2691 = vmatmul.mubr.f32.gmra.mxu0 %v2624
        %v2692 = vpop.f32.mrf.mxu0
        %v2693 = vadd.f32 %v2621, %v2692
        %v2694 = vpop.f32.mrf.mxu0
        %2695 = vdwg.mxu0
        %v2696 = vadd.f32 %v2525, %v2693
        %v2697 = vld [vmem:[#allocation7 + $0x10b] sm:$0x1]
        %v2698 = vld [vmem:[#allocation7 + $0x10c] sm:$0x1]
        %v2699 = vsel %vm248, %v2696, 0.0
        %2700 = vadd.xlane.f32.xlu0 %v2699
        %v2701 = vpop.xlane.xlu0 %2700
        %v2702 = vmul.f32 %v2701, %v1316
        %v2703 = vsub.f32 %v2696, %v2702
        %v2704 = vmul.f32 %v2703, %v2703
        %v2705 = vsel %vm248, %v2704, 0.0
        %2706 = vadd.xlane.f32.xlu0 %v2705
        %v2707 = vpop.xlane.xlu0 %2706
        %v2708 = vmul.f32 %v2707, %v1323
        %v2709 = vrsqrt.pop %v2708
        %v2710 = vmul.f32 %v2708, %v2709
        %vm2711 = vcmp.eq.f32.partialorder %v2708, inf
        %v2712 = vsel %vm2711, %v2708, %v2710
        %vm2713 = vcmp.eq.f32.partialorder %v2708, 0.0
        %v2714 = vand.u32 %v2708, 2147483648
        %v2715 = vsel %vm2713, %v2714, %v2712
        %v2716 = vadd.f32 %v2715, 1e-12
        %v2717 = vrcp.pop %v2716
        %v2718 = vmul.f32 %v2703, %v2717
        %v2719 = vlaneseq
        %v2720 = vshrl.u32 %v2719, 7
        %v2721 = vsub.s32 0, %v2720
        %v2722 = vrot.slane %v2697, %v2721
        %v2723 = vmul.f32 %v2722, %v2718
        %v2724 = vlaneseq
        %v2725 = vshrl.u32 %v2724, 7
        %v2726 = vsub.s32 0, %v2725
        %v2727 = vrot.slane %v2698, %v2726
        %v2728 = vadd.f32 %v2723, %v2727
        %2729 = vst.msk [vmem:[%s236] sm:$0xff] %vm248, %v2728
        %s2730 = sand.u32 %s104, 1
        %s2731 = scalar_lea.sflag [#allocation4], %s2730
        %s2732 = sand.u32 %s104, 1
        %s2733 = smul.addr %s2732, 8
        %s2734 = scalar_lea.vmem [#allocation8], %s2733
        // Predicated region
        $region45: #{tpu_custom_call.1} parent=31 // pred_check
          %p2735 = pneg %p114
        $region46: #{tpu_custom_call.1} parent=31 // pred_check_branch
          %2737 = sbr.rel (%p2735) target = $region48
        $region47: #{tpu_custom_call.1} parent=31 // pred_region
          %s2739 = ssub.s32 128, 128
          %2740 = vsyncadd %s2731, %s2739
          %s2741 = smul.addr %s23, 128
          %s2742 = scalar_lea.hbm %s3, %s2741
          %s2744 = sshll.u32 %s2734, 4
          %s2745 = int_to_ptr.vmem [resolvable:$true] %s2744
          %2747 = dma.vmem_to_hbm [thread:$0]  %s2745, 128, %s2742, %s2731
        $region48: #{tpu_custom_call.1} parent=31 // pred_fallthru
          _
      $region32: #{tpu_custom_call.1} parent=5 // pred_fallthru
        _
      %p2748 = scmp.le.s32.totalorder 2, %s18
      // Predicated region
      $region49: #{tpu_custom_call.1} parent=5 // pred_check
        %p2749 = pneg %p2748
      $region50: #{tpu_custom_call.1} parent=5 // pred_check_branch
        %2751 = sbr.rel (%p2749) target = $region52
      $region51: #{tpu_custom_call.1} parent=5 // pred_region
        %s2752 = ssub.s32 %s18, 2
        // Predicated region
        $region53: #{tpu_custom_call.1} parent=51 // pred_check
          %p2753 = pneg %p120
        $region54: #{tpu_custom_call.1} parent=51 // pred_check_branch
          %2755 = sbr.rel (%p2753) target = $region56
        $region55: #{tpu_custom_call.1} parent=51 // pred_region
          %s2756 = sand.u32 %s105, 1
          %s2757 = scalar_lea.sflag [#allocation4], %s2756
          %s2758 = sand.u32 %s105, 1
          %s2759 = smul.addr %s2758, 8
          %s2760 = scalar_lea.vmem [#allocation8], %s2759
          %2761 = dma.done %s2757, 128
        $region56: #{tpu_custom_call.1} parent=51 // pred_fallthru
          _
      $region52: #{tpu_custom_call.1} parent=5 // pred_fallthru
        _
    $region6: #{tpu_custom_call.1} parent=1 // loop_footer
      %s22 = sadd.s32 1, %s18
    $region7: #{tpu_custom_call.1} parent=1 // loop_footer_branch
      %17 = sbr.rel target = $region3
    $region8: #{tpu_custom_call.1} parent=1 // loop_exit
      _
    %2762 = vsyncpa [#allocation3], 1
    %s2763 = scalar_lea.sflag [#allocation3], 1
    %2764 = vsyncpa %s2763, 1
    %2765 = vsyncpa [#allocation6], 1
    %s2766 = scalar_lea.sflag [#allocation6], 1
    %2767 = vsyncpa %s2766, 1
    %2768 = vsyncpa [#allocation4], 1
    %s2769 = scalar_lea.sflag [#allocation4], 1
    %2770 = vsyncpa %s2769, 1

</llo_original>
